<compile_context>
chip_gen: v6e
topology: v6e:2x2x1
jax: 0.10.0
libtpu: 0.0.40
codegen_flags: <defaults>
</compile_context>

<pallas_src>
import functools

import jax
import jax.numpy as jnp
import numpy as np
from jax import lax
from jax.experimental import pallas as pl
from jax.experimental.pallas import tpu as pltpu

NUM_KERNEL = 64        # 8*8 template positions (= corr channels)
ADJ_CHANNEL = 96
BN_EPS = 1e-5

# Row offsets of the K-major weight blocks inside the packed (256, 64) operand.
_R_W1 = 0                       # SE fc1^T           (64 in, 64 out)
_R_W2 = NUM_KERNEL              # SE fc2^T           (64, 64)
_R_WDN = 2 * NUM_KERNEL         # conv_down^T folded (128, 64)

# Column offsets inside the packed (64, 13) per-channel f32 vector operand.
_COL_CLIN, _COL_CBIAS, _COL_BDN, _COL_B1, _COL_B2, _COL_W33 = 0, 1, 2, 3, 4, 5


def _gelu_erf_approx(x):
    """erf-based GELU (matches nn.GELU() default) for in-kernel use.

    erf via Abramowitz-Stegun 7.1.26 (|err| < 1.5e-7), written as
    0.5*x + 0.5*|x|*erf(|x|/sqrt(2)); the rational term uses the EUP
    approximate reciprocal so the divide stays off the VPU.
    """
    ax = jnp.abs(x)
    y = ax * 0.7071067811865476
    t = pl.reciprocal(1.0 + 0.3275911 * y, approx=True)
    poly = ((((1.061405429 * t - 1.453152027) * t + 1.421413741) * t
             - 0.284496736) * t + 0.254829592) * t
    return 0.5 * x + 0.5 * ax * (1.0 - poly * jnp.exp(-y * y))


def ecm_kernel(z_ref, x_ref, mask_ref, pool_ref, expand_ref, wsq_ref, wup_ref,
               wadj_ref, vec_ref, bup_ref, badj_ref, out_ref, corr_ref, *,
               width):
    """One grid step: a (bblk, ...) slab of the batch, slab-major in VMEM."""
    bblk, C, NK = z_ref.shape
    HW = x_ref.shape[2]
    W = width
    f32 = jnp.float32
    bf16 = jnp.bfloat16
    tnum = (((0,), (0,)), ((), ()))   # contract dim 0 of both operands (K-major)

    # Loop-invariant parameter tiles (constant operands stay VMEM-resident).
    w1T = wsq_ref[_R_W1:_R_W1 + NK, :]                    # (64, 64)   bf16
    w2T = wsq_ref[_R_W2:_R_W2 + NK, :]                    # (64, 64)
    wdnT = wsq_ref[_R_WDN:_R_WDN + 2 * NK, :]             # (128, 64)
    wupT = wup_ref[...]                                   # (64, 128)
    wadjT = wadj_ref[...]                                 # (64, 96)
    c_lin = vec_ref[:, _COL_CLIN:_COL_CLIN + 1]           # 1 + s11 + w33 centre
    c_bias = vec_ref[:, _COL_CBIAS:_COL_CBIAS + 1]        # t11 + b33
    bdn = vec_ref[:, _COL_BDN:_COL_BDN + 1]
    b1 = vec_ref[:, _COL_B1:_COL_B1 + 1]
    b2 = vec_ref[:, _COL_B2:_COL_B2 + 1]
    w33 = vec_ref[:, _COL_W33:_COL_W33 + 8]               # 8 off-centre taps
    bup = bup_ref[...]                                    # (128, 1)
    badj = badj_ref[...]                                  # (96, 1)
    masks = mask_ref[...]                                 # (8, bblk*HW) 0/1

    # ---- pixel-wise correlation: z^T @ x per batch element -> slab scratch ----
    for bi in range(bblk):
        zb = z_ref[bi].astype(bf16)                       # (C, 64)
        xb = x_ref[bi].astype(bf16)                       # (C, HW)
        corr_ref[:, bi * HW:(bi + 1) * HW] = lax.dot_general(
            zb, xb, tnum, preferred_element_type=f32)

    corr = corr_ref[...]                                  # (64, bblk*HW) f32

    # ---- SE channel attention, batched over the slab on the MXU ----
    pooled = jnp.dot(corr.astype(bf16), pool_ref[...],
                     preferred_element_type=f32)          # (64,128); col b = mean_b
    h = jnp.maximum(
        lax.dot_general(w1T, pooled.astype(bf16), tnum,
                        preferred_element_type=f32) + b1, 0.0)
    logits = lax.dot_general(w2T, h.astype(bf16), tnum,
                             preferred_element_type=f32) + b2
    gate = pl.reciprocal(1.0 + jnp.exp(-logits), approx=True)   # sigmoid via EUP
    # Broadcast per-batch gate columns back to slab width with a one-hot matmul.
    gate_slab = jnp.dot(gate.astype(bf16), expand_ref[...],
                        preferred_element_type=f32)       # (64, bblk*HW)
    corr = corr * gate_slab

    # ---- corr + (dw 1x1 + BN) + (dw 3x3 + BN); BNs + centre tap folded ----
    acc = corr * c_lin + c_bias
    ti = 0
    for k in range(9):
        if k == 4:          # centre tap folded into c_lin on the host
            continue
        a_off, b_off = k // 3 - 1, k % 3 - 1
        shift = a_off * W + b_off
        # Lane roll over the whole slab; any read that crosses a batch block or
        # wraps around is exactly a zero-padded conv tap and is zeroed by the
        # boundary masks.  (Rolls use the XLU; kept on all chip generations.)
        tap = jnp.roll(corr, -shift, axis=1)
        acc = acc + w33[:, ti:ti + 1] * (masks[ti:ti + 1, :] * tap)
        ti += 1
    corr = acc

    # ---- inverted bottleneck: 1x1 up -> GELU -> 1x1 down, full width ----
    u = lax.dot_general(wupT, corr.astype(bf16), tnum,
                        preferred_element_type=f32) + bup      # (128, bblk*HW)
    u = _gelu_erf_approx(u)
    dn = lax.dot_general(wdnT, u.astype(bf16), tnum,
                         preferred_element_type=f32)           # (64, bblk*HW)
    corr = corr + dn + bdn

    # ---- adjust 1x1 conv, then fuse torch.cat((adj, x), dim=1) ----
    adj = lax.dot_general(wadjT, corr.astype(bf16), tnum,
                          preferred_element_type=f32) + badj   # (96, bblk*HW)
    for bi in range(bblk):
        out_ref[bi, 0:ADJ_CHANNEL, :] = adj[:, bi * HW:(bi + 1) * HW]
    out_ref[:, ADJ_CHANNEL:ADJ_CHANNEL + C, :] = x_ref[...]


# ----------------------------------------------------------------------------
# Host-side glue: parameter creation, BN folding, operand packing, wrapper.
# ----------------------------------------------------------------------------

def build_tap_masks(H, W):
    """(9, H*W) 0/1 masks: tap k=(a+1)*3+(b+1) is valid at output (i, j) iff
    (i+a, j+b) lies inside the H x W grid (zero-padding of the 3x3 dw conv)."""
    idx = np.arange(H * W)
    row, col = idx // W, idx % W
    m = np.zeros((9, H * W), dtype=np.float32)
    k = 0
    for a in (-1, 0, 1):
        for b in (-1, 0, 1):
            valid = (row + a >= 0) & (row + a < H) & (col + b >= 0) & (col + b < W)
            m[k] = valid.astype(np.float32)
            k += 1
    return m


def make_params(key):
    def nrm(k, shape, scale=0.1):
        return scale * jax.random.normal(k, shape, dtype=jnp.float32)

    ks = iter(jax.random.split(key, 40))
    p = {}
    p['se_w1'] = nrm(next(ks), (NUM_KERNEL, NUM_KERNEL))
    p['se_b1'] = nrm(next(ks), (NUM_KERNEL,))
    p['se_w2'] = nrm(next(ks), (NUM_KERNEL, NUM_KERNEL))
    p['se_b2'] = nrm(next(ks), (NUM_KERNEL,))
    p['c11_w'] = nrm(next(ks), (NUM_KERNEL,))          # depthwise 1x1 (groups=64)
    p['c11_b'] = nrm(next(ks), (NUM_KERNEL,))
    p['c33_w'] = nrm(next(ks), (NUM_KERNEL, 3, 3))     # depthwise 3x3 (groups=64)
    p['c33_b'] = nrm(next(ks), (NUM_KERNEL,))
    p['cup_w'] = nrm(next(ks), (2 * NUM_KERNEL, NUM_KERNEL))
    p['cup_b'] = nrm(next(ks), (2 * NUM_KERNEL,))
    p['cdn_w'] = nrm(next(ks), (NUM_KERNEL, 2 * NUM_KERNEL))
    p['cdn_b'] = nrm(next(ks), (NUM_KERNEL,))
    p['adj_w'] = nrm(next(ks), (ADJ_CHANNEL, NUM_KERNEL))
    p['adj_b'] = nrm(next(ks), (ADJ_CHANNEL,))
    for name, n in (('bn11', NUM_KERNEL), ('bn33', NUM_KERNEL),
                    ('bnup', 2 * NUM_KERNEL), ('bndn', NUM_KERNEL)):
        p[name + '_g'] = 1.0 + nrm(next(ks), (n,))
        p[name + '_b'] = nrm(next(ks), (n,))
        p[name + '_m'] = nrm(next(ks), (n,))
        p[name + '_v'] = 0.5 + jax.random.uniform(next(ks), (n,), dtype=jnp.float32)
    return p


def fold_bn(w, b, g, beta, m, v):
    # BN(conv(x)) in eval mode == (s*W) x + (s*b + beta - s*m),  s = g / sqrt(v+eps)
    s = g / jnp.sqrt(v + BN_EPS)
    w_eff = w * s.reshape((-1,) + (1,) * (w.ndim - 1))
    b_eff = s * b + beta - s * m
    return w_eff, b_eff


def fold_params(p):
    f = {}
    f['w1'], f['b1'] = p['se_w1'], p['se_b1']
    f['w2'], f['b2'] = p['se_w2'], p['se_b2']
    f['s11'], f['t11'] = fold_bn(p['c11_w'], p['c11_b'],
                                 p['bn11_g'], p['bn11_b'], p['bn11_m'], p['bn11_v'])
    f['w33'], f['b33'] = fold_bn(p['c33_w'].reshape(NUM_KERNEL, 9), p['c33_b'],
                                 p['bn33_g'], p['bn33_b'], p['bn33_m'], p['bn33_v'])
    f['wup'], f['bup'] = fold_bn(p['cup_w'], p['cup_b'],
                                 p['bnup_g'], p['bnup_b'], p['bnup_m'], p['bnup_v'])
    f['wdn'], f['bdn'] = fold_bn(p['cdn_w'], p['cdn_b'],
                                 p['bndn_g'], p['bndn_b'], p['bndn_m'], p['bndn_v'])
    f['wadj'], f['badj'] = p['adj_w'], p['adj_b']
    return f


def pack_operands(f, H, W, bblk):
    """Pack folded parameters + constant matrices into kernel operands."""
    HW = H * W
    col = lambda v: jnp.asarray(v, jnp.float32).reshape(-1, 1)

    # K-major (input-channel-major) weight stacking: every 1x1 weight is used
    # with a dim-0 contraction (t(W) @ act), MXU-native with no relayout.
    wsq = jnp.concatenate(
        [f['w1'].T, f['w2'].T, f['wdn'].T], axis=0).astype(jnp.bfloat16)  # (256, 64)
    wup = jnp.asarray(f['wup'].T, jnp.bfloat16)                           # (64, 128)
    wadj = jnp.asarray(f['wadj'].T, jnp.bfloat16)                         # (64, 96)
    assert wsq.shape == (4 * NUM_KERNEL, NUM_KERNEL)

    w33 = jnp.asarray(f['w33'], jnp.float32)            # (64, 9), BN folded
    off_centre = [k for k in range(9) if k != 4]
    c_lin = 1.0 + f['s11'] + w33[:, 4]                  # centre tap + dw-1x1 folded
    c_bias = f['t11'] + f['b33']
    vec = jnp.concatenate(
        [col(c_lin), col(c_bias), col(f['bdn']), col(f['b1']), col(f['b2']),
         w33[:, off_centre]], axis=1).astype(jnp.float32)                 # (64, 13)

    bup = col(f['bup'])                                 # (128, 1)
    badj = col(f['badj'])                               # (96, 1)

    masks = np.tile(build_tap_masks(H, W)[off_centre], (1, bblk))         # (8, bblk*HW)
    masks = jnp.asarray(masks, jnp.float32)

    # Constant per-batch pooling / gate-expansion matrices (block one-hot).
    sel = np.zeros((bblk * HW, 128), np.float32)
    for b in range(bblk):
        sel[b * HW:(b + 1) * HW, b] = 1.0
    pool = jnp.asarray(sel / HW, jnp.bfloat16)          # (bblk*HW, 128): col b = mean_b
    expand = jnp.asarray(sel.T, jnp.bfloat16)           # (128, bblk*HW): one-hot expand
    return masks, pool, expand, wsq, wup, wadj, vec, bup, badj


def _choose_bblk(batch):
    """Batch elements per grid step (slab width = bblk * HW lanes).

    Bigger slabs amortize the ~0.35us per-grid-step overhead and keep the
    weight-shared matmuls lane-wide; per-slab VMEM stays well under the scoped
    limit up to bblk=16.  Only for larger batches do we keep >= 2 grid steps
    so both v7x TensorCores get work (one step is fine on single-TC v5e/v6e).
    """
    if batch <= 16:
        return batch
    return min(16, -(-batch // 2))


@functools.partial(jax.jit, static_argnames=("bblk",))
def ecm_forward(z, x, masks, pool, expand, wsq, wup, wadj, vec, bup, badj, *,
                bblk):
    B, C, Hz, Wz = z.shape
    _, _, H, W = x.shape
    NK = Hz * Wz
    HW = H * W

    # Glue: NCHW -> channel-major 2D slabs (pure reshapes, no HBM transpose).
    z_mat = z.reshape(B, C, NK)
    x_mat = x.reshape(B, C, HW)

    Bp = pl.cdiv(B, bblk) * bblk
    if Bp != B:
        pad = ((0, Bp - B), (0, 0), (0, 0))
        z_mat = jnp.pad(z_mat, pad)
        x_mat = jnp.pad(x_mat, pad)

    kernel = functools.partial(ecm_kernel, width=W)
    out = pl.pallas_call(
        kernel,
        out_shape=jax.ShapeDtypeStruct((Bp, ADJ_CHANNEL + C, HW), jnp.float32),
        grid=(Bp // bblk,),
        in_specs=[
            pl.BlockSpec((bblk, C, NK), lambda i: (i, 0, 0)),
            pl.BlockSpec((bblk, C, HW), lambda i: (i, 0, 0)),
            pl.BlockSpec(masks.shape, lambda i: (0, 0)),
            pl.BlockSpec(pool.shape, lambda i: (0, 0)),
            pl.BlockSpec(expand.shape, lambda i: (0, 0)),
            pl.BlockSpec(wsq.shape, lambda i: (0, 0)),
            pl.BlockSpec(wup.shape, lambda i: (0, 0)),
            pl.BlockSpec(wadj.shape, lambda i: (0, 0)),
            pl.BlockSpec(vec.shape, lambda i: (0, 0)),
            pl.BlockSpec(bup.shape, lambda i: (0, 0)),
            pl.BlockSpec(badj.shape, lambda i: (0, 0)),
        ],
        out_specs=pl.BlockSpec((bblk, ADJ_CHANNEL + C, HW), lambda i: (i, 0, 0)),
        scratch_shapes=[pltpu.VMEM((NUM_KERNEL, bblk * HW), jnp.float32)],
        compiler_params=pltpu.CompilerParams(dimension_semantics=("parallel",)),
    )(z_mat, x_mat, masks, pool, expand, wsq, wup, wadj, vec, bup, badj)

    # torch.cat((adjust(corr), x), dim=1) is already fused into the kernel output.
    return out[:B].reshape(B, ADJ_CHANNEL + C, H, W)


def ecm_reference(z, x, f):
    """Pure-JAX f32 reference with the same folded (eval-mode) parameters."""
    B, C, Hz, Wz = z.shape
    _, _, H, W = x.shape
    NK, HW = Hz * Wz, H * W
    z_mat = z.reshape(B, C, NK).transpose(0, 2, 1)
    x_mat = x.reshape(B, C, HW)
    corr = jnp.matmul(z_mat, x_mat)                                  # (B,64,HW)
    pooled = corr.mean(axis=2, keepdims=True)                        # (B,64,1)
    h = jnp.maximum(jnp.matmul(f['w1'], pooled) + f['b1'][:, None], 0.0)
    gate = jax.nn.sigmoid(jnp.matmul(f['w2'], h) + f['b2'][:, None])
    corr = corr * gate
    br11 = corr * f['s11'][:, None] + f['t11'][:, None]
    c4 = corr.reshape(B, NK, H, W)
    padded = jnp.pad(c4, ((0, 0), (0, 0), (1, 1), (1, 1)))
    acc = jnp.zeros_like(c4)
    w33 = f['w33'].reshape(NK, 3, 3)
    for a in range(3):
        for b in range(3):
            acc = acc + w33[:, a, b][None, :, None, None] * padded[:, :, a:a + H, b:b + W]
    br33 = acc.reshape(B, NK, HW) + f['b33'][:, None]
    corr = corr + br11 + br33
    up = jax.nn.gelu(jnp.matmul(f['wup'], corr) + f['bup'][:, None],
                     approximate=False)
    corr = corr + jnp.matmul(f['wdn'], up) + f['bdn'][:, None]
    adj = jnp.matmul(f['wadj'], corr) + f['badj'][:, None]
    return jnp.concatenate([adj.reshape(B, ADJ_CHANNEL, H, W), x], axis=1)


if __name__ == "__main__":
    key = jax.random.PRNGKey(0)
    kz, kx, kp = jax.random.split(key, 3)
    B, C = 2, 8
    z = jax.random.normal(kz, (B, C, 8, 8), dtype=jnp.float32)     # template
    x = jax.random.normal(kx, (B, C, 16, 16), dtype=jnp.float32)   # search

    params = make_params(kp)
    folded = fold_params(params)
    bblk = _choose_bblk(B)
    masks, pool, expand, wsq, wup, wadj, vec, bup, badj = pack_operands(
        folded, x.shape[2], x.shape[3], bblk)

    out = ecm_forward(z, x, masks, pool, expand, wsq, wup, wadj, vec, bup, badj,
                      bblk=bblk)
    out = jax.block_until_ready(out)

    ref = ecm_reference(z, x, folded)
    assert out.shape == (B, ADJ_CHANNEL + C, 16, 16), out.shape
    # Kernel matmuls use bf16 MXU inputs (f32 accumulation) per the perf
    # guidance, so validate against the f32 reference at bf16-level tolerance.
    if not np.allclose(np.asarray(out), np.asarray(ref), rtol=5e-2, atol=5e-2):
        err = float(np.max(np.abs(np.asarray(out) - np.asarray(ref))))
        raise AssertionError(
            f"Pallas kernel output mismatches JAX reference (max abs err {err})")
    print("KERNEL_OK")
</pallas_src>

<mosaic_0001>
module attributes {stable_mosaic.version = 11 : i64} {
  func.func @ecm_kernel(%arg0: i32, %arg1: memref<2x8x64xf32, #tpu.memory_space<vmem>>, %arg2: memref<2x8x256xf32, #tpu.memory_space<vmem>>, %arg3: memref<8x512xf32, #tpu.memory_space<vmem>>, %arg4: memref<512x128xbf16, #tpu.memory_space<vmem>>, %arg5: memref<128x512xbf16, #tpu.memory_space<vmem>>, %arg6: memref<256x64xbf16, #tpu.memory_space<vmem>>, %arg7: memref<64x128xbf16, #tpu.memory_space<vmem>>, %arg8: memref<64x96xbf16, #tpu.memory_space<vmem>>, %arg9: memref<64x13xf32, #tpu.memory_space<vmem>>, %arg10: memref<128x1xf32, #tpu.memory_space<vmem>>, %arg11: memref<96x1xf32, #tpu.memory_space<vmem>>, %arg12: memref<2x104x256xf32, #tpu.memory_space<vmem>>, %arg13: memref<64x512xf32, #tpu.memory_space<vmem>>) attributes {dimension_semantics = [#tpu.dimension_semantics<parallel>], iteration_bounds = array<i64: 1>, scalar_prefetch = 0 : i64, scratch_operands = 1 : i64, tpu.core_type = #tpu.core_type<tc>, window_params = [{transform_indices = @transform_0, window_bounds = array<i64: 2, 8, 64>}, {transform_indices = @transform_1, window_bounds = array<i64: 2, 8, 256>}, {pipeline_mode = #tpu.pipeline_mode<synchronous>, transform_indices = @transform_2, window_bounds = array<i64: 8, 512>}, {pipeline_mode = #tpu.pipeline_mode<synchronous>, transform_indices = @transform_3, window_bounds = array<i64: 512, 128>}, {pipeline_mode = #tpu.pipeline_mode<synchronous>, transform_indices = @transform_4, window_bounds = array<i64: 128, 512>}, {pipeline_mode = #tpu.pipeline_mode<synchronous>, transform_indices = @transform_5, window_bounds = array<i64: 256, 64>}, {pipeline_mode = #tpu.pipeline_mode<synchronous>, transform_indices = @transform_6, window_bounds = array<i64: 64, 128>}, {pipeline_mode = #tpu.pipeline_mode<synchronous>, transform_indices = @transform_7, window_bounds = array<i64: 64, 96>}, {pipeline_mode = #tpu.pipeline_mode<synchronous>, transform_indices = @transform_8, window_bounds = array<i64: 64, 13>}, {pipeline_mode = #tpu.pipeline_mode<synchronous>, transform_indices = @transform_9, window_bounds = array<i64: 128, 1>}, {pipeline_mode = #tpu.pipeline_mode<synchronous>, transform_indices = @transform_10, window_bounds = array<i64: 96, 1>}, {transform_indices = @transform_11, window_bounds = array<i64: 2, 104, 256>}]} {
    %c0 = arith.constant 0 : index
    %c0_0 = arith.constant 0 : index
    %0 = vector.load %arg6[%c0, %c0_0] : memref<256x64xbf16, #tpu.memory_space<vmem>>, vector<64x64xbf16>
    %c64 = arith.constant 64 : index
    %c0_1 = arith.constant 0 : index
    %1 = vector.load %arg6[%c64, %c0_1] : memref<256x64xbf16, #tpu.memory_space<vmem>>, vector<64x64xbf16>
    %c128 = arith.constant 128 : index
    %c0_2 = arith.constant 0 : index
    %2 = vector.load %arg6[%c128, %c0_2] : memref<256x64xbf16, #tpu.memory_space<vmem>>, vector<128x64xbf16>
    %c0_3 = arith.constant 0 : index
    %c0_4 = arith.constant 0 : index
    %3 = vector.load %arg7[%c0_3, %c0_4] : memref<64x128xbf16, #tpu.memory_space<vmem>>, vector<64x128xbf16>
    %c0_5 = arith.constant 0 : index
    %c0_6 = arith.constant 0 : index
    %4 = vector.load %arg8[%c0_5, %c0_6] : memref<64x96xbf16, #tpu.memory_space<vmem>>, vector<64x96xbf16>
    %c0_7 = arith.constant 0 : index
    %c0_8 = arith.constant 0 : index
    %5 = vector.load %arg9[%c0_7, %c0_8] : memref<64x13xf32, #tpu.memory_space<vmem>>, vector<64x1xf32>
    %c0_9 = arith.constant 0 : index
    %c1 = arith.constant 1 : index
    %6 = vector.load %arg9[%c0_9, %c1] : memref<64x13xf32, #tpu.memory_space<vmem>>, vector<64x1xf32>
    %c0_10 = arith.constant 0 : index
    %c2 = arith.constant 2 : index
    %7 = vector.load %arg9[%c0_10, %c2] : memref<64x13xf32, #tpu.memory_space<vmem>>, vector<64x1xf32>
    %c0_11 = arith.constant 0 : index
    %c3 = arith.constant 3 : index
    %8 = vector.load %arg9[%c0_11, %c3] : memref<64x13xf32, #tpu.memory_space<vmem>>, vector<64x1xf32>
    %c0_12 = arith.constant 0 : index
    %c4 = arith.constant 4 : index
    %9 = vector.load %arg9[%c0_12, %c4] : memref<64x13xf32, #tpu.memory_space<vmem>>, vector<64x1xf32>
    %c0_13 = arith.constant 0 : index
    %c5 = arith.constant 5 : index
    %10 = vector.load %arg9[%c0_13, %c5] : memref<64x13xf32, #tpu.memory_space<vmem>>, vector<64x8xf32>
    %c0_14 = arith.constant 0 : index
    %c0_15 = arith.constant 0 : index
    %11 = vector.load %arg10[%c0_14, %c0_15] : memref<128x1xf32, #tpu.memory_space<vmem>>, vector<128x1xf32>
    %c0_16 = arith.constant 0 : index
    %c0_17 = arith.constant 0 : index
    %12 = vector.load %arg11[%c0_16, %c0_17] : memref<96x1xf32, #tpu.memory_space<vmem>>, vector<96x1xf32>
    %c0_18 = arith.constant 0 : index
    %c0_19 = arith.constant 0 : index
    %13 = vector.load %arg3[%c0_18, %c0_19] : memref<8x512xf32, #tpu.memory_space<vmem>>, vector<8x512xf32>
    %c0_20 = arith.constant 0 : index
    %c0_21 = arith.constant 0 : index
    %c0_22 = arith.constant 0 : index
    %14 = vector.load %arg1[%c0_20, %c0_21, %c0_22] : memref<2x8x64xf32, #tpu.memory_space<vmem>>, vector<1x8x64xf32>
    %15 = vector.shape_cast %14 : vector<1x8x64xf32> to vector<8x64xf32>
    %16 = arith.truncf %15 : vector<8x64xf32> to vector<8x64xbf16>
    %c0_23 = arith.constant 0 : index
    %c0_24 = arith.constant 0 : index
    %c0_25 = arith.constant 0 : index
    %17 = vector.load %arg2[%c0_23, %c0_24, %c0_25] : memref<2x8x256xf32, #tpu.memory_space<vmem>>, vector<1x8x256xf32>
    %18 = vector.shape_cast %17 : vector<1x8x256xf32> to vector<8x256xf32>
    %19 = arith.truncf %18 : vector<8x256xf32> to vector<8x256xbf16>
    %cst = arith.constant dense<0.000000e+00> : vector<64x256xf32>
    %20 = tpu.matmul %16, %19, %cst {dimension_numbers = #tpu.dot_dimension_numbers<[0], [0], [1], [1], [0, 1, 1, 1], [], []>} : vector<8x64xbf16>, vector<8x256xbf16>, vector<64x256xf32> -> vector<64x256xf32>
    %c0_26 = arith.constant 0 : index
    %c0_27 = arith.constant 0 : index
    %21 = vector.load %arg13[%c0_26, %c0_27] : memref<64x512xf32, #tpu.memory_space<vmem>>, vector<64x256xf32>
    tpu.vector_store %arg13[%c0_26, %c0_27], %20 {strides = array<i32>} : memref<64x512xf32, #tpu.memory_space<vmem>>, vector<64x256xf32>,
    %c1_28 = arith.constant 1 : index
    %c0_29 = arith.constant 0 : index
    %c0_30 = arith.constant 0 : index
    %22 = vector.load %arg1[%c1_28, %c0_29, %c0_30] : memref<2x8x64xf32, #tpu.memory_space<vmem>>, vector<1x8x64xf32>
    %23 = vector.shape_cast %22 : vector<1x8x64xf32> to vector<8x64xf32>
    %24 = arith.truncf %23 : vector<8x64xf32> to vector<8x64xbf16>
    %c1_31 = arith.constant 1 : index
    %c0_32 = arith.constant 0 : index
    %c0_33 = arith.constant 0 : index
    %25 = vector.load %arg2[%c1_31, %c0_32, %c0_33] : memref<2x8x256xf32, #tpu.memory_space<vmem>>, vector<1x8x256xf32>
    %26 = vector.shape_cast %25 : vector<1x8x256xf32> to vector<8x256xf32>
    %27 = arith.truncf %26 : vector<8x256xf32> to vector<8x256xbf16>
    %cst_34 = arith.constant dense<0.000000e+00> : vector<64x256xf32>
    %28 = tpu.matmul %24, %27, %cst_34 {dimension_numbers = #tpu.dot_dimension_numbers<[0], [0], [1], [1], [0, 1, 1, 1], [], []>} : vector<8x64xbf16>, vector<8x256xbf16>, vector<64x256xf32> -> vector<64x256xf32>
    %c0_35 = arith.constant 0 : index
    %c256 = arith.constant 256 : index
    %29 = vector.load %arg13[%c0_35, %c256] : memref<64x512xf32, #tpu.memory_space<vmem>>, vector<64x256xf32>
    tpu.vector_store %arg13[%c0_35, %c256], %28 {strides = array<i32>} : memref<64x512xf32, #tpu.memory_space<vmem>>, vector<64x256xf32>,
    %c0_36 = arith.constant 0 : index
    %c0_37 = arith.constant 0 : index
    %30 = vector.load %arg13[%c0_36, %c0_37] : memref<64x512xf32, #tpu.memory_space<vmem>>, vector<64x512xf32>
    %31 = arith.truncf %30 : vector<64x512xf32> to vector<64x512xbf16>
    %c0_38 = arith.constant 0 : index
    %c0_39 = arith.constant 0 : index
    %32 = vector.load %arg4[%c0_38, %c0_39] : memref<512x128xbf16, #tpu.memory_space<vmem>>, vector<512x128xbf16>
    %cst_40 = arith.constant dense<0.000000e+00> : vector<64x128xf32>
    %33 = tpu.matmul %31, %32, %cst_40 {dimension_numbers = #tpu.dot_dimension_numbers<[1], [0], [0], [1], [0, 0, 1, 1], [], []>} : vector<64x512xbf16>, vector<512x128xbf16>, vector<64x128xf32> -> vector<64x128xf32>
    %34 = arith.truncf %33 : vector<64x128xf32> to vector<64x128xbf16>
    %cst_41 = arith.constant dense<0.000000e+00> : vector<64x128xf32>
    %35 = tpu.matmul %0, %34, %cst_41 {dimension_numbers = #tpu.dot_dimension_numbers<[0], [0], [1], [1], [0, 1, 1, 1], [], []>} : vector<64x64xbf16>, vector<64x128xbf16>, vector<64x128xf32> -> vector<64x128xf32>
    %36 = vector.broadcast %8 : vector<64x1xf32> to vector<64x128xf32>
    %37 = arith.addf %35, %36 : vector<64x128xf32>
    %cst_42 = arith.constant 0.000000e+00 : f32
    %38 = vector.broadcast %cst_42 : f32 to vector<64x128xf32>
    %39 = arith.maximumf %37, %38 : vector<64x128xf32>
    %40 = arith.truncf %39 : vector<64x128xf32> to vector<64x128xbf16>
    %cst_43 = arith.constant dense<0.000000e+00> : vector<64x128xf32>
    %41 = tpu.matmul %1, %40, %cst_43 {dimension_numbers = #tpu.dot_dimension_numbers<[0], [0], [1], [1], [0, 1, 1, 1], [], []>} : vector<64x64xbf16>, vector<64x128xbf16>, vector<64x128xf32> -> vector<64x128xf32>
    %42 = vector.broadcast %9 : vector<64x1xf32> to vector<64x128xf32>
    %43 = arith.addf %41, %42 : vector<64x128xf32>
    %cst_44 = arith.constant 0.000000e+00 : f32
    %44 = vector.broadcast %cst_44 : f32 to vector<64x128xf32>
    %45 = arith.subf %44, %43 : vector<64x128xf32>
    %46 = math.exp %45 : vector<64x128xf32>
    %cst_45 = arith.constant 1.000000e+00 : f32
    %47 = vector.broadcast %cst_45 : f32 to vector<64x128xf32>
    %48 = arith.addf %47, %46 : vector<64x128xf32>
    %49 = tpu.reciprocal %48 {approx = true} : vector<64x128xf32> -> vector<64x128xf32>
    %50 = arith.truncf %49 : vector<64x128xf32> to vector<64x128xbf16>
    %c0_46 = arith.constant 0 : index
    %c0_47 = arith.constant 0 : index
    %51 = vector.load %arg5[%c0_46, %c0_47] : memref<128x512xbf16, #tpu.memory_space<vmem>>, vector<128x512xbf16>
    %cst_48 = arith.constant dense<0.000000e+00> : vector<64x512xf32>
    %52 = tpu.matmul %50, %51, %cst_48 {dimension_numbers = #tpu.dot_dimension_numbers<[1], [0], [0], [1], [0, 0, 1, 1], [], []>} : vector<64x128xbf16>, vector<128x512xbf16>, vector<64x512xf32> -> vector<64x512xf32>
    %53 = arith.mulf %30, %52 : vector<64x512xf32>
    %54 = vector.broadcast %5 : vector<64x1xf32> to vector<64x512xf32>
    %55 = arith.mulf %53, %54 : vector<64x512xf32>
    %56 = vector.broadcast %6 : vector<64x1xf32> to vector<64x512xf32>
    %57 = arith.addf %55, %56 : vector<64x512xf32>
    %58 = vector.extract_strided_slice %53 {offsets = [0, 495], sizes = [64, 17], strides = [1, 1]} : vector<64x512xf32> to vector<64x17xf32>
    %59 = vector.extract_strided_slice %53 {offsets = [0, 0], sizes = [64, 495], strides = [1, 1]} : vector<64x512xf32> to vector<64x495xf32>
    %60 = tpu.concatenate %58, %59 in 1 : vector<64x17xf32>, vector<64x495xf32> -> vector<64x512xf32>
    %61 = vector.extract_strided_slice %10 {offsets = [0, 0], sizes = [64, 1], strides = [1, 1]} : vector<64x8xf32> to vector<64x1xf32>
    %62 = vector.extract_strided_slice %13 {offsets = [0, 0], sizes = [1, 512], strides = [1, 1]} : vector<8x512xf32> to vector<1x512xf32>
    %63 = vector.broadcast %62 : vector<1x512xf32> to vector<64x512xf32>
    %64 = arith.mulf %63, %60 : vector<64x512xf32>
    %65 = vector.broadcast %61 : vector<64x1xf32> to vector<64x512xf32>
    %66 = arith.mulf %65, %64 : vector<64x512xf32>
    %67 = arith.addf %57, %66 : vector<64x512xf32>
    %68 = vector.extract_strided_slice %53 {offsets = [0, 496], sizes = [64, 16], strides = [1, 1]} : vector<64x512xf32> to vector<64x16xf32>
    %69 = vector.extract_strided_slice %53 {offsets = [0, 0], sizes = [64, 496], strides = [1, 1]} : vector<64x512xf32> to vector<64x496xf32>
    %70 = tpu.concatenate %68, %69 in 1 : vector<64x16xf32>, vector<64x496xf32> -> vector<64x512xf32>
    %71 = vector.extract_strided_slice %10 {offsets = [0, 1], sizes = [64, 1], strides = [1, 1]} : vector<64x8xf32> to vector<64x1xf32>
    %72 = vector.extract_strided_slice %13 {offsets = [1, 0], sizes = [1, 512], strides = [1, 1]} : vector<8x512xf32> to vector<1x512xf32>
    %73 = vector.broadcast %72 : vector<1x512xf32> to vector<64x512xf32>
    %74 = arith.mulf %73, %70 : vector<64x512xf32>
    %75 = vector.broadcast %71 : vector<64x1xf32> to vector<64x512xf32>
    %76 = arith.mulf %75, %74 : vector<64x512xf32>
    %77 = arith.addf %67, %76 : vector<64x512xf32>
    %78 = vector.extract_strided_slice %53 {offsets = [0, 497], sizes = [64, 15], strides = [1, 1]} : vector<64x512xf32> to vector<64x15xf32>
    %79 = vector.extract_strided_slice %53 {offsets = [0, 0], sizes = [64, 497], strides = [1, 1]} : vector<64x512xf32> to vector<64x497xf32>
    %80 = tpu.concatenate %78, %79 in 1 : vector<64x15xf32>, vector<64x497xf32> -> vector<64x512xf32>
    %81 = vector.extract_strided_slice %10 {offsets = [0, 2], sizes = [64, 1], strides = [1, 1]} : vector<64x8xf32> to vector<64x1xf32>
    %82 = vector.extract_strided_slice %13 {offsets = [2, 0], sizes = [1, 512], strides = [1, 1]} : vector<8x512xf32> to vector<1x512xf32>
    %83 = vector.broadcast %82 : vector<1x512xf32> to vector<64x512xf32>
    %84 = arith.mulf %83, %80 : vector<64x512xf32>
    %85 = vector.broadcast %81 : vector<64x1xf32> to vector<64x512xf32>
    %86 = arith.mulf %85, %84 : vector<64x512xf32>
    %87 = arith.addf %77, %86 : vector<64x512xf32>
    %88 = vector.extract_strided_slice %53 {offsets = [0, 511], sizes = [64, 1], strides = [1, 1]} : vector<64x512xf32> to vector<64x1xf32>
    %89 = vector.extract_strided_slice %53 {offsets = [0, 0], sizes = [64, 511], strides = [1, 1]} : vector<64x512xf32> to vector<64x511xf32>
    %90 = tpu.concatenate %88, %89 in 1 : vector<64x1xf32>, vector<64x511xf32> -> vector<64x512xf32>
    %91 = vector.extract_strided_slice %10 {offsets = [0, 3], sizes = [64, 1], strides = [1, 1]} : vector<64x8xf32> to vector<64x1xf32>
    %92 = vector.extract_strided_slice %13 {offsets = [3, 0], sizes = [1, 512], strides = [1, 1]} : vector<8x512xf32> to vector<1x512xf32>
    %93 = vector.broadcast %92 : vector<1x512xf32> to vector<64x512xf32>
    %94 = arith.mulf %93, %90 : vector<64x512xf32>
    %95 = vector.broadcast %91 : vector<64x1xf32> to vector<64x512xf32>
    %96 = arith.mulf %95, %94 : vector<64x512xf32>
    %97 = arith.addf %87, %96 : vector<64x512xf32>
    %98 = vector.extract_strided_slice %53 {offsets = [0, 1], sizes = [64, 511], strides = [1, 1]} : vector<64x512xf32> to vector<64x511xf32>
    %99 = vector.extract_strided_slice %53 {offsets = [0, 0], sizes = [64, 1], strides = [1, 1]} : vector<64x512xf32> to vector<64x1xf32>
    %100 = tpu.concatenate %98, %99 in 1 : vector<64x511xf32>, vector<64x1xf32> -> vector<64x512xf32>
    %101 = vector.extract_strided_slice %10 {offsets = [0, 4], sizes = [64, 1], strides = [1, 1]} : vector<64x8xf32> to vector<64x1xf32>
    %102 = vector.extract_strided_slice %13 {offsets = [4, 0], sizes = [1, 512], strides = [1, 1]} : vector<8x512xf32> to vector<1x512xf32>
    %103 = vector.broadcast %102 : vector<1x512xf32> to vector<64x512xf32>
    %104 = arith.mulf %103, %100 : vector<64x512xf32>
    %105 = vector.broadcast %101 : vector<64x1xf32> to vector<64x512xf32>
    %106 = arith.mulf %105, %104 : vector<64x512xf32>
    %107 = arith.addf %97, %106 : vector<64x512xf32>
    %108 = vector.extract_strided_slice %53 {offsets = [0, 15], sizes = [64, 497], strides = [1, 1]} : vector<64x512xf32> to vector<64x497xf32>
    %109 = vector.extract_strided_slice %53 {offsets = [0, 0], sizes = [64, 15], strides = [1, 1]} : vector<64x512xf32> to vector<64x15xf32>
    %110 = tpu.concatenate %108, %109 in 1 : vector<64x497xf32>, vector<64x15xf32> -> vector<64x512xf32>
    %111 = vector.extract_strided_slice %10 {offsets = [0, 5], sizes = [64, 1], strides = [1, 1]} : vector<64x8xf32> to vector<64x1xf32>
    %112 = vector.extract_strided_slice %13 {offsets = [5, 0], sizes = [1, 512], strides = [1, 1]} : vector<8x512xf32> to vector<1x512xf32>
    %113 = vector.broadcast %112 : vector<1x512xf32> to vector<64x512xf32>
    %114 = arith.mulf %113, %110 : vector<64x512xf32>
    %115 = vector.broadcast %111 : vector<64x1xf32> to vector<64x512xf32>
    %116 = arith.mulf %115, %114 : vector<64x512xf32>
    %117 = arith.addf %107, %116 : vector<64x512xf32>
    %118 = vector.extract_strided_slice %53 {offsets = [0, 16], sizes = [64, 496], strides = [1, 1]} : vector<64x512xf32> to vector<64x496xf32>
    %119 = vector.extract_strided_slice %53 {offsets = [0, 0], sizes = [64, 16], strides = [1, 1]} : vector<64x512xf32> to vector<64x16xf32>
    %120 = tpu.concatenate %118, %119 in 1 : vector<64x496xf32>, vector<64x16xf32> -> vector<64x512xf32>
    %121 = vector.extract_strided_slice %10 {offsets = [0, 6], sizes = [64, 1], strides = [1, 1]} : vector<64x8xf32> to vector<64x1xf32>
    %122 = vector.extract_strided_slice %13 {offsets = [6, 0], sizes = [1, 512], strides = [1, 1]} : vector<8x512xf32> to vector<1x512xf32>
    %123 = vector.broadcast %122 : vector<1x512xf32> to vector<64x512xf32>
    %124 = arith.mulf %123, %120 : vector<64x512xf32>
    %125 = vector.broadcast %121 : vector<64x1xf32> to vector<64x512xf32>
    %126 = arith.mulf %125, %124 : vector<64x512xf32>
    %127 = arith.addf %117, %126 : vector<64x512xf32>
    %128 = vector.extract_strided_slice %53 {offsets = [0, 17], sizes = [64, 495], strides = [1, 1]} : vector<64x512xf32> to vector<64x495xf32>
    %129 = vector.extract_strided_slice %53 {offsets = [0, 0], sizes = [64, 17], strides = [1, 1]} : vector<64x512xf32> to vector<64x17xf32>
    %130 = tpu.concatenate %128, %129 in 1 : vector<64x495xf32>, vector<64x17xf32> -> vector<64x512xf32>
    %131 = vector.extract_strided_slice %10 {offsets = [0, 7], sizes = [64, 1], strides = [1, 1]} : vector<64x8xf32> to vector<64x1xf32>
    %132 = vector.extract_strided_slice %13 {offsets = [7, 0], sizes = [1, 512], strides = [1, 1]} : vector<8x512xf32> to vector<1x512xf32>
    %133 = vector.broadcast %132 : vector<1x512xf32> to vector<64x512xf32>
    %134 = arith.mulf %133, %130 : vector<64x512xf32>
    %135 = vector.broadcast %131 : vector<64x1xf32> to vector<64x512xf32>
    %136 = arith.mulf %135, %134 : vector<64x512xf32>
    %137 = arith.addf %127, %136 : vector<64x512xf32>
    %138 = arith.truncf %137 : vector<64x512xf32> to vector<64x512xbf16>
    %cst_49 = arith.constant dense<0.000000e+00> : vector<128x512xf32>
    %139 = tpu.matmul %3, %138, %cst_49 {dimension_numbers = #tpu.dot_dimension_numbers<[0], [0], [1], [1], [0, 1, 1, 1], [], []>} : vector<64x128xbf16>, vector<64x512xbf16>, vector<128x512xf32> -> vector<128x512xf32>
    %140 = vector.broadcast %11 : vector<128x1xf32> to vector<128x512xf32>
    %141 = arith.addf %139, %140 : vector<128x512xf32>
    %142 = math.absf %141 : vector<128x512xf32>
    %cst_50 = arith.constant 0.707106769 : f32
    %143 = vector.broadcast %cst_50 : f32 to vector<128x512xf32>
    %144 = arith.mulf %142, %143 : vector<128x512xf32>
    %cst_51 = arith.constant 0.327591091 : f32
    %145 = vector.broadcast %cst_51 : f32 to vector<128x512xf32>
    %146 = arith.mulf %145, %144 : vector<128x512xf32>
    %cst_52 = arith.constant 1.000000e+00 : f32
    %147 = vector.broadcast %cst_52 : f32 to vector<128x512xf32>
    %148 = arith.addf %147, %146 : vector<128x512xf32>
    %149 = tpu.reciprocal %148 {approx = true} : vector<128x512xf32> -> vector<128x512xf32>
    %cst_53 = arith.constant 1.06140542 : f32
    %150 = vector.broadcast %cst_53 : f32 to vector<128x512xf32>
    %151 = arith.mulf %150, %149 : vector<128x512xf32>
    %cst_54 = arith.constant 1.45315206 : f32
    %152 = vector.broadcast %cst_54 : f32 to vector<128x512xf32>
    %153 = arith.subf %151, %152 : vector<128x512xf32>
    %154 = arith.mulf %153, %149 : vector<128x512xf32>
    %cst_55 = arith.constant 1.42141378 : f32
    %155 = vector.broadcast %cst_55 : f32 to vector<128x512xf32>
    %156 = arith.addf %154, %155 : vector<128x512xf32>
    %157 = arith.mulf %156, %149 : vector<128x512xf32>
    %cst_56 = arith.constant 0.284496725 : f32
    %158 = vector.broadcast %cst_56 : f32 to vector<128x512xf32>
    %159 = arith.subf %157, %158 : vector<128x512xf32>
    %160 = arith.mulf %159, %149 : vector<128x512xf32>
    %cst_57 = arith.constant 0.254829586 : f32
    %161 = vector.broadcast %cst_57 : f32 to vector<128x512xf32>
    %162 = arith.addf %160, %161 : vector<128x512xf32>
    %163 = arith.mulf %162, %149 : vector<128x512xf32>
    %cst_58 = arith.constant 5.000000e-01 : f32
    %164 = vector.broadcast %cst_58 : f32 to vector<128x512xf32>
    %165 = arith.mulf %164, %141 : vector<128x512xf32>
    %cst_59 = arith.constant 5.000000e-01 : f32
    %166 = vector.broadcast %cst_59 : f32 to vector<128x512xf32>
    %167 = arith.mulf %166, %142 : vector<128x512xf32>
    %cst_60 = arith.constant 0.000000e+00 : f32
    %168 = vector.broadcast %cst_60 : f32 to vector<128x512xf32>
    %169 = arith.subf %168, %144 : vector<128x512xf32>
    %170 = arith.mulf %169, %144 : vector<128x512xf32>
    %171 = math.exp %170 : vector<128x512xf32>
    %172 = arith.mulf %163, %171 : vector<128x512xf32>
    %cst_61 = arith.constant 1.000000e+00 : f32
    %173 = vector.broadcast %cst_61 : f32 to vector<128x512xf32>
    %174 = arith.subf %173, %172 : vector<128x512xf32>
    %175 = arith.mulf %167, %174 : vector<128x512xf32>
    %176 = arith.addf %165, %175 : vector<128x512xf32>
    %177 = arith.truncf %176 : vector<128x512xf32> to vector<128x512xbf16>
    %cst_62 = arith.constant dense<0.000000e+00> : vector<64x512xf32>
    %178 = tpu.matmul %2, %177, %cst_62 {dimension_numbers = #tpu.dot_dimension_numbers<[0], [0], [1], [1], [0, 1, 1, 1], [], []>} : vector<128x64xbf16>, vector<128x512xbf16>, vector<64x512xf32> -> vector<64x512xf32>
    %179 = arith.addf %137, %178 : vector<64x512xf32>
    %180 = vector.broadcast %7 : vector<64x1xf32> to vector<64x512xf32>
    %181 = arith.addf %179, %180 : vector<64x512xf32>
    %182 = arith.truncf %181 : vector<64x512xf32> to vector<64x512xbf16>
    %cst_63 = arith.constant dense<0.000000e+00> : vector<96x512xf32>
    %183 = tpu.matmul %4, %182, %cst_63 {dimension_numbers = #tpu.dot_dimension_numbers<[0], [0], [1], [1], [0, 1, 1, 1], [], []>} : vector<64x96xbf16>, vector<64x512xbf16>, vector<96x512xf32> -> vector<96x512xf32>
    %184 = vector.broadcast %12 : vector<96x1xf32> to vector<96x512xf32>
    %185 = arith.addf %183, %184 : vector<96x512xf32>
    %186 = vector.extract_strided_slice %185 {offsets = [0, 0], sizes = [96, 256], strides = [1, 1]} : vector<96x512xf32> to vector<96x256xf32>
    %c0_64 = arith.constant 0 : index
    %c0_65 = arith.constant 0 : index
    %c0_66 = arith.constant 0 : index
    %187 = vector.load %arg12[%c0_64, %c0_65, %c0_66] : memref<2x104x256xf32, #tpu.memory_space<vmem>>, vector<1x96x256xf32>
    %188 = vector.shape_cast %187 : vector<1x96x256xf32> to vector<96x256xf32>
    %189 = vector.shape_cast %186 : vector<96x256xf32> to vector<1x96x256xf32>
    tpu.vector_store %arg12[%c0_64, %c0_65, %c0_66], %189 {strides = array<i32>} : memref<2x104x256xf32, #tpu.memory_space<vmem>>, vector<1x96x256xf32>,
    %190 = vector.extract_strided_slice %185 {offsets = [0, 256], sizes = [96, 256], strides = [1, 1]} : vector<96x512xf32> to vector<96x256xf32>
    %c1_67 = arith.constant 1 : index
    %c0_68 = arith.constant 0 : index
    %c0_69 = arith.constant 0 : index
    %191 = vector.load %arg12[%c1_67, %c0_68, %c0_69] : memref<2x104x256xf32, #tpu.memory_space<vmem>>, vector<1x96x256xf32>
    %192 = vector.shape_cast %191 : vector<1x96x256xf32> to vector<96x256xf32>
    %193 = vector.shape_cast %190 : vector<96x256xf32> to vector<1x96x256xf32>
    tpu.vector_store %arg12[%c1_67, %c0_68, %c0_69], %193 {strides = array<i32>} : memref<2x104x256xf32, #tpu.memory_space<vmem>>, vector<1x96x256xf32>,
    %c0_70 = arith.constant 0 : index
    %c0_71 = arith.constant 0 : index
    %c0_72 = arith.constant 0 : index
    %194 = vector.load %arg2[%c0_70, %c0_71, %c0_72] : memref<2x8x256xf32, #tpu.memory_space<vmem>>, vector<2x8x256xf32>
    %c0_73 = arith.constant 0 : index
    %c96 = arith.constant 96 : index
    %c0_74 = arith.constant 0 : index
    %195 = vector.load %arg12[%c0_73, %c96, %c0_74] : memref<2x104x256xf32, #tpu.memory_space<vmem>>, vector<2x8x256xf32>
    tpu.vector_store %arg12[%c0_73, %c96, %c0_74], %194 {strides = array<i32>} : memref<2x104x256xf32, #tpu.memory_space<vmem>>, vector<2x8x256xf32>,
    return
  }
  func.func @transform_0(%arg0: i32) -> (i32, i32, i32) {
    %c0_i32 = arith.constant 0 : i32
    %c0_i32_0 = arith.constant 0 : i32
    %c0_i32_1 = arith.constant 0 : i32
    return %arg0, %c0_i32, %c0_i32_0 : i32, i32, i32
  }
  func.func @transform_1(%arg0: i32) -> (i32, i32, i32) {
    %c0_i32 = arith.constant 0 : i32
    %c0_i32_0 = arith.constant 0 : i32
    %c0_i32_1 = arith.constant 0 : i32
    return %arg0, %c0_i32, %c0_i32_0 : i32, i32, i32
  }
  func.func @transform_2(%arg0: i32) -> (i32, i32) {
    %c0_i32 = arith.constant 0 : i32
    %c0_i32_0 = arith.constant 0 : i32
    %c0_i32_1 = arith.constant 0 : i32
    return %c0_i32, %c0_i32_0 : i32, i32
  }
  func.func @transform_3(%arg0: i32) -> (i32, i32) {
    %c0_i32 = arith.constant 0 : i32
    %c0_i32_0 = arith.constant 0 : i32
    %c0_i32_1 = arith.constant 0 : i32
    return %c0_i32, %c0_i32_0 : i32, i32
  }
  func.func @transform_4(%arg0: i32) -> (i32, i32) {
    %c0_i32 = arith.constant 0 : i32
    %c0_i32_0 = arith.constant 0 : i32
    %c0_i32_1 = arith.constant 0 : i32
    return %c0_i32, %c0_i32_0 : i32, i32
  }
  func.func @transform_5(%arg0: i32) -> (i32, i32) {
    %c0_i32 = arith.constant 0 : i32
    %c0_i32_0 = arith.constant 0 : i32
    %c0_i32_1 = arith.constant 0 : i32
    return %c0_i32, %c0_i32_0 : i32, i32
  }
  func.func @transform_6(%arg0: i32) -> (i32, i32) {
    %c0_i32 = arith.constant 0 : i32
    %c0_i32_0 = arith.constant 0 : i32
    %c0_i32_1 = arith.constant 0 : i32
    return %c0_i32, %c0_i32_0 : i32, i32
  }
  func.func @transform_7(%arg0: i32) -> (i32, i32) {
    %c0_i32 = arith.constant 0 : i32
    %c0_i32_0 = arith.constant 0 : i32
    %c0_i32_1 = arith.constant 0 : i32
    return %c0_i32, %c0_i32_0 : i32, i32
  }
  func.func @transform_8(%arg0: i32) -> (i32, i32) {
    %c0_i32 = arith.constant 0 : i32
    %c0_i32_0 = arith.constant 0 : i32
    %c0_i32_1 = arith.constant 0 : i32
    return %c0_i32, %c0_i32_0 : i32, i32
  }
  func.func @transform_9(%arg0: i32) -> (i32, i32) {
    %c0_i32 = arith.constant 0 : i32
    %c0_i32_0 = arith.constant 0 : i32
    %c0_i32_1 = arith.constant 0 : i32
    return %c0_i32, %c0_i32_0 : i32, i32
  }
  func.func @transform_10(%arg0: i32) -> (i32, i32) {
    %c0_i32 = arith.constant 0 : i32
    %c0_i32_0 = arith.constant 0 : i32
    %c0_i32_1 = arith.constant 0 : i32
    return %c0_i32, %c0_i32_0 : i32, i32
  }
  func.func @transform_11(%arg0: i32) -> (i32, i32, i32) {
    %c0_i32 = arith.constant 0 : i32
    %c0_i32_0 = arith.constant 0 : i32
    %c0_i32_1 = arith.constant 0 : i32
    return %arg0, %c0_i32, %c0_i32_0 : i32, i32, i32
  }
}

</mosaic_0001>

<llo_original>
// kernel: ecm_forward.1
$region0: #{ecm_forward.1}
  #allocation0 [shape = 'u32[]', space=smem, size = 0x4, offset = 0x4, fixed_abs, tag = 'smem constant byte address 0x4 - core index']
  #allocation1 [shape = 'u32[144,128]{1,0:T(1,128)}', space=vmem, size = 0x12000, scoped, tag = 'internal scratch']
  #allocation2 [shape = 'f32[64,512]{1,0:T(8,128)}', space=vmem, size = 0x20000, scoped, tag = 'scratch operand']
  %s0 = inlined_call_operand.vmem [shape: f32[2,8,64], index: 0, kind: input, shape index: {}]
  %s1 = inlined_call_operand.vmem [shape: f32[2,8,256], index: 1, kind: input, shape index: {}]
  %s2 = inlined_call_operand.vmem [shape: f32[8,512], index: 2, kind: input, shape index: {}]
  %s3 = inlined_call_operand.vmem [shape: bf16[512,128], index: 3, kind: input, shape index: {}]
  %s4 = inlined_call_operand.vmem [shape: bf16[128,512], index: 4, kind: input, shape index: {}]
  %s5 = inlined_call_operand.vmem [shape: bf16[256,64], index: 5, kind: input, shape index: {}]
  %s6 = inlined_call_operand.vmem [shape: bf16[64,128], index: 6, kind: input, shape index: {}]
  %s7 = inlined_call_operand.vmem [shape: bf16[64,96], index: 7, kind: input, shape index: {}]
  %s8 = inlined_call_operand.vmem [shape: f32[64,13], index: 8, kind: input, shape index: {}]
  %s9 = inlined_call_operand.vmem [shape: f32[128,1], index: 9, kind: input, shape index: {}]
  %s10 = inlined_call_operand.vmem [shape: f32[96,1], index: 10, kind: input, shape index: {}]
  %s11 = inlined_call_operand.vmem [shape: f32[2,104,256], index: 11, kind: output, shape index: {}]
  %s12 = sld [smem:[#allocation0]]
  $region54: #{ecm_forward.1} parent=0
    _
  %s14 = ssub.s32 1, %s12
  %s15 = scalar_select 0, %s14, %s12
  // Predicated region
  $region2: #{ecm_forward.1} parent=0 // pred_check
    _
  $region3: #{ecm_forward.1} parent=0 // pred_check_branch
    %17 = sbr.rel (0) target = $region5
  $region4: #{ecm_forward.1} parent=0 // pred_region
    _
  $region5: #{ecm_forward.1} parent=0 // pred_fallthru
    _
  // Predicated region
  $region6: #{ecm_forward.1} parent=0 // pred_check
    _
  $region7: #{ecm_forward.1} parent=0 // pred_check_branch
    %19 = sbr.rel (0) target = $region9
  $region8: #{ecm_forward.1} parent=0 // pred_region
    _
  $region9: #{ecm_forward.1} parent=0 // pred_fallthru
    _
  // Predicated region
  $region10: #{ecm_forward.1} parent=0 // pred_check
    _
  $region11: #{ecm_forward.1} parent=0 // pred_check_branch
    %21 = sbr.rel (0) target = $region13
  $region12: #{ecm_forward.1} parent=0 // pred_region
    _
  $region13: #{ecm_forward.1} parent=0 // pred_fallthru
    _
  // Predicated region
  $region14: #{ecm_forward.1} parent=0 // pred_check
    _
  $region15: #{ecm_forward.1} parent=0 // pred_check_branch
    %23 = sbr.rel (0) target = $region17
  $region16: #{ecm_forward.1} parent=0 // pred_region
    _
  $region17: #{ecm_forward.1} parent=0 // pred_fallthru
    _
  // Predicated region
  $region18: #{ecm_forward.1} parent=0 // pred_check
    _
  $region19: #{ecm_forward.1} parent=0 // pred_check_branch
    %25 = sbr.rel (0) target = $region21
  $region20: #{ecm_forward.1} parent=0 // pred_region
    _
  $region21: #{ecm_forward.1} parent=0 // pred_fallthru
    _
  // Predicated region
  $region22: #{ecm_forward.1} parent=0 // pred_check
    _
  $region23: #{ecm_forward.1} parent=0 // pred_check_branch
    %27 = sbr.rel (0) target = $region25
  $region24: #{ecm_forward.1} parent=0 // pred_region
    _
  $region25: #{ecm_forward.1} parent=0 // pred_fallthru
    _
  // Predicated region
  $region26: #{ecm_forward.1} parent=0 // pred_check
    _
  $region27: #{ecm_forward.1} parent=0 // pred_check_branch
    %29 = sbr.rel (0) target = $region29
  $region28: #{ecm_forward.1} parent=0 // pred_region
    _
  $region29: #{ecm_forward.1} parent=0 // pred_fallthru
    _
  // Predicated region
  $region30: #{ecm_forward.1} parent=0 // pred_check
    _
  $region31: #{ecm_forward.1} parent=0 // pred_check_branch
    %31 = sbr.rel (0) target = $region33
  $region32: #{ecm_forward.1} parent=0 // pred_region
    _
  $region33: #{ecm_forward.1} parent=0 // pred_fallthru
    _
  // Predicated region
  $region34: #{ecm_forward.1} parent=0 // pred_check
    _
  $region35: #{ecm_forward.1} parent=0 // pred_check_branch
    %33 = sbr.rel (0) target = $region37
  $region36: #{ecm_forward.1} parent=0 // pred_region
    _
  $region37: #{ecm_forward.1} parent=0 // pred_fallthru
    _
  // Predicated region
  $region38: #{ecm_forward.1} parent=0 // pred_check
    _
  $region39: #{ecm_forward.1} parent=0 // pred_check_branch
    %35 = sbr.rel (0) target = $region41
  $region40: #{ecm_forward.1} parent=0 // pred_region
    _
  $region41: #{ecm_forward.1} parent=0 // pred_fallthru
    _
  // Predicated region
  $region42: #{ecm_forward.1} parent=0 // pred_check
    _
  $region43: #{ecm_forward.1} parent=0 // pred_check_branch
    %37 = sbr.rel (0) target = $region45
  $region44: #{ecm_forward.1} parent=0 // pred_region
    _
  $region45: #{ecm_forward.1} parent=0 // pred_fallthru
    _
  %v39 = vld [vmem:[%s5] sm:$0xf]
  %v40 = vld [vmem:[%s5 + $0x4] sm:$0xf]
  %v41 = vld [vmem:[%s5 + $0x8] sm:$0xf]
  %v42 = vld [vmem:[%s5 + $0xc] sm:$0xf]
  %v43 = vld [vmem:[%s5 + $0x10] sm:$0xf]
  %v44 = vld [vmem:[%s5 + $0x14] sm:$0xf]
  %v45 = vld [vmem:[%s5 + $0x18] sm:$0xf]
  %v46 = vld [vmem:[%s5 + $0x1c] sm:$0xf]
  %v47 = vld [vmem:[%s5 + $0x20] sm:$0xf]
  %v48 = vld [vmem:[%s5 + $0x24] sm:$0xf]
  %v49 = vld [vmem:[%s5 + $0x28] sm:$0xf]
  %v50 = vld [vmem:[%s5 + $0x2c] sm:$0xf]
  %v51 = vld [vmem:[%s5 + $0x30] sm:$0xf]
  %v52 = vld [vmem:[%s5 + $0x34] sm:$0xf]
  %v53 = vld [vmem:[%s5 + $0x38] sm:$0xf]
  %v54 = vld [vmem:[%s5 + $0x3c] sm:$0xf]
  %v55 = vld [vmem:[%s5 + $0x40] sm:$0xf]
  %v56 = vld [vmem:[%s5 + $0x44] sm:$0xf]
  %v57 = vld [vmem:[%s5 + $0x48] sm:$0xf]
  %v58 = vld [vmem:[%s5 + $0x4c] sm:$0xf]
  %v59 = vld [vmem:[%s5 + $0x50] sm:$0xf]
  %v60 = vld [vmem:[%s5 + $0x54] sm:$0xf]
  %v61 = vld [vmem:[%s5 + $0x58] sm:$0xf]
  %v62 = vld [vmem:[%s5 + $0x5c] sm:$0xf]
  %v63 = vld [vmem:[%s5 + $0x60] sm:$0xf]
  %v64 = vld [vmem:[%s5 + $0x64] sm:$0xf]
  %v65 = vld [vmem:[%s5 + $0x68] sm:$0xf]
  %v66 = vld [vmem:[%s5 + $0x6c] sm:$0xf]
  %v67 = vld [vmem:[%s5 + $0x70] sm:$0xf]
  %v68 = vld [vmem:[%s5 + $0x74] sm:$0xf]
  %v69 = vld [vmem:[%s5 + $0x78] sm:$0xf]
  %v70 = vld [vmem:[%s5 + $0x7c] sm:$0xf]
  %v71 = vld [vmem:[%s6] sm:$0xf]
  %v72 = vld [vmem:[%s6 + $0x4] sm:$0xf]
  %v73 = vld [vmem:[%s6 + $0x8] sm:$0xf]
  %v74 = vld [vmem:[%s6 + $0xc] sm:$0xf]
  %v75 = vld [vmem:[%s6 + $0x10] sm:$0xf]
  %v76 = vld [vmem:[%s6 + $0x14] sm:$0xf]
  %v77 = vld [vmem:[%s6 + $0x18] sm:$0xf]
  %v78 = vld [vmem:[%s6 + $0x1c] sm:$0xf]
  %v79 = vld [vmem:[%s7] sm:$0xf]
  %v80 = vld [vmem:[%s7 + $0x4] sm:$0xf]
  %v81 = vld [vmem:[%s7 + $0x8] sm:$0xf]
  %v82 = vld [vmem:[%s7 + $0xc] sm:$0xf]
  %v83 = vld [vmem:[%s7 + $0x10] sm:$0xf]
  %v84 = vld [vmem:[%s7 + $0x14] sm:$0xf]
  %v85 = vld [vmem:[%s7 + $0x18] sm:$0xf]
  %v86 = vld [vmem:[%s7 + $0x1c] sm:$0xf]
  %v87 = vld [vmem:[%s8] sm:$0xff]
  %v88 = vld [vmem:[%s8 + $0x8] sm:$0xff]
  %v89 = vld [vmem:[%s8 + $0x10] sm:$0xff]
  %v90 = vld [vmem:[%s8 + $0x18] sm:$0xff]
  %v91 = vld [vmem:[%s8 + $0x20] sm:$0xff]
  %v92 = vld [vmem:[%s8 + $0x28] sm:$0xff]
  %v93 = vld [vmem:[%s8 + $0x30] sm:$0xff]
  %v94 = vld [vmem:[%s8 + $0x38] sm:$0xff]
  %v95 = vld [vmem:[%s9] sm:$0xff]
  %v96 = vld [vmem:[%s9 + $0x8] sm:$0xff]
  %v97 = vld [vmem:[%s9 + $0x10] sm:$0xff]
  %v98 = vld [vmem:[%s9 + $0x18] sm:$0xff]
  %v99 = vld [vmem:[%s9 + $0x20] sm:$0xff]
  %v100 = vld [vmem:[%s9 + $0x28] sm:$0xff]
  %v101 = vld [vmem:[%s9 + $0x30] sm:$0xff]
  %v102 = vld [vmem:[%s9 + $0x38] sm:$0xff]
  %v103 = vld [vmem:[%s9 + $0x40] sm:$0xff]
  %v104 = vld [vmem:[%s9 + $0x48] sm:$0xff]
  %v105 = vld [vmem:[%s9 + $0x50] sm:$0xff]
  %v106 = vld [vmem:[%s9 + $0x58] sm:$0xff]
  %v107 = vld [vmem:[%s9 + $0x60] sm:$0xff]
  %v108 = vld [vmem:[%s9 + $0x68] sm:$0xff]
  %v109 = vld [vmem:[%s9 + $0x70] sm:$0xff]
  %v110 = vld [vmem:[%s9 + $0x78] sm:$0xff]
  %v111 = vld [vmem:[%s10] sm:$0xff]
  %v112 = vld [vmem:[%s10 + $0x8] sm:$0xff]
  %v113 = vld [vmem:[%s10 + $0x10] sm:$0xff]
  %v114 = vld [vmem:[%s10 + $0x18] sm:$0xff]
  %v115 = vld [vmem:[%s10 + $0x20] sm:$0xff]
  %v116 = vld [vmem:[%s10 + $0x28] sm:$0xff]
  %v117 = vld [vmem:[%s10 + $0x30] sm:$0xff]
  %v118 = vld [vmem:[%s10 + $0x38] sm:$0xff]
  %v119 = vld [vmem:[%s10 + $0x40] sm:$0xff]
  %v120 = vld [vmem:[%s10 + $0x48] sm:$0xff]
  %v121 = vld [vmem:[%s10 + $0x50] sm:$0xff]
  %v122 = vld [vmem:[%s10 + $0x58] sm:$0xff]
  %v123 = vld [vmem:[%s2] sm:$0xff]
  %v124 = vld [vmem:[%s2 + $0x8] sm:$0xff]
  %v125 = vld [vmem:[%s2 + $0x10] sm:$0xff]
  %v126 = vld [vmem:[%s2 + $0x18] sm:$0xff]
  %v127 = vld [vmem:[%s0] sm:$0xff]
  %v128 = vpack.c.bf16 %v127, %v127
  %v129 = vld [vmem:[%s1] sm:$0xff]
  %v130 = vld [vmem:[%s1 + $0x8] sm:$0xff]
  %v131 = vpack.c.bf16 %v129, %v129
  %v132 = vpack.c.bf16 %v130, %v130
  %133 = vxpose.xlu0.c.b16.start [1/8] %v128, 128
  %134 = vxpose.xlu0.c.b16.cont [2/8] 0, 128
  %135 = vxpose.xlu0.c.b16.cont [3/8] 0, 128
  %136 = vxpose.xlu0.c.b16.cont [4/8] 0, 128
  %137 = vxpose.xlu0.c.b16.cont [5/8] 0, 128
  %138 = vxpose.xlu0.c.b16.cont [6/8] 0, 128
  %139 = vxpose.xlu0.c.b16.cont [7/8] 0, 128
  %140 = vxpose.xlu0.c.b16.end [8/8] 0, 128
  %v141 = vpop.trf.xlu0
  %v142 = vpop.trf.xlu0
  %v143 = vpop.trf.xlu0
  %v144 = vpop.trf.xlu0
  %v145 = vpop.trf.xlu0
  %v146 = vpop.trf.xlu0
  %v147 = vpop.trf.xlu0
  %v148 = vpop.trf.xlu0
  %vm149 = vcmask 64512
  %v151 = vsel %vm149, %v141, 0
  %v154 = vsel %vm149, %v142, 0
  %v157 = vsel %vm149, %v143, 0
  %v160 = vsel %vm149, %v144, 0
  %vm162 = vcmask 1043456
  %v164 = vsel %vm162, %v131, 0
  %v167 = vsel %vm162, %v132, 0
  %169 = vmatprep.subr.bf16.mxu0 0
  %170 = vmatpush1.bf16.msra.mxu0 0
  %171 = vmatprep.subr.bf16.mxu0 0
  %172 = vmatpush1.bf16.msra.mxu0 0
  %173 = vmatprep.subr.bf16.mxu0 0
  %174 = vmatpush1.bf16.msra.mxu0 0
  %175 = vmatprep.subr.bf16.mxu0 0
  %176 = vmatpush1.bf16.msra.mxu0 0
  %177 = vmatprep.subr.bf16.mxu0 0
  %178 = vmatpush1.bf16.msra.mxu0 0
  %179 = vmatprep.subr.bf16.mxu0 0
  %180 = vmatpush1.bf16.msra.mxu0 0
  %181 = vmatprep.subr.bf16.mxu0 0
  %182 = vmatpush1.bf16.msra.mxu0 0
  %183 = vmatprep.subr.bf16.mxu0 %v167
  %184 = vmatpush1.bf16.msra.mxu0 %v164
  %185 = vmatprep.subr.bf16.mxu0 0
  %186 = vmatpush2.bf16.msra.mxu0 0
  %187 = vmatprep.subr.bf16.mxu0 0
  %188 = vmatpush2.bf16.msra.mxu0 0
  %189 = vmatprep.subr.bf16.mxu0 0
  %190 = vmatpush2.bf16.msra.mxu0 0
  %191 = vmatprep.subr.bf16.mxu0 0
  %192 = vmatpush2.bf16.msra.mxu0 0
  %193 = vmatprep.subr.bf16.mxu0 0
  %194 = vmatpush2.bf16.msra.mxu0 0
  %195 = vmatprep.subr.bf16.mxu0 0
  %196 = vmatpush2.bf16.msra.mxu0 0
  %197 = vmatprep.subr.bf16.mxu0 0
  %198 = vmatpush2.bf16.msra.mxu0 0
  %199 = vmatprep.subr.bf16.mxu0 0
  %200 = vmatpush2.bf16.msra.mxu0 0
  %201 = vmatprep.mubr.bf16.mxu0 0
  %202 = vmatmul.mubr.bf16.gmra.mxu0 %v151
  %v203 = vpop.f32.mrf.mxu0
  %v204 = vadd.f32 0.0, %v203
  %v205 = vpop.f32.mrf.mxu0
  %v206 = vadd.f32 0.0, %v205
  %v207 = vpop.f32.mrf.mxu0
  %v208 = vadd.f32 0.0, %v207
  %v209 = vpop.f32.mrf.mxu0
  %v210 = vadd.f32 0.0, %v209
  %211 = vmatprep.mubr.bf16.mxu0 0
  %212 = vmatmul.mubr.bf16.gmra.mxu0 %v154
  %v213 = vpop.f32.mrf.mxu0
  %v214 = vadd.f32 0.0, %v213
  %v215 = vpop.f32.mrf.mxu0
  %v216 = vadd.f32 0.0, %v215
  %v217 = vpop.f32.mrf.mxu0
  %v218 = vadd.f32 0.0, %v217
  %v219 = vpop.f32.mrf.mxu0
  %v220 = vadd.f32 0.0, %v219
  %221 = vmatprep.mubr.bf16.mxu0 0
  %222 = vmatmul.mubr.bf16.gmra.mxu0 %v157
  %v223 = vpop.f32.mrf.mxu0
  %v224 = vadd.f32 0.0, %v223
  %v225 = vpop.f32.mrf.mxu0
  %v226 = vadd.f32 0.0, %v225
  %v227 = vpop.f32.mrf.mxu0
  %v228 = vadd.f32 0.0, %v227
  %v229 = vpop.f32.mrf.mxu0
  %v230 = vadd.f32 0.0, %v229
  %231 = vmatprep.mubr.bf16.mxu0 0
  %232 = vmatmul.mubr.bf16.gmra.mxu0 %v160
  %v233 = vpop.f32.mrf.mxu0
  %v234 = vadd.f32 0.0, %v233
  %v235 = vpop.f32.mrf.mxu0
  %v236 = vadd.f32 0.0, %v235
  %v237 = vpop.f32.mrf.mxu0
  %v238 = vadd.f32 0.0, %v237
  %v239 = vpop.f32.mrf.mxu0
  %v240 = vadd.f32 0.0, %v239
  %241 = vdwg.mxu0
  %242 = vst [vmem:[#allocation2] sm:$0xff] %v204
  %243 = vst [vmem:[#allocation2 + $0x8] sm:$0xff] %v206
  %244 = vst [vmem:[#allocation2 + $0x20] sm:$0xff] %v208
  %245 = vst [vmem:[#allocation2 + $0x28] sm:$0xff] %v210
  %246 = vst [vmem:[#allocation2 + $0x40] sm:$0xff] %v214
  %247 = vst [vmem:[#allocation2 + $0x48] sm:$0xff] %v216
  %248 = vst [vmem:[#allocation2 + $0x60] sm:$0xff] %v218
  %249 = vst [vmem:[#allocation2 + $0x68] sm:$0xff] %v220
  %250 = vst [vmem:[#allocation2 + $0x80] sm:$0xff] %v224
  %251 = vst [vmem:[#allocation2 + $0x88] sm:$0xff] %v226
  %252 = vst [vmem:[#allocation2 + $0xa0] sm:$0xff] %v228
  %253 = vst [vmem:[#allocation2 + $0xa8] sm:$0xff] %v230
  %254 = vst [vmem:[#allocation2 + $0xc0] sm:$0xff] %v234
  %255 = vst [vmem:[#allocation2 + $0xc8] sm:$0xff] %v236
  %256 = vst [vmem:[#allocation2 + $0xe0] sm:$0xff] %v238
  %257 = vst [vmem:[#allocation2 + $0xe8] sm:$0xff] %v240
  %s258 = scalar_lea.vmem %s0, 8
  %v259 = vld [vmem:[%s258] sm:$0xff]
  %v260 = vpack.c.bf16 %v259, %v259
  %s261 = scalar_lea.vmem %s1, 16
  %v262 = vld [vmem:[%s261] sm:$0xff]
  %v263 = vld [vmem:[%s261 + $0x8] sm:$0xff]
  %v264 = vpack.c.bf16 %v262, %v262
  %v265 = vpack.c.bf16 %v263, %v263
  %266 = vxpose.xlu0.c.b16.start [1/8] %v260, 128
  %267 = vxpose.xlu0.c.b16.cont [2/8] 0, 128
  %268 = vxpose.xlu0.c.b16.cont [3/8] 0, 128
  %269 = vxpose.xlu0.c.b16.cont [4/8] 0, 128
  %270 = vxpose.xlu0.c.b16.cont [5/8] 0, 128
  %271 = vxpose.xlu0.c.b16.cont [6/8] 0, 128
  %272 = vxpose.xlu0.c.b16.cont [7/8] 0, 128
  %273 = vxpose.xlu0.c.b16.end [8/8] 0, 128
  %v274 = vpop.trf.xlu0
  %v275 = vpop.trf.xlu0
  %v276 = vpop.trf.xlu0
  %v277 = vpop.trf.xlu0
  %v278 = vpop.trf.xlu0
  %v279 = vpop.trf.xlu0
  %v280 = vpop.trf.xlu0
  %v281 = vpop.trf.xlu0
  %v283 = vsel %vm149, %v274, 0
  %v286 = vsel %vm149, %v275, 0
  %v289 = vsel %vm149, %v276, 0
  %v292 = vsel %vm149, %v277, 0
  %v295 = vsel %vm162, %v264, 0
  %v298 = vsel %vm162, %v265, 0
  %300 = vmatprep.subr.bf16.mxu0 0
  %301 = vmatpush1.bf16.msra.mxu0 0
  %302 = vmatprep.subr.bf16.mxu0 0
  %303 = vmatpush1.bf16.msra.mxu0 0
  %304 = vmatprep.subr.bf16.mxu0 0
  %305 = vmatpush1.bf16.msra.mxu0 0
  %306 = vmatprep.subr.bf16.mxu0 0
  %307 = vmatpush1.bf16.msra.mxu0 0
  %308 = vmatprep.subr.bf16.mxu0 0
  %309 = vmatpush1.bf16.msra.mxu0 0
  %310 = vmatprep.subr.bf16.mxu0 0
  %311 = vmatpush1.bf16.msra.mxu0 0
  %312 = vmatprep.subr.bf16.mxu0 0
  %313 = vmatpush1.bf16.msra.mxu0 0
  %314 = vmatprep.subr.bf16.mxu0 %v298
  %315 = vmatpush1.bf16.msra.mxu0 %v295
  %316 = vmatprep.subr.bf16.mxu0 0
  %317 = vmatpush2.bf16.msra.mxu0 0
  %318 = vmatprep.subr.bf16.mxu0 0
  %319 = vmatpush2.bf16.msra.mxu0 0
  %320 = vmatprep.subr.bf16.mxu0 0
  %321 = vmatpush2.bf16.msra.mxu0 0
  %322 = vmatprep.subr.bf16.mxu0 0
  %323 = vmatpush2.bf16.msra.mxu0 0
  %324 = vmatprep.subr.bf16.mxu0 0
  %325 = vmatpush2.bf16.msra.mxu0 0
  %326 = vmatprep.subr.bf16.mxu0 0
  %327 = vmatpush2.bf16.msra.mxu0 0
  %328 = vmatprep.subr.bf16.mxu0 0
  %329 = vmatpush2.bf16.msra.mxu0 0
  %330 = vmatprep.subr.bf16.mxu0 0
  %331 = vmatpush2.bf16.msra.mxu0 0
  %332 = vmatprep.mubr.bf16.mxu0 0
  %333 = vmatmul.mubr.bf16.gmra.mxu0 %v283
  %v334 = vpop.f32.mrf.mxu0
  %v335 = vadd.f32 0.0, %v334
  %v336 = vpop.f32.mrf.mxu0
  %v337 = vadd.f32 0.0, %v336
  %v338 = vpop.f32.mrf.mxu0
  %v339 = vadd.f32 0.0, %v338
  %v340 = vpop.f32.mrf.mxu0
  %v341 = vadd.f32 0.0, %v340
  %342 = vmatprep.mubr.bf16.mxu0 0
  %343 = vmatmul.mubr.bf16.gmra.mxu0 %v286
  %v344 = vpop.f32.mrf.mxu0
  %v345 = vadd.f32 0.0, %v344
  %v346 = vpop.f32.mrf.mxu0
  %v347 = vadd.f32 0.0, %v346
  %v348 = vpop.f32.mrf.mxu0
  %v349 = vadd.f32 0.0, %v348
  %v350 = vpop.f32.mrf.mxu0
  %v351 = vadd.f32 0.0, %v350
  %352 = vmatprep.mubr.bf16.mxu0 0
  %353 = vmatmul.mubr.bf16.gmra.mxu0 %v289
  %v354 = vpop.f32.mrf.mxu0
  %v355 = vadd.f32 0.0, %v354
  %v356 = vpop.f32.mrf.mxu0
  %v357 = vadd.f32 0.0, %v356
  %v358 = vpop.f32.mrf.mxu0
  %v359 = vadd.f32 0.0, %v358
  %v360 = vpop.f32.mrf.mxu0
  %v361 = vadd.f32 0.0, %v360
  %362 = vmatprep.mubr.bf16.mxu0 0
  %363 = vmatmul.mubr.bf16.gmra.mxu0 %v292
  %v364 = vpop.f32.mrf.mxu0
  %v365 = vadd.f32 0.0, %v364
  %v366 = vpop.f32.mrf.mxu0
  %v367 = vadd.f32 0.0, %v366
  %v368 = vpop.f32.mrf.mxu0
  %v369 = vadd.f32 0.0, %v368
  %v370 = vpop.f32.mrf.mxu0
  %v371 = vadd.f32 0.0, %v370
  %372 = vdwg.mxu0
  %373 = vst [vmem:[#allocation2 + $0x10] sm:$0xff] %v335
  %374 = vst [vmem:[#allocation2 + $0x18] sm:$0xff] %v337
  %375 = vst [vmem:[#allocation2 + $0x30] sm:$0xff] %v339
  %376 = vst [vmem:[#allocation2 + $0x38] sm:$0xff] %v341
  %377 = vst [vmem:[#allocation2 + $0x50] sm:$0xff] %v345
  %378 = vst [vmem:[#allocation2 + $0x58] sm:$0xff] %v347
  %379 = vst [vmem:[#allocation2 + $0x70] sm:$0xff] %v349
  %380 = vst [vmem:[#allocation2 + $0x78] sm:$0xff] %v351
  %381 = vst [vmem:[#allocation2 + $0x90] sm:$0xff] %v355
  %382 = vst [vmem:[#allocation2 + $0x98] sm:$0xff] %v357
  %383 = vst [vmem:[#allocation2 + $0xb0] sm:$0xff] %v359
  %384 = vst [vmem:[#allocation2 + $0xb8] sm:$0xff] %v361
  %385 = vst [vmem:[#allocation2 + $0xd0] sm:$0xff] %v365
  %386 = vst [vmem:[#allocation2 + $0xd8] sm:$0xff] %v367
  %387 = vst [vmem:[#allocation2 + $0xf0] sm:$0xff] %v369
  %388 = vst [vmem:[#allocation2 + $0xf8] sm:$0xff] %v371
  %v389 = vld [vmem:[#allocation2] sm:$0xff]
  %v390 = vld [vmem:[#allocation2 + $0x8] sm:$0xff]
  %v391 = vld [vmem:[#allocation2 + $0x10] sm:$0xff]
  %v392 = vld [vmem:[#allocation2 + $0x18] sm:$0xff]
  %v393 = vld [vmem:[#allocation2 + $0x20] sm:$0xff]
  %v394 = vld [vmem:[#allocation2 + $0x28] sm:$0xff]
  %v395 = vld [vmem:[#allocation2 + $0x30] sm:$0xff]
  %v396 = vld [vmem:[#allocation2 + $0x38] sm:$0xff]
  %v397 = vld [vmem:[#allocation2 + $0x40] sm:$0xff]
  %v398 = vld [vmem:[#allocation2 + $0x48] sm:$0xff]
  %v399 = vld [vmem:[#allocation2 + $0x50] sm:$0xff]
  %v400 = vld [vmem:[#allocation2 + $0x58] sm:$0xff]
  %v401 = vld [vmem:[#allocation2 + $0x60] sm:$0xff]
  %v402 = vld [vmem:[#allocation2 + $0x68] sm:$0xff]
  %v403 = vld [vmem:[#allocation2 + $0x70] sm:$0xff]
  %v404 = vld [vmem:[#allocation2 + $0x78] sm:$0xff]
  %v405 = vld [vmem:[#allocation2 + $0x80] sm:$0xff]
  %v406 = vld [vmem:[#allocation2 + $0x88] sm:$0xff]
  %v407 = vld [vmem:[#allocation2 + $0x90] sm:$0xff]
  %v408 = vld [vmem:[#allocation2 + $0x98] sm:$0xff]
  %v409 = vld [vmem:[#allocation2 + $0xa0] sm:$0xff]
  %v410 = vld [vmem:[#allocation2 + $0xa8] sm:$0xff]
  %v411 = vld [vmem:[#allocation2 + $0xb0] sm:$0xff]
  %v412 = vld [vmem:[#allocation2 + $0xb8] sm:$0xff]
  %v413 = vld [vmem:[#allocation2 + $0xc0] sm:$0xff]
  %v414 = vld [vmem:[#allocation2 + $0xc8] sm:$0xff]
  %v415 = vld [vmem:[#allocation2 + $0xd0] sm:$0xff]
  %v416 = vld [vmem:[#allocation2 + $0xd8] sm:$0xff]
  %v417 = vld [vmem:[#allocation2 + $0xe0] sm:$0xff]
  %v418 = vld [vmem:[#allocation2 + $0xe8] sm:$0xff]
  %v419 = vld [vmem:[#allocation2 + $0xf0] sm:$0xff]
  %v420 = vld [vmem:[#allocation2 + $0xf8] sm:$0xff]
  %v421 = vpack.c.bf16 %v393, %v389
  %v422 = vpack.c.bf16 %v394, %v390
  %v423 = vpack.c.bf16 %v395, %v391
  %v424 = vpack.c.bf16 %v396, %v392
  %v425 = vpack.c.bf16 %v401, %v397
  %v426 = vpack.c.bf16 %v402, %v398
  %v427 = vpack.c.bf16 %v403, %v399
  %v428 = vpack.c.bf16 %v404, %v400
  %v429 = vpack.c.bf16 %v409, %v405
  %v430 = vpack.c.bf16 %v410, %v406
  %v431 = vpack.c.bf16 %v411, %v407
  %v432 = vpack.c.bf16 %v412, %v408
  %v433 = vpack.c.bf16 %v417, %v413
  %v434 = vpack.c.bf16 %v418, %v414
  %v435 = vpack.c.bf16 %v419, %v415
  %v436 = vpack.c.bf16 %v420, %v416
  %v437 = vld [vmem:[%s3] sm:$0xf]
  %v438 = vld [vmem:[%s3 + $0x4] sm:$0xf]
  %v439 = vld [vmem:[%s3 + $0x8] sm:$0xf]
  %v440 = vld [vmem:[%s3 + $0xc] sm:$0xf]
  %v441 = vld [vmem:[%s3 + $0x10] sm:$0xf]
  %v442 = vld [vmem:[%s3 + $0x14] sm:$0xf]
  %v443 = vld [vmem:[%s3 + $0x18] sm:$0xf]
  %v444 = vld [vmem:[%s3 + $0x1c] sm:$0xf]
  %v445 = vld [vmem:[%s3 + $0x20] sm:$0xf]
  %v446 = vld [vmem:[%s3 + $0x24] sm:$0xf]
  %v447 = vld [vmem:[%s3 + $0x28] sm:$0xf]
  %v448 = vld [vmem:[%s3 + $0x2c] sm:$0xf]
  %v449 = vld [vmem:[%s3 + $0x30] sm:$0xf]
  %v450 = vld [vmem:[%s3 + $0x34] sm:$0xf]
  %v451 = vld [vmem:[%s3 + $0x38] sm:$0xf]
  %v452 = vld [vmem:[%s3 + $0x3c] sm:$0xf]
  %v453 = vld [vmem:[%s3 + $0x40] sm:$0xf]
  %v454 = vld [vmem:[%s3 + $0x44] sm:$0xf]
  %v455 = vld [vmem:[%s3 + $0x48] sm:$0xf]
  %v456 = vld [vmem:[%s3 + $0x4c] sm:$0xf]
  %v457 = vld [vmem:[%s3 + $0x50] sm:$0xf]
  %v458 = vld [vmem:[%s3 + $0x54] sm:$0xf]
  %v459 = vld [vmem:[%s3 + $0x58] sm:$0xf]
  %v460 = vld [vmem:[%s3 + $0x5c] sm:$0xf]
  %v461 = vld [vmem:[%s3 + $0x60] sm:$0xf]
  %v462 = vld [vmem:[%s3 + $0x64] sm:$0xf]
  %v463 = vld [vmem:[%s3 + $0x68] sm:$0xf]
  %v464 = vld [vmem:[%s3 + $0x6c] sm:$0xf]
  %v465 = vld [vmem:[%s3 + $0x70] sm:$0xf]
  %v466 = vld [vmem:[%s3 + $0x74] sm:$0xf]
  %v467 = vld [vmem:[%s3 + $0x78] sm:$0xf]
  %v468 = vld [vmem:[%s3 + $0x7c] sm:$0xf]
  %v469 = vld [vmem:[%s3 + $0x80] sm:$0xf]
  %v470 = vld [vmem:[%s3 + $0x84] sm:$0xf]
  %v471 = vld [vmem:[%s3 + $0x88] sm:$0xf]
  %v472 = vld [vmem:[%s3 + $0x8c] sm:$0xf]
  %v473 = vld [vmem:[%s3 + $0x90] sm:$0xf]
  %v474 = vld [vmem:[%s3 + $0x94] sm:$0xf]
  %v475 = vld [vmem:[%s3 + $0x98] sm:$0xf]
  %v476 = vld [vmem:[%s3 + $0x9c] sm:$0xf]
  %v477 = vld [vmem:[%s3 + $0xa0] sm:$0xf]
  %v478 = vld [vmem:[%s3 + $0xa4] sm:$0xf]
  %v479 = vld [vmem:[%s3 + $0xa8] sm:$0xf]
  %v480 = vld [vmem:[%s3 + $0xac] sm:$0xf]
  %v481 = vld [vmem:[%s3 + $0xb0] sm:$0xf]
  %v482 = vld [vmem:[%s3 + $0xb4] sm:$0xf]
  %v483 = vld [vmem:[%s3 + $0xb8] sm:$0xf]
  %v484 = vld [vmem:[%s3 + $0xbc] sm:$0xf]
  %v485 = vld [vmem:[%s3 + $0xc0] sm:$0xf]
  %v486 = vld [vmem:[%s3 + $0xc4] sm:$0xf]
  %v487 = vld [vmem:[%s3 + $0xc8] sm:$0xf]
  %v488 = vld [vmem:[%s3 + $0xcc] sm:$0xf]
  %v489 = vld [vmem:[%s3 + $0xd0] sm:$0xf]
  %v490 = vld [vmem:[%s3 + $0xd4] sm:$0xf]
  %v491 = vld [vmem:[%s3 + $0xd8] sm:$0xf]
  %v492 = vld [vmem:[%s3 + $0xdc] sm:$0xf]
  %v493 = vld [vmem:[%s3 + $0xe0] sm:$0xf]
  %v494 = vld [vmem:[%s3 + $0xe4] sm:$0xf]
  %v495 = vld [vmem:[%s3 + $0xe8] sm:$0xf]
  %v496 = vld [vmem:[%s3 + $0xec] sm:$0xf]
  %v497 = vld [vmem:[%s3 + $0xf0] sm:$0xf]
  %v498 = vld [vmem:[%s3 + $0xf4] sm:$0xf]
  %v499 = vld [vmem:[%s3 + $0xf8] sm:$0xf]
  %v500 = vld [vmem:[%s3 + $0xfc] sm:$0xf]
  %v565 = vunpack.c.l.b16 %v437
  %v566 = vunpack.c.l.b16 %v438
  %v567 = vunpack.c.l.b16 %v439
  %v568 = vunpack.c.l.b16 %v440
  %v569 = vunpack.c.l.b16 %v441
  %v570 = vunpack.c.l.b16 %v442
  %v571 = vunpack.c.l.b16 %v443
  %v572 = vunpack.c.l.b16 %v444
  %v573 = vunpack.c.l.b16 %v445
  %v574 = vunpack.c.l.b16 %v446
  %v575 = vunpack.c.l.b16 %v447
  %v576 = vunpack.c.l.b16 %v448
  %v577 = vunpack.c.l.b16 %v449
  %v578 = vunpack.c.l.b16 %v450
  %v579 = vunpack.c.l.b16 %v451
  %v580 = vunpack.c.l.b16 %v452
  %v581 = vunpack.c.l.b16 %v453
  %v582 = vunpack.c.l.b16 %v454
  %v583 = vunpack.c.l.b16 %v455
  %v584 = vunpack.c.l.b16 %v456
  %v585 = vunpack.c.l.b16 %v457
  %v586 = vunpack.c.l.b16 %v458
  %v587 = vunpack.c.l.b16 %v459
  %v588 = vunpack.c.l.b16 %v460
  %v589 = vunpack.c.l.b16 %v461
  %v590 = vunpack.c.l.b16 %v462
  %v591 = vunpack.c.l.b16 %v463
  %v592 = vunpack.c.l.b16 %v464
  %v593 = vunpack.c.l.b16 %v465
  %v594 = vunpack.c.l.b16 %v466
  %v595 = vunpack.c.l.b16 %v467
  %v596 = vunpack.c.l.b16 %v468
  %v597 = vunpack.c.l.b16 %v469
  %v598 = vunpack.c.l.b16 %v470
  %v599 = vunpack.c.l.b16 %v471
  %v600 = vunpack.c.l.b16 %v472
  %v601 = vunpack.c.l.b16 %v473
  %v602 = vunpack.c.l.b16 %v474
  %v603 = vunpack.c.l.b16 %v475
  %v604 = vunpack.c.l.b16 %v476
  %v605 = vunpack.c.l.b16 %v477
  %v606 = vunpack.c.l.b16 %v478
  %v607 = vunpack.c.l.b16 %v479
  %v608 = vunpack.c.l.b16 %v480
  %v609 = vunpack.c.l.b16 %v481
  %v610 = vunpack.c.l.b16 %v482
  %v611 = vunpack.c.l.b16 %v483
  %v612 = vunpack.c.l.b16 %v484
  %v613 = vunpack.c.l.b16 %v485
  %v614 = vunpack.c.l.b16 %v486
  %v615 = vunpack.c.l.b16 %v487
  %v616 = vunpack.c.l.b16 %v488
  %v617 = vunpack.c.l.b16 %v489
  %v618 = vunpack.c.l.b16 %v490
  %v619 = vunpack.c.l.b16 %v491
  %v620 = vunpack.c.l.b16 %v492
  %v621 = vunpack.c.l.b16 %v493
  %v622 = vunpack.c.l.b16 %v494
  %v623 = vunpack.c.l.b16 %v495
  %v624 = vunpack.c.l.b16 %v496
  %v625 = vunpack.c.l.b16 %v497
  %v626 = vunpack.c.l.b16 %v498
  %v627 = vunpack.c.l.b16 %v499
  %v628 = vunpack.c.l.b16 %v500
  %v629 = vpack.c.b16 %v566, %v565
  %v630 = vpack.c.b16 %v568, %v567
  %v631 = vpack.c.b16 %v570, %v569
  %v632 = vpack.c.b16 %v572, %v571
  %v633 = vpack.c.b16 %v574, %v573
  %v634 = vpack.c.b16 %v576, %v575
  %v635 = vpack.c.b16 %v578, %v577
  %v636 = vpack.c.b16 %v580, %v579
  %v637 = vpack.c.b16 %v582, %v581
  %v638 = vpack.c.b16 %v584, %v583
  %v639 = vpack.c.b16 %v586, %v585
  %v640 = vpack.c.b16 %v588, %v587
  %v641 = vpack.c.b16 %v590, %v589
  %v642 = vpack.c.b16 %v592, %v591
  %v643 = vpack.c.b16 %v594, %v593
  %v644 = vpack.c.b16 %v596, %v595
  %v645 = vpack.c.b16 %v598, %v597
  %v646 = vpack.c.b16 %v600, %v599
  %v647 = vpack.c.b16 %v602, %v601
  %v648 = vpack.c.b16 %v604, %v603
  %v649 = vpack.c.b16 %v606, %v605
  %v650 = vpack.c.b16 %v608, %v607
  %v651 = vpack.c.b16 %v610, %v609
  %v652 = vpack.c.b16 %v612, %v611
  %v653 = vpack.c.b16 %v614, %v613
  %v654 = vpack.c.b16 %v616, %v615
  %v655 = vpack.c.b16 %v618, %v617
  %v656 = vpack.c.b16 %v620, %v619
  %v657 = vpack.c.b16 %v622, %v621
  %v658 = vpack.c.b16 %v624, %v623
  %v659 = vpack.c.b16 %v626, %v625
  %v660 = vpack.c.b16 %v628, %v627
  %693 = vmatprep.subr.bf16.mxu0 0
  %694 = vmatpush1.bf16.msra.mxu0 %v636
  %695 = vmatprep.subr.bf16.mxu0 0
  %696 = vmatpush1.bf16.msra.mxu0 %v635
  %697 = vmatprep.subr.bf16.mxu0 0
  %698 = vmatpush1.bf16.msra.mxu0 %v634
  %699 = vmatprep.subr.bf16.mxu0 0
  %700 = vmatpush1.bf16.msra.mxu0 %v633
  %701 = vmatprep.subr.bf16.mxu0 0
  %702 = vmatpush1.bf16.msra.mxu0 %v632
  %703 = vmatprep.subr.bf16.mxu0 0
  %704 = vmatpush1.bf16.msra.mxu0 %v631
  %705 = vmatprep.subr.bf16.mxu0 0
  %706 = vmatpush1.bf16.msra.mxu0 %v630
  %707 = vmatprep.subr.bf16.mxu0 0
  %708 = vmatpush1.bf16.msra.mxu0 %v629
  %709 = vmatprep.subr.bf16.mxu0 0
  %710 = vmatpush2.bf16.msra.mxu0 %v644
  %711 = vmatprep.subr.bf16.mxu0 0
  %712 = vmatpush2.bf16.msra.mxu0 %v643
  %713 = vmatprep.subr.bf16.mxu0 0
  %714 = vmatpush2.bf16.msra.mxu0 %v642
  %715 = vmatprep.subr.bf16.mxu0 0
  %716 = vmatpush2.bf16.msra.mxu0 %v641
  %717 = vmatprep.subr.bf16.mxu0 0
  %718 = vmatpush2.bf16.msra.mxu0 %v640
  %719 = vmatprep.subr.bf16.mxu0 0
  %720 = vmatpush2.bf16.msra.mxu0 %v639
  %721 = vmatprep.subr.bf16.mxu0 0
  %722 = vmatpush2.bf16.msra.mxu0 %v638
  %723 = vmatprep.subr.bf16.mxu0 0
  %724 = vmatpush2.bf16.msra.mxu0 %v637
  %725 = vmatprep.mubr.bf16.mxu0 %v422
  %726 = vmatmul.mubr.bf16.gmra.mxu0 %v421
  %v727 = vpop.f32.mrf.mxu0
  %v728 = vadd.f32 0.0, %v727
  %v729 = vpop.f32.mrf.mxu0
  %v730 = vpop.f32.mrf.mxu0
  %v731 = vadd.f32 0.0, %v730
  %v732 = vpop.f32.mrf.mxu0
  %733 = vmatprep.mubr.bf16.mxu0 %v426
  %734 = vmatmul.mubr.bf16.gmra.mxu0 %v425
  %v735 = vpop.f32.mrf.mxu0
  %v736 = vadd.f32 0.0, %v735
  %v737 = vpop.f32.mrf.mxu0
  %v738 = vpop.f32.mrf.mxu0
  %v739 = vadd.f32 0.0, %v738
  %v740 = vpop.f32.mrf.mxu0
  %741 = vmatprep.mubr.bf16.mxu0 %v430
  %742 = vmatmul.mubr.bf16.gmra.mxu0 %v429
  %v743 = vpop.f32.mrf.mxu0
  %v744 = vadd.f32 0.0, %v743
  %v745 = vpop.f32.mrf.mxu0
  %v746 = vpop.f32.mrf.mxu0
  %v747 = vadd.f32 0.0, %v746
  %v748 = vpop.f32.mrf.mxu0
  %749 = vmatprep.mubr.bf16.mxu0 %v434
  %750 = vmatmul.mubr.bf16.gmra.mxu0 %v433
  %v751 = vpop.f32.mrf.mxu0
  %v752 = vadd.f32 0.0, %v751
  %v753 = vpop.f32.mrf.mxu0
  %v754 = vpop.f32.mrf.mxu0
  %v755 = vadd.f32 0.0, %v754
  %v756 = vpop.f32.mrf.mxu0
  %757 = vdwg.mxu0
  %758 = vmatprep.subr.bf16.mxu0 0
  %759 = vmatpush1.bf16.msra.mxu0 %v652
  %760 = vmatprep.subr.bf16.mxu0 0
  %761 = vmatpush1.bf16.msra.mxu0 %v651
  %762 = vmatprep.subr.bf16.mxu0 0
  %763 = vmatpush1.bf16.msra.mxu0 %v650
  %764 = vmatprep.subr.bf16.mxu0 0
  %765 = vmatpush1.bf16.msra.mxu0 %v649
  %766 = vmatprep.subr.bf16.mxu0 0
  %767 = vmatpush1.bf16.msra.mxu0 %v648
  %768 = vmatprep.subr.bf16.mxu0 0
  %769 = vmatpush1.bf16.msra.mxu0 %v647
  %770 = vmatprep.subr.bf16.mxu0 0
  %771 = vmatpush1.bf16.msra.mxu0 %v646
  %772 = vmatprep.subr.bf16.mxu0 0
  %773 = vmatpush1.bf16.msra.mxu0 %v645
  %774 = vmatprep.subr.bf16.mxu0 0
  %775 = vmatpush2.bf16.msra.mxu0 %v660
  %776 = vmatprep.subr.bf16.mxu0 0
  %777 = vmatpush2.bf16.msra.mxu0 %v659
  %778 = vmatprep.subr.bf16.mxu0 0
  %779 = vmatpush2.bf16.msra.mxu0 %v658
  %780 = vmatprep.subr.bf16.mxu0 0
  %781 = vmatpush2.bf16.msra.mxu0 %v657
  %782 = vmatprep.subr.bf16.mxu0 0
  %783 = vmatpush2.bf16.msra.mxu0 %v656
  %784 = vmatprep.subr.bf16.mxu0 0
  %785 = vmatpush2.bf16.msra.mxu0 %v655
  %786 = vmatprep.subr.bf16.mxu0 0
  %787 = vmatpush2.bf16.msra.mxu0 %v654
  %788 = vmatprep.subr.bf16.mxu0 0
  %789 = vmatpush2.bf16.msra.mxu0 %v653
  %790 = vmatprep.mubr.bf16.mxu0 %v424
  %791 = vmatmul.mubr.bf16.gmra.mxu0 %v423
  %v792 = vpop.f32.mrf.mxu0
  %v793 = vadd.f32 %v728, %v792
  %v794 = vpop.f32.mrf.mxu0
  %v795 = vpop.f32.mrf.mxu0
  %v796 = vadd.f32 %v731, %v795
  %v797 = vpop.f32.mrf.mxu0
  %798 = vmatprep.mubr.bf16.mxu0 %v428
  %799 = vmatmul.mubr.bf16.gmra.mxu0 %v427
  %v800 = vpop.f32.mrf.mxu0
  %v801 = vadd.f32 %v736, %v800
  %v802 = vpop.f32.mrf.mxu0
  %v803 = vpop.f32.mrf.mxu0
  %v804 = vadd.f32 %v739, %v803
  %v805 = vpop.f32.mrf.mxu0
  %806 = vmatprep.mubr.bf16.mxu0 %v432
  %807 = vmatmul.mubr.bf16.gmra.mxu0 %v431
  %v808 = vpop.f32.mrf.mxu0
  %v809 = vadd.f32 %v744, %v808
  %v810 = vpop.f32.mrf.mxu0
  %v811 = vpop.f32.mrf.mxu0
  %v812 = vadd.f32 %v747, %v811
  %v813 = vpop.f32.mrf.mxu0
  %814 = vmatprep.mubr.bf16.mxu0 %v436
  %815 = vmatmul.mubr.bf16.gmra.mxu0 %v435
  %v816 = vpop.f32.mrf.mxu0
  %v817 = vadd.f32 %v752, %v816
  %v818 = vpop.f32.mrf.mxu0
  %v819 = vpop.f32.mrf.mxu0
  %v820 = vadd.f32 %v755, %v819
  %v821 = vpop.f32.mrf.mxu0
  %822 = vdwg.mxu0
  %v823 = vpack.c.bf16 %v796, %v793
  %v824 = vpack.c.bf16 %v804, %v801
  %v825 = vpack.c.bf16 %v812, %v809
  %v826 = vpack.c.bf16 %v820, %v817
  %828 = vset.pattern.permute.xlu0 3
  %829 = vperm.xlu0 %828, %v87
  %v830 = vpop.permute.xlu0 %829
  %833 = vset.pattern.permute.xlu0 3
  %834 = vperm.xlu0 %833, %v88
  %v835 = vpop.permute.xlu0 %834
  %838 = vset.pattern.permute.xlu0 3
  %839 = vperm.xlu0 %838, %v89
  %v840 = vpop.permute.xlu0 %839
  %843 = vset.pattern.permute.xlu0 3
  %844 = vperm.xlu0 %843, %v90
  %v845 = vpop.permute.xlu0 %844
  %848 = vset.pattern.permute.xlu0 3
  %849 = vperm.xlu0 %848, %v91
  %v850 = vpop.permute.xlu0 %849
  %853 = vset.pattern.permute.xlu0 3
  %854 = vperm.xlu0 %853, %v92
  %v855 = vpop.permute.xlu0 %854
  %858 = vset.pattern.permute.xlu0 3
  %859 = vperm.xlu0 %858, %v93
  %v860 = vpop.permute.xlu0 %859
  %863 = vset.pattern.permute.xlu0 3
  %864 = vperm.xlu0 %863, %v94
  %v865 = vpop.permute.xlu0 %864
  %v875 = vunpack.c.l.b16 %v39
  %v876 = vunpack.c.l.b16 %v40
  %v877 = vunpack.c.l.b16 %v41
  %v878 = vunpack.c.l.b16 %v42
  %v879 = vunpack.c.l.b16 %v43
  %v880 = vunpack.c.l.b16 %v44
  %v881 = vunpack.c.l.b16 %v45
  %v882 = vunpack.c.l.b16 %v46
  %v883 = vpack.c.b16 %v876, %v875
  %v884 = vpack.c.b16 %v878, %v877
  %v885 = vpack.c.b16 %v880, %v879
  %v886 = vpack.c.b16 %v882, %v881
  %891 = vxpose.xlu0.c.b16.start [1/8] %v883, 128
  %892 = vxpose.xlu0.c.b16.cont [2/8] %v884, 128
  %893 = vxpose.xlu0.c.b16.cont [3/8] %v885, 128
  %894 = vxpose.xlu0.c.b16.cont [4/8] %v886, 128
  %895 = vxpose.xlu0.c.b16.cont [5/8] 0, 128
  %896 = vxpose.xlu0.c.b16.cont [6/8] 0, 128
  %897 = vxpose.xlu0.c.b16.cont [7/8] 0, 128
  %898 = vxpose.xlu0.c.b16.end [8/8] 0, 128
  %v899 = vpop.trf.xlu0
  %v900 = vpop.trf.xlu0
  %v901 = vpop.trf.xlu0
  %v902 = vpop.trf.xlu0
  %v903 = vpop.trf.xlu0
  %v904 = vpop.trf.xlu0
  %v905 = vpop.trf.xlu0
  %v906 = vpop.trf.xlu0
  %vm907 = vcmask 523264
  %v909 = vsel %vm907, %v899, 0
  %v912 = vsel %vm907, %v900, 0
  %v915 = vsel %vm907, %v901, 0
  %v918 = vsel %vm907, %v902, 0
  %920 = vmatprep.subr.bf16.mxu0 0
  %921 = vmatpush1.bf16.msra.mxu0 0
  %922 = vmatprep.subr.bf16.mxu0 0
  %923 = vmatpush1.bf16.msra.mxu0 0
  %924 = vmatprep.subr.bf16.mxu0 0
  %925 = vmatpush1.bf16.msra.mxu0 0
  %926 = vmatprep.subr.bf16.mxu0 0
  %927 = vmatpush1.bf16.msra.mxu0 0
  %928 = vmatprep.subr.bf16.mxu0 0
  %929 = vmatpush1.bf16.msra.mxu0 %v826
  %930 = vmatprep.subr.bf16.mxu0 0
  %931 = vmatpush1.bf16.msra.mxu0 %v825
  %932 = vmatprep.subr.bf16.mxu0 0
  %933 = vmatpush1.bf16.msra.mxu0 %v824
  %934 = vmatprep.subr.bf16.mxu0 0
  %935 = vmatpush1.bf16.msra.mxu0 %v823
  %936 = vmatprep.subr.bf16.mxu0 0
  %937 = vmatpush2.bf16.msra.mxu0 0
  %938 = vmatprep.subr.bf16.mxu0 0
  %939 = vmatpush2.bf16.msra.mxu0 0
  %940 = vmatprep.subr.bf16.mxu0 0
  %941 = vmatpush2.bf16.msra.mxu0 0
  %942 = vmatprep.subr.bf16.mxu0 0
  %943 = vmatpush2.bf16.msra.mxu0 0
  %944 = vmatprep.subr.bf16.mxu0 0
  %945 = vmatpush2.bf16.msra.mxu0 0
  %946 = vmatprep.subr.bf16.mxu0 0
  %947 = vmatpush2.bf16.msra.mxu0 0
  %948 = vmatprep.subr.bf16.mxu0 0
  %949 = vmatpush2.bf16.msra.mxu0 0
  %950 = vmatprep.subr.bf16.mxu0 0
  %951 = vmatpush2.bf16.msra.mxu0 0
  %952 = vmatprep.mubr.bf16.mxu0 0
  %953 = vmatmul.mubr.bf16.gmra.mxu0 %v909
  %v954 = vpop.f32.mrf.mxu0
  %v955 = vadd.f32 %v830, %v954
  %v956 = vpop.f32.mrf.mxu0
  %v957 = vpop.f32.mrf.mxu0
  %v958 = vadd.f32 %v835, %v957
  %v959 = vpop.f32.mrf.mxu0
  %960 = vmatprep.mubr.bf16.mxu0 0
  %961 = vmatmul.mubr.bf16.gmra.mxu0 %v912
  %v962 = vpop.f32.mrf.mxu0
  %v963 = vadd.f32 %v840, %v962
  %v964 = vpop.f32.mrf.mxu0
  %v965 = vpop.f32.mrf.mxu0
  %v966 = vadd.f32 %v845, %v965
  %v967 = vpop.f32.mrf.mxu0
  %968 = vmatprep.mubr.bf16.mxu0 0
  %969 = vmatmul.mubr.bf16.gmra.mxu0 %v915
  %v970 = vpop.f32.mrf.mxu0
  %v971 = vadd.f32 %v850, %v970
  %v972 = vpop.f32.mrf.mxu0
  %v973 = vpop.f32.mrf.mxu0
  %v974 = vadd.f32 %v855, %v973
  %v975 = vpop.f32.mrf.mxu0
  %976 = vmatprep.mubr.bf16.mxu0 0
  %977 = vmatmul.mubr.bf16.gmra.mxu0 %v918
  %v978 = vpop.f32.mrf.mxu0
  %v979 = vadd.f32 %v860, %v978
  %v980 = vpop.f32.mrf.mxu0
  %v981 = vpop.f32.mrf.mxu0
  %v982 = vadd.f32 %v865, %v981
  %v983 = vpop.f32.mrf.mxu0
  %984 = vdwg.mxu0
  %v985 = vmax.f32 %v955, 0.0
  %v986 = vmax.f32 %v958, 0.0
  %v987 = vmax.f32 %v963, 0.0
  %v988 = vmax.f32 %v966, 0.0
  %v989 = vmax.f32 %v971, 0.0
  %v990 = vmax.f32 %v974, 0.0
  %v991 = vmax.f32 %v979, 0.0
  %v992 = vmax.f32 %v982, 0.0
  %v993 = vpack.c.bf16 %v986, %v985
  %v994 = vpack.c.bf16 %v988, %v987
  %v995 = vpack.c.bf16 %v990, %v989
  %v996 = vpack.c.bf16 %v992, %v991
  %997 = vset.pattern.permute.xlu0 4
  %998 = vperm.xlu0 %997, %v87
  %v999 = vpop.permute.xlu0 %998
  %1001 = vset.pattern.permute.xlu0 4
  %1002 = vperm.xlu0 %1001, %v88
  %v1003 = vpop.permute.xlu0 %1002
  %1005 = vset.pattern.permute.xlu0 4
  %1006 = vperm.xlu0 %1005, %v89
  %v1007 = vpop.permute.xlu0 %1006
  %1009 = vset.pattern.permute.xlu0 4
  %1010 = vperm.xlu0 %1009, %v90
  %v1011 = vpop.permute.xlu0 %1010
  %1013 = vset.pattern.permute.xlu0 4
  %1014 = vperm.xlu0 %1013, %v91
  %v1015 = vpop.permute.xlu0 %1014
  %1017 = vset.pattern.permute.xlu0 4
  %1018 = vperm.xlu0 %1017, %v92
  %v1019 = vpop.permute.xlu0 %1018
  %1021 = vset.pattern.permute.xlu0 4
  %1022 = vperm.xlu0 %1021, %v93
  %v1023 = vpop.permute.xlu0 %1022
  %1025 = vset.pattern.permute.xlu0 4
  %1026 = vperm.xlu0 %1025, %v94
  %v1027 = vpop.permute.xlu0 %1026
  %v1037 = vunpack.c.l.b16 %v47
  %v1038 = vunpack.c.l.b16 %v48
  %v1039 = vunpack.c.l.b16 %v49
  %v1040 = vunpack.c.l.b16 %v50
  %v1041 = vunpack.c.l.b16 %v51
  %v1042 = vunpack.c.l.b16 %v52
  %v1043 = vunpack.c.l.b16 %v53
  %v1044 = vunpack.c.l.b16 %v54
  %v1045 = vpack.c.b16 %v1038, %v1037
  %v1046 = vpack.c.b16 %v1040, %v1039
  %v1047 = vpack.c.b16 %v1042, %v1041
  %v1048 = vpack.c.b16 %v1044, %v1043
  %1053 = vxpose.xlu0.c.b16.start [1/8] %v1045, 128
  %1054 = vxpose.xlu0.c.b16.cont [2/8] %v1046, 128
  %1055 = vxpose.xlu0.c.b16.cont [3/8] %v1047, 128
  %1056 = vxpose.xlu0.c.b16.cont [4/8] %v1048, 128
  %1057 = vxpose.xlu0.c.b16.cont [5/8] 0, 128
  %1058 = vxpose.xlu0.c.b16.cont [6/8] 0, 128
  %1059 = vxpose.xlu0.c.b16.cont [7/8] 0, 128
  %1060 = vxpose.xlu0.c.b16.end [8/8] 0, 128
  %v1061 = vpop.trf.xlu0
  %v1062 = vpop.trf.xlu0
  %v1063 = vpop.trf.xlu0
  %v1064 = vpop.trf.xlu0
  %v1065 = vpop.trf.xlu0
  %v1066 = vpop.trf.xlu0
  %v1067 = vpop.trf.xlu0
  %v1068 = vpop.trf.xlu0
  %v1070 = vsel %vm907, %v1061, 0
  %v1073 = vsel %vm907, %v1062, 0
  %v1076 = vsel %vm907, %v1063, 0
  %v1079 = vsel %vm907, %v1064, 0
  %1081 = vmatprep.subr.bf16.mxu0 0
  %1082 = vmatpush1.bf16.msra.mxu0 0
  %1083 = vmatprep.subr.bf16.mxu0 0
  %1084 = vmatpush1.bf16.msra.mxu0 0
  %1085 = vmatprep.subr.bf16.mxu0 0
  %1086 = vmatpush1.bf16.msra.mxu0 0
  %1087 = vmatprep.subr.bf16.mxu0 0
  %1088 = vmatpush1.bf16.msra.mxu0 0
  %1089 = vmatprep.subr.bf16.mxu0 0
  %1090 = vmatpush1.bf16.msra.mxu0 %v996
  %1091 = vmatprep.subr.bf16.mxu0 0
  %1092 = vmatpush1.bf16.msra.mxu0 %v995
  %1093 = vmatprep.subr.bf16.mxu0 0
  %1094 = vmatpush1.bf16.msra.mxu0 %v994
  %1095 = vmatprep.subr.bf16.mxu0 0
  %1096 = vmatpush1.bf16.msra.mxu0 %v993
  %1097 = vmatprep.subr.bf16.mxu0 0
  %1098 = vmatpush2.bf16.msra.mxu0 0
  %1099 = vmatprep.subr.bf16.mxu0 0
  %1100 = vmatpush2.bf16.msra.mxu0 0
  %1101 = vmatprep.subr.bf16.mxu0 0
  %1102 = vmatpush2.bf16.msra.mxu0 0
  %1103 = vmatprep.subr.bf16.mxu0 0
  %1104 = vmatpush2.bf16.msra.mxu0 0
  %1105 = vmatprep.subr.bf16.mxu0 0
  %1106 = vmatpush2.bf16.msra.mxu0 0
  %1107 = vmatprep.subr.bf16.mxu0 0
  %1108 = vmatpush2.bf16.msra.mxu0 0
  %1109 = vmatprep.subr.bf16.mxu0 0
  %1110 = vmatpush2.bf16.msra.mxu0 0
  %1111 = vmatprep.subr.bf16.mxu0 0
  %1112 = vmatpush2.bf16.msra.mxu0 0
  %1113 = vmatprep.mubr.bf16.mxu0 0
  %1114 = vmatmul.mubr.bf16.gmra.mxu0 %v1070
  %v1115 = vpop.f32.mrf.mxu0
  %v1116 = vadd.f32 %v999, %v1115
  %v1117 = vpop.f32.mrf.mxu0
  %v1118 = vpop.f32.mrf.mxu0
  %v1119 = vadd.f32 %v1003, %v1118
  %v1120 = vpop.f32.mrf.mxu0
  %1121 = vmatprep.mubr.bf16.mxu0 0
  %1122 = vmatmul.mubr.bf16.gmra.mxu0 %v1073
  %v1123 = vpop.f32.mrf.mxu0
  %v1124 = vadd.f32 %v1007, %v1123
  %v1125 = vpop.f32.mrf.mxu0
  %v1126 = vpop.f32.mrf.mxu0
  %v1127 = vadd.f32 %v1011, %v1126
  %v1128 = vpop.f32.mrf.mxu0
  %1129 = vmatprep.mubr.bf16.mxu0 0
  %1130 = vmatmul.mubr.bf16.gmra.mxu0 %v1076
  %v1131 = vpop.f32.mrf.mxu0
  %v1132 = vadd.f32 %v1015, %v1131
  %v1133 = vpop.f32.mrf.mxu0
  %v1134 = vpop.f32.mrf.mxu0
  %v1135 = vadd.f32 %v1019, %v1134
  %v1136 = vpop.f32.mrf.mxu0
  %1137 = vmatprep.mubr.bf16.mxu0 0
  %1138 = vmatmul.mubr.bf16.gmra.mxu0 %v1079
  %v1139 = vpop.f32.mrf.mxu0
  %v1140 = vadd.f32 %v1023, %v1139
  %v1141 = vpop.f32.mrf.mxu0
  %v1142 = vpop.f32.mrf.mxu0
  %v1143 = vadd.f32 %v1027, %v1142
  %v1144 = vpop.f32.mrf.mxu0
  %1145 = vdwg.mxu0
  %v1146 = vsub.f32 0.0, %v1116
  %v1147 = vsub.f32 0.0, %v1119
  %v1148 = vsub.f32 0.0, %v1124
  %v1149 = vsub.f32 0.0, %v1127
  %v1150 = vsub.f32 0.0, %v1132
  %v1151 = vsub.f32 0.0, %v1135
  %v1152 = vsub.f32 0.0, %v1140
  %v1153 = vsub.f32 0.0, %v1143
  %v1154 = vmul.f32 %v1146, 1.442695
  %v1155 = vpow.pop %v1154
  %v1156 = vmul.f32 %v1147, 1.442695
  %v1157 = vpow.pop %v1156
  %v1158 = vmul.f32 %v1148, 1.442695
  %v1159 = vpow.pop %v1158
  %v1160 = vmul.f32 %v1149, 1.442695
  %v1161 = vpow.pop %v1160
  %v1162 = vmul.f32 %v1150, 1.442695
  %v1163 = vpow.pop %v1162
  %v1164 = vmul.f32 %v1151, 1.442695
  %v1165 = vpow.pop %v1164
  %v1166 = vmul.f32 %v1152, 1.442695
  %v1167 = vpow.pop %v1166
  %v1168 = vmul.f32 %v1153, 1.442695
  %v1169 = vpow.pop %v1168
  %v1170 = vadd.f32 %v1155, 1.0
  %v1171 = vadd.f32 %v1157, 1.0
  %v1172 = vadd.f32 %v1159, 1.0
  %v1173 = vadd.f32 %v1161, 1.0
  %v1174 = vadd.f32 %v1163, 1.0
  %v1175 = vadd.f32 %v1165, 1.0
  %v1176 = vadd.f32 %v1167, 1.0
  %v1177 = vadd.f32 %v1169, 1.0
  %v1178 = vrcp.pop %v1170
  %v1179 = vrcp.pop %v1171
  %v1180 = vrcp.pop %v1172
  %v1181 = vrcp.pop %v1173
  %v1182 = vrcp.pop %v1174
  %v1183 = vrcp.pop %v1175
  %v1184 = vrcp.pop %v1176
  %v1185 = vrcp.pop %v1177
  %v1186 = vpack.c.bf16 %v1179, %v1178
  %v1187 = vpack.c.bf16 %v1181, %v1180
  %v1188 = vpack.c.bf16 %v1183, %v1182
  %v1189 = vpack.c.bf16 %v1185, %v1184
  %v1190 = vld [vmem:[%s4] sm:$0xff]
  %v1191 = vld [vmem:[%s4 + $0x8] sm:$0xff]
  %v1192 = vld [vmem:[%s4 + $0x10] sm:$0xff]
  %v1193 = vld [vmem:[%s4 + $0x18] sm:$0xff]
  %v1194 = vld [vmem:[%s4 + $0x20] sm:$0xff]
  %v1195 = vld [vmem:[%s4 + $0x28] sm:$0xff]
  %v1196 = vld [vmem:[%s4 + $0x30] sm:$0xff]
  %v1197 = vld [vmem:[%s4 + $0x38] sm:$0xff]
  %v1198 = vld [vmem:[%s4 + $0x40] sm:$0xff]
  %v1199 = vld [vmem:[%s4 + $0x48] sm:$0xff]
  %v1200 = vld [vmem:[%s4 + $0x50] sm:$0xff]
  %v1201 = vld [vmem:[%s4 + $0x58] sm:$0xff]
  %v1202 = vld [vmem:[%s4 + $0x60] sm:$0xff]
  %v1203 = vld [vmem:[%s4 + $0x68] sm:$0xff]
  %v1204 = vld [vmem:[%s4 + $0x70] sm:$0xff]
  %v1205 = vld [vmem:[%s4 + $0x78] sm:$0xff]
  %v1206 = vld [vmem:[%s4 + $0x80] sm:$0xff]
  %v1207 = vld [vmem:[%s4 + $0x88] sm:$0xff]
  %v1208 = vld [vmem:[%s4 + $0x90] sm:$0xff]
  %v1209 = vld [vmem:[%s4 + $0x98] sm:$0xff]
  %v1210 = vld [vmem:[%s4 + $0xa0] sm:$0xff]
  %v1211 = vld [vmem:[%s4 + $0xa8] sm:$0xff]
  %v1212 = vld [vmem:[%s4 + $0xb0] sm:$0xff]
  %v1213 = vld [vmem:[%s4 + $0xb8] sm:$0xff]
  %v1214 = vld [vmem:[%s4 + $0xc0] sm:$0xff]
  %v1215 = vld [vmem:[%s4 + $0xc8] sm:$0xff]
  %v1216 = vld [vmem:[%s4 + $0xd0] sm:$0xff]
  %v1217 = vld [vmem:[%s4 + $0xd8] sm:$0xff]
  %v1218 = vld [vmem:[%s4 + $0xe0] sm:$0xff]
  %v1219 = vld [vmem:[%s4 + $0xe8] sm:$0xff]
  %v1220 = vld [vmem:[%s4 + $0xf0] sm:$0xff]
  %v1221 = vld [vmem:[%s4 + $0xf8] sm:$0xff]
  %v1254 = vunpack.c.l.b16 %v1190
  %v1255 = vunpack.c.h.b16 %v1190
  %v1256 = vunpack.c.l.b16 %v1191
  %v1257 = vunpack.c.h.b16 %v1191
  %v1258 = vunpack.c.l.b16 %v1192
  %v1259 = vunpack.c.h.b16 %v1192
  %v1260 = vunpack.c.l.b16 %v1193
  %v1261 = vunpack.c.h.b16 %v1193
  %v1262 = vunpack.c.l.b16 %v1194
  %v1263 = vunpack.c.h.b16 %v1194
  %v1264 = vunpack.c.l.b16 %v1195
  %v1265 = vunpack.c.h.b16 %v1195
  %v1266 = vunpack.c.l.b16 %v1196
  %v1267 = vunpack.c.h.b16 %v1196
  %v1268 = vunpack.c.l.b16 %v1197
  %v1269 = vunpack.c.h.b16 %v1197
  %v1270 = vunpack.c.l.b16 %v1198
  %v1271 = vunpack.c.h.b16 %v1198
  %v1272 = vunpack.c.l.b16 %v1199
  %v1273 = vunpack.c.h.b16 %v1199
  %v1274 = vunpack.c.l.b16 %v1200
  %v1275 = vunpack.c.h.b16 %v1200
  %v1276 = vunpack.c.l.b16 %v1201
  %v1277 = vunpack.c.h.b16 %v1201
  %v1278 = vunpack.c.l.b16 %v1202
  %v1279 = vunpack.c.h.b16 %v1202
  %v1280 = vunpack.c.l.b16 %v1203
  %v1281 = vunpack.c.h.b16 %v1203
  %v1282 = vunpack.c.l.b16 %v1204
  %v1283 = vunpack.c.h.b16 %v1204
  %v1284 = vunpack.c.l.b16 %v1205
  %v1285 = vunpack.c.h.b16 %v1205
  %v1286 = vunpack.c.l.b16 %v1206
  %v1287 = vunpack.c.h.b16 %v1206
  %v1288 = vunpack.c.l.b16 %v1207
  %v1289 = vunpack.c.h.b16 %v1207
  %v1290 = vunpack.c.l.b16 %v1208
  %v1291 = vunpack.c.h.b16 %v1208
  %v1292 = vunpack.c.l.b16 %v1209
  %v1293 = vunpack.c.h.b16 %v1209
  %v1294 = vunpack.c.l.b16 %v1210
  %v1295 = vunpack.c.h.b16 %v1210
  %v1296 = vunpack.c.l.b16 %v1211
  %v1297 = vunpack.c.h.b16 %v1211
  %v1298 = vunpack.c.l.b16 %v1212
  %v1299 = vunpack.c.h.b16 %v1212
  %v1300 = vunpack.c.l.b16 %v1213
  %v1301 = vunpack.c.h.b16 %v1213
  %v1302 = vunpack.c.l.b16 %v1214
  %v1303 = vunpack.c.h.b16 %v1214
  %v1304 = vunpack.c.l.b16 %v1215
  %v1305 = vunpack.c.h.b16 %v1215
  %v1306 = vunpack.c.l.b16 %v1216
  %v1307 = vunpack.c.h.b16 %v1216
  %v1308 = vunpack.c.l.b16 %v1217
  %v1309 = vunpack.c.h.b16 %v1217
  %v1310 = vunpack.c.l.b16 %v1218
  %v1311 = vunpack.c.h.b16 %v1218
  %v1312 = vunpack.c.l.b16 %v1219
  %v1313 = vunpack.c.h.b16 %v1219
  %v1314 = vunpack.c.l.b16 %v1220
  %v1315 = vunpack.c.h.b16 %v1220
  %v1316 = vunpack.c.l.b16 %v1221
  %v1317 = vunpack.c.h.b16 %v1221
  %v1318 = vpack.c.b16 %v1258, %v1254
  %v1319 = vpack.c.b16 %v1259, %v1255
  %v1320 = vpack.c.b16 %v1260, %v1256
  %v1321 = vpack.c.b16 %v1261, %v1257
  %v1322 = vpack.c.b16 %v1266, %v1262
  %v1323 = vpack.c.b16 %v1267, %v1263
  %v1324 = vpack.c.b16 %v1268, %v1264
  %v1325 = vpack.c.b16 %v1269, %v1265
  %v1326 = vpack.c.b16 %v1274, %v1270
  %v1327 = vpack.c.b16 %v1275, %v1271
  %v1328 = vpack.c.b16 %v1276, %v1272
  %v1329 = vpack.c.b16 %v1277, %v1273
  %v1330 = vpack.c.b16 %v1282, %v1278
  %v1331 = vpack.c.b16 %v1283, %v1279
  %v1332 = vpack.c.b16 %v1284, %v1280
  %v1333 = vpack.c.b16 %v1285, %v1281
  %v1334 = vpack.c.b16 %v1290, %v1286
  %v1335 = vpack.c.b16 %v1291, %v1287
  %v1336 = vpack.c.b16 %v1292, %v1288
  %v1337 = vpack.c.b16 %v1293, %v1289
  %v1338 = vpack.c.b16 %v1298, %v1294
  %v1339 = vpack.c.b16 %v1299, %v1295
  %v1340 = vpack.c.b16 %v1300, %v1296
  %v1341 = vpack.c.b16 %v1301, %v1297
  %v1342 = vpack.c.b16 %v1306, %v1302
  %v1343 = vpack.c.b16 %v1307, %v1303
  %v1344 = vpack.c.b16 %v1308, %v1304
  %v1345 = vpack.c.b16 %v1309, %v1305
  %v1346 = vpack.c.b16 %v1314, %v1310
  %v1347 = vpack.c.b16 %v1315, %v1311
  %v1348 = vpack.c.b16 %v1316, %v1312
  %v1349 = vpack.c.b16 %v1317, %v1313
  %1382 = vmatprep.subr.bf16.mxu0 %v1347
  %1383 = vmatpush1.bf16.msra.mxu0 %v1346
  %1384 = vmatprep.subr.bf16.mxu0 %v1343
  %1385 = vmatpush1.bf16.msra.mxu0 %v1342
  %1386 = vmatprep.subr.bf16.mxu0 %v1339
  %1387 = vmatpush1.bf16.msra.mxu0 %v1338
  %1388 = vmatprep.subr.bf16.mxu0 %v1335
  %1389 = vmatpush1.bf16.msra.mxu0 %v1334
  %1390 = vmatprep.subr.bf16.mxu0 %v1331
  %1391 = vmatpush1.bf16.msra.mxu0 %v1330
  %1392 = vmatprep.subr.bf16.mxu0 %v1327
  %1393 = vmatpush1.bf16.msra.mxu0 %v1326
  %1394 = vmatprep.subr.bf16.mxu0 %v1323
  %1395 = vmatpush1.bf16.msra.mxu0 %v1322
  %1396 = vmatprep.subr.bf16.mxu0 %v1319
  %1397 = vmatpush1.bf16.msra.mxu0 %v1318
  %1398 = vmatprep.subr.bf16.mxu0 0
  %1399 = vmatpush2.bf16.msra.mxu0 0
  %1400 = vmatprep.subr.bf16.mxu0 0
  %1401 = vmatpush2.bf16.msra.mxu0 0
  %1402 = vmatprep.subr.bf16.mxu0 0
  %1403 = vmatpush2.bf16.msra.mxu0 0
  %1404 = vmatprep.subr.bf16.mxu0 0
  %1405 = vmatpush2.bf16.msra.mxu0 0
  %1406 = vmatprep.subr.bf16.mxu0 0
  %1407 = vmatpush2.bf16.msra.mxu0 0
  %1408 = vmatprep.subr.bf16.mxu0 0
  %1409 = vmatpush2.bf16.msra.mxu0 0
  %1410 = vmatprep.subr.bf16.mxu0 0
  %1411 = vmatpush2.bf16.msra.mxu0 0
  %1412 = vmatprep.subr.bf16.mxu0 0
  %1413 = vmatpush2.bf16.msra.mxu0 0
  %1414 = vmatprep.mubr.bf16.mxu0 0
  %1415 = vmatmul.mubr.bf16.gmra.mxu0 %v1186
  %v1416 = vpop.f32.mrf.mxu0
  %v1417 = vadd.f32 0.0, %v1416
  %v1418 = vpop.f32.mrf.mxu0
  %v1419 = vadd.f32 0.0, %v1418
  %v1420 = vpop.f32.mrf.mxu0
  %v1421 = vadd.f32 0.0, %v1420
  %v1422 = vpop.f32.mrf.mxu0
  %v1423 = vadd.f32 0.0, %v1422
  %1424 = vmatprep.mubr.bf16.mxu0 0
  %1425 = vmatmul.mubr.bf16.gmra.mxu0 %v1187
  %v1426 = vpop.f32.mrf.mxu0
  %v1427 = vadd.f32 0.0, %v1426
  %v1428 = vpop.f32.mrf.mxu0
  %v1429 = vadd.f32 0.0, %v1428
  %v1430 = vpop.f32.mrf.mxu0
  %v1431 = vadd.f32 0.0, %v1430
  %v1432 = vpop.f32.mrf.mxu0
  %v1433 = vadd.f32 0.0, %v1432
  %1434 = vmatprep.mubr.bf16.mxu0 0
  %1435 = vmatmul.mubr.bf16.gmra.mxu0 %v1188
  %v1436 = vpop.f32.mrf.mxu0
  %v1437 = vadd.f32 0.0, %v1436
  %v1438 = vpop.f32.mrf.mxu0
  %v1439 = vadd.f32 0.0, %v1438
  %v1440 = vpop.f32.mrf.mxu0
  %v1441 = vadd.f32 0.0, %v1440
  %v1442 = vpop.f32.mrf.mxu0
  %v1443 = vadd.f32 0.0, %v1442
  %1444 = vmatprep.mubr.bf16.mxu0 0
  %1445 = vmatmul.mubr.bf16.gmra.mxu0 %v1189
  %v1446 = vpop.f32.mrf.mxu0
  %v1447 = vadd.f32 0.0, %v1446
  %v1448 = vpop.f32.mrf.mxu0
  %v1449 = vadd.f32 0.0, %v1448
  %v1450 = vpop.f32.mrf.mxu0
  %v1451 = vadd.f32 0.0, %v1450
  %v1452 = vpop.f32.mrf.mxu0
  %v1453 = vadd.f32 0.0, %v1452
  %1454 = vdwg.mxu0
  %1455 = vmatprep.subr.bf16.mxu0 %v1349
  %1456 = vmatpush1.bf16.msra.mxu0 %v1348
  %1457 = vmatprep.subr.bf16.mxu0 %v1345
  %1458 = vmatpush1.bf16.msra.mxu0 %v1344
  %1459 = vmatprep.subr.bf16.mxu0 %v1341
  %1460 = vmatpush1.bf16.msra.mxu0 %v1340
  %1461 = vmatprep.subr.bf16.mxu0 %v1337
  %1462 = vmatpush1.bf16.msra.mxu0 %v1336
  %1463 = vmatprep.subr.bf16.mxu0 %v1333
  %1464 = vmatpush1.bf16.msra.mxu0 %v1332
  %1465 = vmatprep.subr.bf16.mxu0 %v1329
  %1466 = vmatpush1.bf16.msra.mxu0 %v1328
  %1467 = vmatprep.subr.bf16.mxu0 %v1325
  %1468 = vmatpush1.bf16.msra.mxu0 %v1324
  %1469 = vmatprep.subr.bf16.mxu0 %v1321
  %1470 = vmatpush1.bf16.msra.mxu0 %v1320
  %1471 = vmatprep.subr.bf16.mxu0 0
  %1472 = vmatpush2.bf16.msra.mxu0 0
  %1473 = vmatprep.subr.bf16.mxu0 0
  %1474 = vmatpush2.bf16.msra.mxu0 0
  %1475 = vmatprep.subr.bf16.mxu0 0
  %1476 = vmatpush2.bf16.msra.mxu0 0
  %1477 = vmatprep.subr.bf16.mxu0 0
  %1478 = vmatpush2.bf16.msra.mxu0 0
  %1479 = vmatprep.subr.bf16.mxu0 0
  %1480 = vmatpush2.bf16.msra.mxu0 0
  %1481 = vmatprep.subr.bf16.mxu0 0
  %1482 = vmatpush2.bf16.msra.mxu0 0
  %1483 = vmatprep.subr.bf16.mxu0 0
  %1484 = vmatpush2.bf16.msra.mxu0 0
  %1485 = vmatprep.subr.bf16.mxu0 0
  %1486 = vmatpush2.bf16.msra.mxu0 0
  %1487 = vmatprep.mubr.bf16.mxu0 0
  %1488 = vmatmul.mubr.bf16.gmra.mxu0 %v1186
  %v1489 = vpop.f32.mrf.mxu0
  %v1490 = vadd.f32 0.0, %v1489
  %v1491 = vpop.f32.mrf.mxu0
  %v1492 = vadd.f32 0.0, %v1491
  %v1493 = vpop.f32.mrf.mxu0
  %v1494 = vadd.f32 0.0, %v1493
  %v1495 = vpop.f32.mrf.mxu0
  %v1496 = vadd.f32 0.0, %v1495
  %1497 = vmatprep.mubr.bf16.mxu0 0
  %1498 = vmatmul.mubr.bf16.gmra.mxu0 %v1187
  %v1499 = vpop.f32.mrf.mxu0
  %v1500 = vadd.f32 0.0, %v1499
  %v1501 = vpop.f32.mrf.mxu0
  %v1502 = vadd.f32 0.0, %v1501
  %v1503 = vpop.f32.mrf.mxu0
  %v1504 = vadd.f32 0.0, %v1503
  %v1505 = vpop.f32.mrf.mxu0
  %v1506 = vadd.f32 0.0, %v1505
  %1507 = vmatprep.mubr.bf16.mxu0 0
  %1508 = vmatmul.mubr.bf16.gmra.mxu0 %v1188
  %v1509 = vpop.f32.mrf.mxu0
  %v1510 = vadd.f32 0.0, %v1509
  %v1511 = vpop.f32.mrf.mxu0
  %v1512 = vadd.f32 0.0, %v1511
  %v1513 = vpop.f32.mrf.mxu0
  %v1514 = vadd.f32 0.0, %v1513
  %v1515 = vpop.f32.mrf.mxu0
  %v1516 = vadd.f32 0.0, %v1515
  %1517 = vmatprep.mubr.bf16.mxu0 0
  %1518 = vmatmul.mubr.bf16.gmra.mxu0 %v1189
  %v1519 = vpop.f32.mrf.mxu0
  %v1520 = vadd.f32 0.0, %v1519
  %v1521 = vpop.f32.mrf.mxu0
  %v1522 = vadd.f32 0.0, %v1521
  %v1523 = vpop.f32.mrf.mxu0
  %v1524 = vadd.f32 0.0, %v1523
  %v1525 = vpop.f32.mrf.mxu0
  %v1526 = vadd.f32 0.0, %v1525
  %1527 = vdwg.mxu0
  %v1528 = vmul.f32 %v389, %v1417
  %v1529 = vmul.f32 %v390, %v1419
  %v1530 = vmul.f32 %v391, %v1490
  %v1531 = vmul.f32 %v392, %v1492
  %v1532 = vmul.f32 %v393, %v1421
  %v1533 = vmul.f32 %v394, %v1423
  %v1534 = vmul.f32 %v395, %v1494
  %v1535 = vmul.f32 %v396, %v1496
  %v1536 = vmul.f32 %v397, %v1427
  %v1537 = vmul.f32 %v398, %v1429
  %v1538 = vmul.f32 %v399, %v1500
  %v1539 = vmul.f32 %v400, %v1502
  %v1540 = vmul.f32 %v401, %v1431
  %v1541 = vmul.f32 %v402, %v1433
  %v1542 = vmul.f32 %v403, %v1504
  %v1543 = vmul.f32 %v404, %v1506
  %v1544 = vmul.f32 %v405, %v1437
  %v1545 = vmul.f32 %v406, %v1439
  %v1546 = vmul.f32 %v407, %v1510
  %v1547 = vmul.f32 %v408, %v1512
  %v1548 = vmul.f32 %v409, %v1441
  %v1549 = vmul.f32 %v410, %v1443
  %v1550 = vmul.f32 %v411, %v1514
  %v1551 = vmul.f32 %v412, %v1516
  %v1552 = vmul.f32 %v413, %v1447
  %v1553 = vmul.f32 %v414, %v1449
  %v1554 = vmul.f32 %v415, %v1520
  %v1555 = vmul.f32 %v416, %v1522
  %v1556 = vmul.f32 %v417, %v1451
  %v1557 = vmul.f32 %v418, %v1453
  %v1558 = vmul.f32 %v419, %v1524
  %v1559 = vmul.f32 %v420, %v1526
  %1560 = vset.pattern.permute.xlu0 0
  %1561 = vperm.xlu0 %1560, %v87
  %v1562 = vpop.permute.xlu0 %1561
  %1564 = vset.pattern.permute.xlu0 0
  %1565 = vperm.xlu0 %1564, %v88
  %v1566 = vpop.permute.xlu0 %1565
  %1568 = vset.pattern.permute.xlu0 0
  %1569 = vperm.xlu0 %1568, %v89
  %v1570 = vpop.permute.xlu0 %1569
  %1572 = vset.pattern.permute.xlu0 0
  %1573 = vperm.xlu0 %1572, %v90
  %v1574 = vpop.permute.xlu0 %1573
  %1576 = vset.pattern.permute.xlu0 0
  %1577 = vperm.xlu0 %1576, %v91
  %v1578 = vpop.permute.xlu0 %1577
  %1580 = vset.pattern.permute.xlu0 0
  %1581 = vperm.xlu0 %1580, %v92
  %v1582 = vpop.permute.xlu0 %1581
  %1584 = vset.pattern.permute.xlu0 0
  %1585 = vperm.xlu0 %1584, %v93
  %v1586 = vpop.permute.xlu0 %1585
  %1588 = vset.pattern.permute.xlu0 0
  %1589 = vperm.xlu0 %1588, %v94
  %v1590 = vpop.permute.xlu0 %1589
  %v1592 = vmul.f32 %v1528, %v1562
  %v1593 = vmul.f32 %v1529, %v1562
  %v1594 = vmul.f32 %v1530, %v1562
  %v1595 = vmul.f32 %v1531, %v1562
  %v1596 = vmul.f32 %v1532, %v1566
  %v1597 = vmul.f32 %v1533, %v1566
  %v1598 = vmul.f32 %v1534, %v1566
  %v1599 = vmul.f32 %v1535, %v1566
  %v1600 = vmul.f32 %v1536, %v1570
  %v1601 = vmul.f32 %v1537, %v1570
  %v1602 = vmul.f32 %v1538, %v1570
  %v1603 = vmul.f32 %v1539, %v1570
  %v1604 = vmul.f32 %v1540, %v1574
  %v1605 = vmul.f32 %v1541, %v1574
  %v1606 = vmul.f32 %v1542, %v1574
  %v1607 = vmul.f32 %v1543, %v1574
  %v1608 = vmul.f32 %v1544, %v1578
  %v1609 = vmul.f32 %v1545, %v1578
  %v1610 = vmul.f32 %v1546, %v1578
  %v1611 = vmul.f32 %v1547, %v1578
  %v1612 = vmul.f32 %v1548, %v1582
  %v1613 = vmul.f32 %v1549, %v1582
  %v1614 = vmul.f32 %v1550, %v1582
  %v1615 = vmul.f32 %v1551, %v1582
  %v1616 = vmul.f32 %v1552, %v1586
  %v1617 = vmul.f32 %v1553, %v1586
  %v1618 = vmul.f32 %v1554, %v1586
  %v1619 = vmul.f32 %v1555, %v1586
  %v1620 = vmul.f32 %v1556, %v1590
  %v1621 = vmul.f32 %v1557, %v1590
  %v1622 = vmul.f32 %v1558, %v1590
  %v1623 = vmul.f32 %v1559, %v1590
  %1624 = vset.pattern.permute.xlu0 1
  %1625 = vperm.xlu0 %1624, %v87
  %v1626 = vpop.permute.xlu0 %1625
  %1628 = vset.pattern.permute.xlu0 1
  %1629 = vperm.xlu0 %1628, %v88
  %v1630 = vpop.permute.xlu0 %1629
  %1632 = vset.pattern.permute.xlu0 1
  %1633 = vperm.xlu0 %1632, %v89
  %v1634 = vpop.permute.xlu0 %1633
  %1636 = vset.pattern.permute.xlu0 1
  %1637 = vperm.xlu0 %1636, %v90
  %v1638 = vpop.permute.xlu0 %1637
  %1640 = vset.pattern.permute.xlu0 1
  %1641 = vperm.xlu0 %1640, %v91
  %v1642 = vpop.permute.xlu0 %1641
  %1644 = vset.pattern.permute.xlu0 1
  %1645 = vperm.xlu0 %1644, %v92
  %v1646 = vpop.permute.xlu0 %1645
  %1648 = vset.pattern.permute.xlu0 1
  %1649 = vperm.xlu0 %1648, %v93
  %v1650 = vpop.permute.xlu0 %1649
  %1652 = vset.pattern.permute.xlu0 1
  %1653 = vperm.xlu0 %1652, %v94
  %v1654 = vpop.permute.xlu0 %1653
  %v1656 = vadd.f32 %v1592, %v1626
  %v1657 = vadd.f32 %v1593, %v1626
  %v1658 = vadd.f32 %v1594, %v1626
  %v1659 = vadd.f32 %v1595, %v1626
  %v1660 = vadd.f32 %v1596, %v1630
  %v1661 = vadd.f32 %v1597, %v1630
  %v1662 = vadd.f32 %v1598, %v1630
  %v1663 = vadd.f32 %v1599, %v1630
  %v1664 = vadd.f32 %v1600, %v1634
  %v1665 = vadd.f32 %v1601, %v1634
  %v1666 = vadd.f32 %v1602, %v1634
  %v1667 = vadd.f32 %v1603, %v1634
  %v1668 = vadd.f32 %v1604, %v1638
  %v1669 = vadd.f32 %v1605, %v1638
  %v1670 = vadd.f32 %v1606, %v1638
  %v1671 = vadd.f32 %v1607, %v1638
  %v1672 = vadd.f32 %v1608, %v1642
  %v1673 = vadd.f32 %v1609, %v1642
  %v1674 = vadd.f32 %v1610, %v1642
  %v1675 = vadd.f32 %v1611, %v1642
  %v1676 = vadd.f32 %v1612, %v1646
  %v1677 = vadd.f32 %v1613, %v1646
  %v1678 = vadd.f32 %v1614, %v1646
  %v1679 = vadd.f32 %v1615, %v1646
  %v1680 = vadd.f32 %v1616, %v1650
  %v1681 = vadd.f32 %v1617, %v1650
  %v1682 = vadd.f32 %v1618, %v1650
  %v1683 = vadd.f32 %v1619, %v1650
  %v1684 = vadd.f32 %v1620, %v1654
  %v1685 = vadd.f32 %v1621, %v1654
  %v1686 = vadd.f32 %v1622, %v1654
  %v1687 = vadd.f32 %v1623, %v1654
  %1696 = vrot.lane.b32.xlu0 %v1531, 17
  %v1697 = vpop.permute.xlu0 %1696
  %1698 = vrot.lane.b32.xlu0 %v1535, 17
  %v1699 = vpop.permute.xlu0 %1698
  %1700 = vrot.lane.b32.xlu0 %v1539, 17
  %v1701 = vpop.permute.xlu0 %1700
  %1702 = vrot.lane.b32.xlu0 %v1543, 17
  %v1703 = vpop.permute.xlu0 %1702
  %1704 = vrot.lane.b32.xlu0 %v1547, 17
  %v1705 = vpop.permute.xlu0 %1704
  %1706 = vrot.lane.b32.xlu0 %v1551, 17
  %v1707 = vpop.permute.xlu0 %1706
  %1708 = vrot.lane.b32.xlu0 %v1555, 17
  %v1709 = vpop.permute.xlu0 %1708
  %1710 = vrot.lane.b32.xlu0 %v1559, 17
  %v1711 = vpop.permute.xlu0 %1710
  %1744 = vrot.lane.b32.xlu0 %v1528, 17
  %v1745 = vpop.permute.xlu0 %1744
  %1746 = vrot.lane.b32.xlu0 %v1529, 17
  %v1747 = vpop.permute.xlu0 %1746
  %1748 = vrot.lane.b32.xlu0 %v1530, 17
  %v1749 = vpop.permute.xlu0 %1748
  %1750 = vrot.lane.b32.xlu0 %v1532, 17
  %v1751 = vpop.permute.xlu0 %1750
  %1752 = vrot.lane.b32.xlu0 %v1533, 17
  %v1753 = vpop.permute.xlu0 %1752
  %1754 = vrot.lane.b32.xlu0 %v1534, 17
  %v1755 = vpop.permute.xlu0 %1754
  %1756 = vrot.lane.b32.xlu0 %v1536, 17
  %v1757 = vpop.permute.xlu0 %1756
  %1758 = vrot.lane.b32.xlu0 %v1537, 17
  %v1759 = vpop.permute.xlu0 %1758
  %1760 = vrot.lane.b32.xlu0 %v1538, 17
  %v1761 = vpop.permute.xlu0 %1760
  %1762 = vrot.lane.b32.xlu0 %v1540, 17
  %v1763 = vpop.permute.xlu0 %1762
  %1764 = vrot.lane.b32.xlu0 %v1541, 17
  %v1765 = vpop.permute.xlu0 %1764
  %1766 = vrot.lane.b32.xlu0 %v1542, 17
  %v1767 = vpop.permute.xlu0 %1766
  %1768 = vrot.lane.b32.xlu0 %v1544, 17
  %v1769 = vpop.permute.xlu0 %1768
  %1770 = vrot.lane.b32.xlu0 %v1545, 17
  %v1771 = vpop.permute.xlu0 %1770
  %1772 = vrot.lane.b32.xlu0 %v1546, 17
  %v1773 = vpop.permute.xlu0 %1772
  %1774 = vrot.lane.b32.xlu0 %v1548, 17
  %v1775 = vpop.permute.xlu0 %1774
  %1776 = vrot.lane.b32.xlu0 %v1549, 17
  %v1777 = vpop.permute.xlu0 %1776
  %1778 = vrot.lane.b32.xlu0 %v1550, 17
  %v1779 = vpop.permute.xlu0 %1778
  %1780 = vrot.lane.b32.xlu0 %v1552, 17
  %v1781 = vpop.permute.xlu0 %1780
  %1782 = vrot.lane.b32.xlu0 %v1553, 17
  %v1783 = vpop.permute.xlu0 %1782
  %1784 = vrot.lane.b32.xlu0 %v1554, 17
  %v1785 = vpop.permute.xlu0 %1784
  %1786 = vrot.lane.b32.xlu0 %v1556, 17
  %v1787 = vpop.permute.xlu0 %1786
  %1788 = vrot.lane.b32.xlu0 %v1557, 17
  %v1789 = vpop.permute.xlu0 %1788
  %1790 = vrot.lane.b32.xlu0 %v1558, 17
  %v1791 = vpop.permute.xlu0 %1790
  %vm1792 = vcmask 138240
  %v1793 = vsel %vm1792, %v1745, %v1747
  %v1794 = vsel %vm1792, %v1747, %v1749
  %v1795 = vsel %vm1792, %v1749, %v1697
  %v1796 = vsel %vm1792, %v1751, %v1753
  %v1797 = vsel %vm1792, %v1753, %v1755
  %v1798 = vsel %vm1792, %v1755, %v1699
  %v1799 = vsel %vm1792, %v1757, %v1759
  %v1800 = vsel %vm1792, %v1759, %v1761
  %v1801 = vsel %vm1792, %v1761, %v1701
  %v1802 = vsel %vm1792, %v1763, %v1765
  %v1803 = vsel %vm1792, %v1765, %v1767
  %v1804 = vsel %vm1792, %v1767, %v1703
  %v1805 = vsel %vm1792, %v1769, %v1771
  %v1806 = vsel %vm1792, %v1771, %v1773
  %v1807 = vsel %vm1792, %v1773, %v1705
  %v1808 = vsel %vm1792, %v1775, %v1777
  %v1809 = vsel %vm1792, %v1777, %v1779
  %v1810 = vsel %vm1792, %v1779, %v1707
  %v1811 = vsel %vm1792, %v1781, %v1783
  %v1812 = vsel %vm1792, %v1783, %v1785
  %v1813 = vsel %vm1792, %v1785, %v1709
  %v1814 = vsel %vm1792, %v1787, %v1789
  %v1815 = vsel %vm1792, %v1789, %v1791
  %v1816 = vsel %vm1792, %v1791, %v1711
  %v1849 = vsel %vm1792, %v1697, %v1745
  %v1850 = vsel %vm1792, %v1699, %v1751
  %v1851 = vsel %vm1792, %v1701, %v1757
  %v1852 = vsel %vm1792, %v1703, %v1763
  %v1853 = vsel %vm1792, %v1705, %v1769
  %v1854 = vsel %vm1792, %v1707, %v1775
  %v1855 = vsel %vm1792, %v1709, %v1781
  %v1856 = vsel %vm1792, %v1711, %v1787
  %v1857 = vlaneseq
  %v1858 = vshrl.u32 %v1857, 7
  %v1859 = vsub.s32 0, %v1858
  %v1860 = vrot.slane %v123, %v1859
  %v1861 = vlaneseq
  %v1862 = vshrl.u32 %v1861, 7
  %v1863 = vsub.s32 0, %v1862
  %v1864 = vrot.slane %v124, %v1863
  %v1865 = vlaneseq
  %v1866 = vshrl.u32 %v1865, 7
  %v1867 = vsub.s32 0, %v1866
  %v1868 = vrot.slane %v125, %v1867
  %v1869 = vlaneseq
  %v1870 = vshrl.u32 %v1869, 7
  %v1871 = vsub.s32 0, %v1870
  %v1872 = vrot.slane %v126, %v1871
  %v1873 = vmul.f32 %v1860, %v1849
  %v1874 = vmul.f32 %v1864, %v1793
  %v1875 = vmul.f32 %v1868, %v1794
  %v1876 = vmul.f32 %v1872, %v1795
  %v1877 = vmul.f32 %v1860, %v1850
  %v1878 = vmul.f32 %v1864, %v1796
  %v1879 = vmul.f32 %v1868, %v1797
  %v1880 = vmul.f32 %v1872, %v1798
  %v1881 = vmul.f32 %v1860, %v1851
  %v1882 = vmul.f32 %v1864, %v1799
  %v1883 = vmul.f32 %v1868, %v1800
  %v1884 = vmul.f32 %v1872, %v1801
  %v1885 = vmul.f32 %v1860, %v1852
  %v1886 = vmul.f32 %v1864, %v1802
  %v1887 = vmul.f32 %v1868, %v1803
  %v1888 = vmul.f32 %v1872, %v1804
  %v1889 = vmul.f32 %v1860, %v1853
  %v1890 = vmul.f32 %v1864, %v1805
  %v1891 = vmul.f32 %v1868, %v1806
  %v1892 = vmul.f32 %v1872, %v1807
  %v1893 = vmul.f32 %v1860, %v1854
  %v1894 = vmul.f32 %v1864, %v1808
  %v1895 = vmul.f32 %v1868, %v1809
  %v1896 = vmul.f32 %v1872, %v1810
  %v1897 = vmul.f32 %v1860, %v1855
  %v1898 = vmul.f32 %v1864, %v1811
  %v1899 = vmul.f32 %v1868, %v1812
  %v1900 = vmul.f32 %v1872, %v1813
  %v1901 = vmul.f32 %v1860, %v1856
  %v1902 = vmul.f32 %v1864, %v1814
  %v1903 = vmul.f32 %v1868, %v1815
  %v1904 = vmul.f32 %v1872, %v1816
  %1905 = vset.pattern.permute.xlu0 5
  %1906 = vperm.xlu0 %1905, %v87
  %v1907 = vpop.permute.xlu0 %1906
  %1909 = vset.pattern.permute.xlu0 5
  %1910 = vperm.xlu0 %1909, %v88
  %v1911 = vpop.permute.xlu0 %1910
  %1913 = vset.pattern.permute.xlu0 5
  %1914 = vperm.xlu0 %1913, %v89
  %v1915 = vpop.permute.xlu0 %1914
  %1917 = vset.pattern.permute.xlu0 5
  %1918 = vperm.xlu0 %1917, %v90
  %v1919 = vpop.permute.xlu0 %1918
  %1921 = vset.pattern.permute.xlu0 5
  %1922 = vperm.xlu0 %1921, %v91
  %v1923 = vpop.permute.xlu0 %1922
  %1925 = vset.pattern.permute.xlu0 5
  %1926 = vperm.xlu0 %1925, %v92
  %v1927 = vpop.permute.xlu0 %1926
  %1929 = vset.pattern.permute.xlu0 5
  %1930 = vperm.xlu0 %1929, %v93
  %v1931 = vpop.permute.xlu0 %1930
  %1933 = vset.pattern.permute.xlu0 5
  %1934 = vperm.xlu0 %1933, %v94
  %v1935 = vpop.permute.xlu0 %1934
  %v1937 = vmul.f32 %v1907, %v1873
  %v1938 = vmul.f32 %v1907, %v1874
  %v1939 = vmul.f32 %v1907, %v1875
  %v1940 = vmul.f32 %v1907, %v1876
  %v1941 = vmul.f32 %v1911, %v1877
  %v1942 = vmul.f32 %v1911, %v1878
  %v1943 = vmul.f32 %v1911, %v1879
  %v1944 = vmul.f32 %v1911, %v1880
  %v1945 = vmul.f32 %v1915, %v1881
  %v1946 = vmul.f32 %v1915, %v1882
  %v1947 = vmul.f32 %v1915, %v1883
  %v1948 = vmul.f32 %v1915, %v1884
  %v1949 = vmul.f32 %v1919, %v1885
  %v1950 = vmul.f32 %v1919, %v1886
  %v1951 = vmul.f32 %v1919, %v1887
  %v1952 = vmul.f32 %v1919, %v1888
  %v1953 = vmul.f32 %v1923, %v1889
  %v1954 = vmul.f32 %v1923, %v1890
  %v1955 = vmul.f32 %v1923, %v1891
  %v1956 = vmul.f32 %v1923, %v1892
  %v1957 = vmul.f32 %v1927, %v1893
  %v1958 = vmul.f32 %v1927, %v1894
  %v1959 = vmul.f32 %v1927, %v1895
  %v1960 = vmul.f32 %v1927, %v1896
  %v1961 = vmul.f32 %v1931, %v1897
  %v1962 = vmul.f32 %v1931, %v1898
  %v1963 = vmul.f32 %v1931, %v1899
  %v1964 = vmul.f32 %v1931, %v1900
  %v1965 = vmul.f32 %v1935, %v1901
  %v1966 = vmul.f32 %v1935, %v1902
  %v1967 = vmul.f32 %v1935, %v1903
  %v1968 = vmul.f32 %v1935, %v1904
  %v1969 = vadd.f32 %v1656, %v1937
  %v1970 = vadd.f32 %v1657, %v1938
  %v1971 = vadd.f32 %v1658, %v1939
  %v1972 = vadd.f32 %v1659, %v1940
  %v1973 = vadd.f32 %v1660, %v1941
  %v1974 = vadd.f32 %v1661, %v1942
  %v1975 = vadd.f32 %v1662, %v1943
  %v1976 = vadd.f32 %v1663, %v1944
  %v1977 = vadd.f32 %v1664, %v1945
  %v1978 = vadd.f32 %v1665, %v1946
  %v1979 = vadd.f32 %v1666, %v1947
  %v1980 = vadd.f32 %v1667, %v1948
  %v1981 = vadd.f32 %v1668, %v1949
  %v1982 = vadd.f32 %v1669, %v1950
  %v1983 = vadd.f32 %v1670, %v1951
  %v1984 = vadd.f32 %v1671, %v1952
  %v1985 = vadd.f32 %v1672, %v1953
  %v1986 = vadd.f32 %v1673, %v1954
  %v1987 = vadd.f32 %v1674, %v1955
  %v1988 = vadd.f32 %v1675, %v1956
  %v1989 = vadd.f32 %v1676, %v1957
  %v1990 = vadd.f32 %v1677, %v1958
  %v1991 = vadd.f32 %v1678, %v1959
  %v1992 = vadd.f32 %v1679, %v1960
  %v1993 = vadd.f32 %v1680, %v1961
  %v1994 = vadd.f32 %v1681, %v1962
  %v1995 = vadd.f32 %v1682, %v1963
  %v1996 = vadd.f32 %v1683, %v1964
  %v1997 = vadd.f32 %v1684, %v1965
  %v1998 = vadd.f32 %v1685, %v1966
  %v1999 = vadd.f32 %v1686, %v1967
  %v2000 = vadd.f32 %v1687, %v1968
  %2001 = vrot.lane.b32.xlu0 %v1531, 16
  %v2002 = vpop.permute.xlu0 %2001
  %2003 = vrot.lane.b32.xlu0 %v1535, 16
  %v2004 = vpop.permute.xlu0 %2003
  %2005 = vrot.lane.b32.xlu0 %v1539, 16
  %v2006 = vpop.permute.xlu0 %2005
  %2007 = vrot.lane.b32.xlu0 %v1543, 16
  %v2008 = vpop.permute.xlu0 %2007
  %2009 = vrot.lane.b32.xlu0 %v1547, 16
  %v2010 = vpop.permute.xlu0 %2009
  %2011 = vrot.lane.b32.xlu0 %v1551, 16
  %v2012 = vpop.permute.xlu0 %2011
  %2013 = vrot.lane.b32.xlu0 %v1555, 16
  %v2014 = vpop.permute.xlu0 %2013
  %2015 = vrot.lane.b32.xlu0 %v1559, 16
  %v2016 = vpop.permute.xlu0 %2015
  %2025 = vrot.lane.b32.xlu0 %v1528, 16
  %v2026 = vpop.permute.xlu0 %2025
  %2027 = vrot.lane.b32.xlu0 %v1529, 16
  %v2028 = vpop.permute.xlu0 %2027
  %2029 = vrot.lane.b32.xlu0 %v1530, 16
  %v2030 = vpop.permute.xlu0 %2029
  %2031 = vrot.lane.b32.xlu0 %v1532, 16
  %v2032 = vpop.permute.xlu0 %2031
  %2033 = vrot.lane.b32.xlu0 %v1533, 16
  %v2034 = vpop.permute.xlu0 %2033
  %2035 = vrot.lane.b32.xlu0 %v1534, 16
  %v2036 = vpop.permute.xlu0 %2035
  %2037 = vrot.lane.b32.xlu0 %v1536, 16
  %v2038 = vpop.permute.xlu0 %2037
  %2039 = vrot.lane.b32.xlu0 %v1537, 16
  %v2040 = vpop.permute.xlu0 %2039
  %2041 = vrot.lane.b32.xlu0 %v1538, 16
  %v2042 = vpop.permute.xlu0 %2041
  %2043 = vrot.lane.b32.xlu0 %v1540, 16
  %v2044 = vpop.permute.xlu0 %2043
  %2045 = vrot.lane.b32.xlu0 %v1541, 16
  %v2046 = vpop.permute.xlu0 %2045
  %2047 = vrot.lane.b32.xlu0 %v1542, 16
  %v2048 = vpop.permute.xlu0 %2047
  %2049 = vrot.lane.b32.xlu0 %v1544, 16
  %v2050 = vpop.permute.xlu0 %2049
  %2051 = vrot.lane.b32.xlu0 %v1545, 16
  %v2052 = vpop.permute.xlu0 %2051
  %2053 = vrot.lane.b32.xlu0 %v1546, 16
  %v2054 = vpop.permute.xlu0 %2053
  %2055 = vrot.lane.b32.xlu0 %v1548, 16
  %v2056 = vpop.permute.xlu0 %2055
  %2057 = vrot.lane.b32.xlu0 %v1549, 16
  %v2058 = vpop.permute.xlu0 %2057
  %2059 = vrot.lane.b32.xlu0 %v1550, 16
  %v2060 = vpop.permute.xlu0 %2059
  %2061 = vrot.lane.b32.xlu0 %v1552, 16
  %v2062 = vpop.permute.xlu0 %2061
  %2063 = vrot.lane.b32.xlu0 %v1553, 16
  %v2064 = vpop.permute.xlu0 %2063
  %2065 = vrot.lane.b32.xlu0 %v1554, 16
  %v2066 = vpop.permute.xlu0 %2065
  %2067 = vrot.lane.b32.xlu0 %v1556, 16
  %v2068 = vpop.permute.xlu0 %2067
  %2069 = vrot.lane.b32.xlu0 %v1557, 16
  %v2070 = vpop.permute.xlu0 %2069
  %2071 = vrot.lane.b32.xlu0 %v1558, 16
  %v2072 = vpop.permute.xlu0 %2071
  %vm2073 = vcmask 130048
  %v2074 = vsel %vm2073, %v2026, %v2028
  %v2075 = vsel %vm2073, %v2028, %v2030
  %v2076 = vsel %vm2073, %v2030, %v2002
  %v2077 = vsel %vm2073, %v2032, %v2034
  %v2078 = vsel %vm2073, %v2034, %v2036
  %v2079 = vsel %vm2073, %v2036, %v2004
  %v2080 = vsel %vm2073, %v2038, %v2040
  %v2081 = vsel %vm2073, %v2040, %v2042
  %v2082 = vsel %vm2073, %v2042, %v2006
  %v2083 = vsel %vm2073, %v2044, %v2046
  %v2084 = vsel %vm2073, %v2046, %v2048
  %v2085 = vsel %vm2073, %v2048, %v2008
  %v2086 = vsel %vm2073, %v2050, %v2052
  %v2087 = vsel %vm2073, %v2052, %v2054
  %v2088 = vsel %vm2073, %v2054, %v2010
  %v2089 = vsel %vm2073, %v2056, %v2058
  %v2090 = vsel %vm2073, %v2058, %v2060
  %v2091 = vsel %vm2073, %v2060, %v2012
  %v2092 = vsel %vm2073, %v2062, %v2064
  %v2093 = vsel %vm2073, %v2064, %v2066
  %v2094 = vsel %vm2073, %v2066, %v2014
  %v2095 = vsel %vm2073, %v2068, %v2070
  %v2096 = vsel %vm2073, %v2070, %v2072
  %v2097 = vsel %vm2073, %v2072, %v2016
  %v2130 = vsel %vm2073, %v2002, %v2026
  %v2131 = vsel %vm2073, %v2004, %v2032
  %v2132 = vsel %vm2073, %v2006, %v2038
  %v2133 = vsel %vm2073, %v2008, %v2044
  %v2134 = vsel %vm2073, %v2010, %v2050
  %v2135 = vsel %vm2073, %v2012, %v2056
  %v2136 = vsel %vm2073, %v2014, %v2062
  %v2137 = vsel %vm2073, %v2016, %v2068
  %v2138 = vlaneseq
  %v2139 = vshrl.u32 %v2138, 7
  %v2140 = vsub.s32 1, %v2139
  %v2141 = vrot.slane %v123, %v2140
  %v2142 = vlaneseq
  %v2143 = vshrl.u32 %v2142, 7
  %v2144 = vsub.s32 1, %v2143
  %v2145 = vrot.slane %v124, %v2144
  %v2146 = vlaneseq
  %v2147 = vshrl.u32 %v2146, 7
  %v2148 = vsub.s32 1, %v2147
  %v2149 = vrot.slane %v125, %v2148
  %v2150 = vlaneseq
  %v2151 = vshrl.u32 %v2150, 7
  %v2152 = vsub.s32 1, %v2151
  %v2153 = vrot.slane %v126, %v2152
  %v2154 = vmul.f32 %v2141, %v2130
  %v2155 = vmul.f32 %v2145, %v2074
  %v2156 = vmul.f32 %v2149, %v2075
  %v2157 = vmul.f32 %v2153, %v2076
  %v2158 = vmul.f32 %v2141, %v2131
  %v2159 = vmul.f32 %v2145, %v2077
  %v2160 = vmul.f32 %v2149, %v2078
  %v2161 = vmul.f32 %v2153, %v2079
  %v2162 = vmul.f32 %v2141, %v2132
  %v2163 = vmul.f32 %v2145, %v2080
  %v2164 = vmul.f32 %v2149, %v2081
  %v2165 = vmul.f32 %v2153, %v2082
  %v2166 = vmul.f32 %v2141, %v2133
  %v2167 = vmul.f32 %v2145, %v2083
  %v2168 = vmul.f32 %v2149, %v2084
  %v2169 = vmul.f32 %v2153, %v2085
  %v2170 = vmul.f32 %v2141, %v2134
  %v2171 = vmul.f32 %v2145, %v2086
  %v2172 = vmul.f32 %v2149, %v2087
  %v2173 = vmul.f32 %v2153, %v2088
  %v2174 = vmul.f32 %v2141, %v2135
  %v2175 = vmul.f32 %v2145, %v2089
  %v2176 = vmul.f32 %v2149, %v2090
  %v2177 = vmul.f32 %v2153, %v2091
  %v2178 = vmul.f32 %v2141, %v2136
  %v2179 = vmul.f32 %v2145, %v2092
  %v2180 = vmul.f32 %v2149, %v2093
  %v2181 = vmul.f32 %v2153, %v2094
  %v2182 = vmul.f32 %v2141, %v2137
  %v2183 = vmul.f32 %v2145, %v2095
  %v2184 = vmul.f32 %v2149, %v2096
  %v2185 = vmul.f32 %v2153, %v2097
  %2186 = vset.pattern.permute.xlu0 6
  %2187 = vperm.xlu0 %2186, %v87
  %v2188 = vpop.permute.xlu0 %2187
  %2190 = vset.pattern.permute.xlu0 6
  %2191 = vperm.xlu0 %2190, %v88
  %v2192 = vpop.permute.xlu0 %2191
  %2194 = vset.pattern.permute.xlu0 6
  %2195 = vperm.xlu0 %2194, %v89
  %v2196 = vpop.permute.xlu0 %2195
  %2198 = vset.pattern.permute.xlu0 6
  %2199 = vperm.xlu0 %2198, %v90
  %v2200 = vpop.permute.xlu0 %2199
  %2202 = vset.pattern.permute.xlu0 6
  %2203 = vperm.xlu0 %2202, %v91
  %v2204 = vpop.permute.xlu0 %2203
  %2206 = vset.pattern.permute.xlu0 6
  %2207 = vperm.xlu0 %2206, %v92
  %v2208 = vpop.permute.xlu0 %2207
  %2210 = vset.pattern.permute.xlu0 6
  %2211 = vperm.xlu0 %2210, %v93
  %v2212 = vpop.permute.xlu0 %2211
  %2214 = vset.pattern.permute.xlu0 6
  %2215 = vperm.xlu0 %2214, %v94
  %v2216 = vpop.permute.xlu0 %2215
  %v2218 = vmul.f32 %v2188, %v2154
  %v2219 = vmul.f32 %v2188, %v2155
  %v2220 = vmul.f32 %v2188, %v2156
  %v2221 = vmul.f32 %v2188, %v2157
  %v2222 = vmul.f32 %v2192, %v2158
  %v2223 = vmul.f32 %v2192, %v2159
  %v2224 = vmul.f32 %v2192, %v2160
  %v2225 = vmul.f32 %v2192, %v2161
  %v2226 = vmul.f32 %v2196, %v2162
  %v2227 = vmul.f32 %v2196, %v2163
  %v2228 = vmul.f32 %v2196, %v2164
  %v2229 = vmul.f32 %v2196, %v2165
  %v2230 = vmul.f32 %v2200, %v2166
  %v2231 = vmul.f32 %v2200, %v2167
  %v2232 = vmul.f32 %v2200, %v2168
  %v2233 = vmul.f32 %v2200, %v2169
  %v2234 = vmul.f32 %v2204, %v2170
  %v2235 = vmul.f32 %v2204, %v2171
  %v2236 = vmul.f32 %v2204, %v2172
  %v2237 = vmul.f32 %v2204, %v2173
  %v2238 = vmul.f32 %v2208, %v2174
  %v2239 = vmul.f32 %v2208, %v2175
  %v2240 = vmul.f32 %v2208, %v2176
  %v2241 = vmul.f32 %v2208, %v2177
  %v2242 = vmul.f32 %v2212, %v2178
  %v2243 = vmul.f32 %v2212, %v2179
  %v2244 = vmul.f32 %v2212, %v2180
  %v2245 = vmul.f32 %v2212, %v2181
  %v2246 = vmul.f32 %v2216, %v2182
  %v2247 = vmul.f32 %v2216, %v2183
  %v2248 = vmul.f32 %v2216, %v2184
  %v2249 = vmul.f32 %v2216, %v2185
  %v2250 = vadd.f32 %v1969, %v2218
  %v2251 = vadd.f32 %v1970, %v2219
  %v2252 = vadd.f32 %v1971, %v2220
  %v2253 = vadd.f32 %v1972, %v2221
  %v2254 = vadd.f32 %v1973, %v2222
  %v2255 = vadd.f32 %v1974, %v2223
  %v2256 = vadd.f32 %v1975, %v2224
  %v2257 = vadd.f32 %v1976, %v2225
  %v2258 = vadd.f32 %v1977, %v2226
  %v2259 = vadd.f32 %v1978, %v2227
  %v2260 = vadd.f32 %v1979, %v2228
  %v2261 = vadd.f32 %v1980, %v2229
  %v2262 = vadd.f32 %v1981, %v2230
  %v2263 = vadd.f32 %v1982, %v2231
  %v2264 = vadd.f32 %v1983, %v2232
  %v2265 = vadd.f32 %v1984, %v2233
  %v2266 = vadd.f32 %v1985, %v2234
  %v2267 = vadd.f32 %v1986, %v2235
  %v2268 = vadd.f32 %v1987, %v2236
  %v2269 = vadd.f32 %v1988, %v2237
  %v2270 = vadd.f32 %v1989, %v2238
  %v2271 = vadd.f32 %v1990, %v2239
  %v2272 = vadd.f32 %v1991, %v2240
  %v2273 = vadd.f32 %v1992, %v2241
  %v2274 = vadd.f32 %v1993, %v2242
  %v2275 = vadd.f32 %v1994, %v2243
  %v2276 = vadd.f32 %v1995, %v2244
  %v2277 = vadd.f32 %v1996, %v2245
  %v2278 = vadd.f32 %v1997, %v2246
  %v2279 = vadd.f32 %v1998, %v2247
  %v2280 = vadd.f32 %v1999, %v2248
  %v2281 = vadd.f32 %v2000, %v2249
  %2282 = vrot.lane.b32.xlu0 %v1531, 15
  %v2283 = vpop.permute.xlu0 %2282
  %2284 = vrot.lane.b32.xlu0 %v1535, 15
  %v2285 = vpop.permute.xlu0 %2284
  %2286 = vrot.lane.b32.xlu0 %v1539, 15
  %v2287 = vpop.permute.xlu0 %2286
  %2288 = vrot.lane.b32.xlu0 %v1543, 15
  %v2289 = vpop.permute.xlu0 %2288
  %2290 = vrot.lane.b32.xlu0 %v1547, 15
  %v2291 = vpop.permute.xlu0 %2290
  %2292 = vrot.lane.b32.xlu0 %v1551, 15
  %v2293 = vpop.permute.xlu0 %2292
  %2294 = vrot.lane.b32.xlu0 %v1555, 15
  %v2295 = vpop.permute.xlu0 %2294
  %2296 = vrot.lane.b32.xlu0 %v1559, 15
  %v2297 = vpop.permute.xlu0 %2296
  %2306 = vrot.lane.b32.xlu0 %v1528, 15
  %v2307 = vpop.permute.xlu0 %2306
  %2308 = vrot.lane.b32.xlu0 %v1529, 15
  %v2309 = vpop.permute.xlu0 %2308
  %2310 = vrot.lane.b32.xlu0 %v1530, 15
  %v2311 = vpop.permute.xlu0 %2310
  %2312 = vrot.lane.b32.xlu0 %v1532, 15
  %v2313 = vpop.permute.xlu0 %2312
  %2314 = vrot.lane.b32.xlu0 %v1533, 15
  %v2315 = vpop.permute.xlu0 %2314
  %2316 = vrot.lane.b32.xlu0 %v1534, 15
  %v2317 = vpop.permute.xlu0 %2316
  %2318 = vrot.lane.b32.xlu0 %v1536, 15
  %v2319 = vpop.permute.xlu0 %2318
  %2320 = vrot.lane.b32.xlu0 %v1537, 15
  %v2321 = vpop.permute.xlu0 %2320
  %2322 = vrot.lane.b32.xlu0 %v1538, 15
  %v2323 = vpop.permute.xlu0 %2322
  %2324 = vrot.lane.b32.xlu0 %v1540, 15
  %v2325 = vpop.permute.xlu0 %2324
  %2326 = vrot.lane.b32.xlu0 %v1541, 15
  %v2327 = vpop.permute.xlu0 %2326
  %2328 = vrot.lane.b32.xlu0 %v1542, 15
  %v2329 = vpop.permute.xlu0 %2328
  %2330 = vrot.lane.b32.xlu0 %v1544, 15
  %v2331 = vpop.permute.xlu0 %2330
  %2332 = vrot.lane.b32.xlu0 %v1545, 15
  %v2333 = vpop.permute.xlu0 %2332
  %2334 = vrot.lane.b32.xlu0 %v1546, 15
  %v2335 = vpop.permute.xlu0 %2334
  %2336 = vrot.lane.b32.xlu0 %v1548, 15
  %v2337 = vpop.permute.xlu0 %2336
  %2338 = vrot.lane.b32.xlu0 %v1549, 15
  %v2339 = vpop.permute.xlu0 %2338
  %2340 = vrot.lane.b32.xlu0 %v1550, 15
  %v2341 = vpop.permute.xlu0 %2340
  %2342 = vrot.lane.b32.xlu0 %v1552, 15
  %v2343 = vpop.permute.xlu0 %2342
  %2344 = vrot.lane.b32.xlu0 %v1553, 15
  %v2345 = vpop.permute.xlu0 %2344
  %2346 = vrot.lane.b32.xlu0 %v1554, 15
  %v2347 = vpop.permute.xlu0 %2346
  %2348 = vrot.lane.b32.xlu0 %v1556, 15
  %v2349 = vpop.permute.xlu0 %2348
  %2350 = vrot.lane.b32.xlu0 %v1557, 15
  %v2351 = vpop.permute.xlu0 %2350
  %2352 = vrot.lane.b32.xlu0 %v1558, 15
  %v2353 = vpop.permute.xlu0 %2352
  %vm2354 = vcmask 121856
  %v2355 = vsel %vm2354, %v2307, %v2309
  %v2356 = vsel %vm2354, %v2309, %v2311
  %v2357 = vsel %vm2354, %v2311, %v2283
  %v2358 = vsel %vm2354, %v2313, %v2315
  %v2359 = vsel %vm2354, %v2315, %v2317
  %v2360 = vsel %vm2354, %v2317, %v2285
  %v2361 = vsel %vm2354, %v2319, %v2321
  %v2362 = vsel %vm2354, %v2321, %v2323
  %v2363 = vsel %vm2354, %v2323, %v2287
  %v2364 = vsel %vm2354, %v2325, %v2327
  %v2365 = vsel %vm2354, %v2327, %v2329
  %v2366 = vsel %vm2354, %v2329, %v2289
  %v2367 = vsel %vm2354, %v2331, %v2333
  %v2368 = vsel %vm2354, %v2333, %v2335
  %v2369 = vsel %vm2354, %v2335, %v2291
  %v2370 = vsel %vm2354, %v2337, %v2339
  %v2371 = vsel %vm2354, %v2339, %v2341
  %v2372 = vsel %vm2354, %v2341, %v2293
  %v2373 = vsel %vm2354, %v2343, %v2345
  %v2374 = vsel %vm2354, %v2345, %v2347
  %v2375 = vsel %vm2354, %v2347, %v2295
  %v2376 = vsel %vm2354, %v2349, %v2351
  %v2377 = vsel %vm2354, %v2351, %v2353
  %v2378 = vsel %vm2354, %v2353, %v2297
  %v2411 = vsel %vm2354, %v2283, %v2307
  %v2412 = vsel %vm2354, %v2285, %v2313
  %v2413 = vsel %vm2354, %v2287, %v2319
  %v2414 = vsel %vm2354, %v2289, %v2325
  %v2415 = vsel %vm2354, %v2291, %v2331
  %v2416 = vsel %vm2354, %v2293, %v2337
  %v2417 = vsel %vm2354, %v2295, %v2343
  %v2418 = vsel %vm2354, %v2297, %v2349
  %v2419 = vlaneseq
  %v2420 = vshrl.u32 %v2419, 7
  %v2421 = vsub.s32 2, %v2420
  %v2422 = vrot.slane %v123, %v2421
  %v2423 = vlaneseq
  %v2424 = vshrl.u32 %v2423, 7
  %v2425 = vsub.s32 2, %v2424
  %v2426 = vrot.slane %v124, %v2425
  %v2427 = vlaneseq
  %v2428 = vshrl.u32 %v2427, 7
  %v2429 = vsub.s32 2, %v2428
  %v2430 = vrot.slane %v125, %v2429
  %v2431 = vlaneseq
  %v2432 = vshrl.u32 %v2431, 7
  %v2433 = vsub.s32 2, %v2432
  %v2434 = vrot.slane %v126, %v2433
  %v2435 = vmul.f32 %v2422, %v2411
  %v2436 = vmul.f32 %v2426, %v2355
  %v2437 = vmul.f32 %v2430, %v2356
  %v2438 = vmul.f32 %v2434, %v2357
  %v2439 = vmul.f32 %v2422, %v2412
  %v2440 = vmul.f32 %v2426, %v2358
  %v2441 = vmul.f32 %v2430, %v2359
  %v2442 = vmul.f32 %v2434, %v2360
  %v2443 = vmul.f32 %v2422, %v2413
  %v2444 = vmul.f32 %v2426, %v2361
  %v2445 = vmul.f32 %v2430, %v2362
  %v2446 = vmul.f32 %v2434, %v2363
  %v2447 = vmul.f32 %v2422, %v2414
  %v2448 = vmul.f32 %v2426, %v2364
  %v2449 = vmul.f32 %v2430, %v2365
  %v2450 = vmul.f32 %v2434, %v2366
  %v2451 = vmul.f32 %v2422, %v2415
  %v2452 = vmul.f32 %v2426, %v2367
  %v2453 = vmul.f32 %v2430, %v2368
  %v2454 = vmul.f32 %v2434, %v2369
  %v2455 = vmul.f32 %v2422, %v2416
  %v2456 = vmul.f32 %v2426, %v2370
  %v2457 = vmul.f32 %v2430, %v2371
  %v2458 = vmul.f32 %v2434, %v2372
  %v2459 = vmul.f32 %v2422, %v2417
  %v2460 = vmul.f32 %v2426, %v2373
  %v2461 = vmul.f32 %v2430, %v2374
  %v2462 = vmul.f32 %v2434, %v2375
  %v2463 = vmul.f32 %v2422, %v2418
  %v2464 = vmul.f32 %v2426, %v2376
  %v2465 = vmul.f32 %v2430, %v2377
  %v2466 = vmul.f32 %v2434, %v2378
  %2467 = vset.pattern.permute.xlu0 7
  %2468 = vperm.xlu0 %2467, %v87
  %v2469 = vpop.permute.xlu0 %2468
  %2471 = vset.pattern.permute.xlu0 7
  %2472 = vperm.xlu0 %2471, %v88
  %v2473 = vpop.permute.xlu0 %2472
  %2475 = vset.pattern.permute.xlu0 7
  %2476 = vperm.xlu0 %2475, %v89
  %v2477 = vpop.permute.xlu0 %2476
  %2479 = vset.pattern.permute.xlu0 7
  %2480 = vperm.xlu0 %2479, %v90
  %v2481 = vpop.permute.xlu0 %2480
  %2483 = vset.pattern.permute.xlu0 7
  %2484 = vperm.xlu0 %2483, %v91
  %v2485 = vpop.permute.xlu0 %2484
  %2487 = vset.pattern.permute.xlu0 7
  %2488 = vperm.xlu0 %2487, %v92
  %v2489 = vpop.permute.xlu0 %2488
  %2491 = vset.pattern.permute.xlu0 7
  %2492 = vperm.xlu0 %2491, %v93
  %v2493 = vpop.permute.xlu0 %2492
  %2495 = vset.pattern.permute.xlu0 7
  %2496 = vperm.xlu0 %2495, %v94
  %v2497 = vpop.permute.xlu0 %2496
  %v2499 = vmul.f32 %v2469, %v2435
  %v2500 = vmul.f32 %v2469, %v2436
  %v2501 = vmul.f32 %v2469, %v2437
  %v2502 = vmul.f32 %v2469, %v2438
  %v2503 = vmul.f32 %v2473, %v2439
  %v2504 = vmul.f32 %v2473, %v2440
  %v2505 = vmul.f32 %v2473, %v2441
  %v2506 = vmul.f32 %v2473, %v2442
  %v2507 = vmul.f32 %v2477, %v2443
  %v2508 = vmul.f32 %v2477, %v2444
  %v2509 = vmul.f32 %v2477, %v2445
  %v2510 = vmul.f32 %v2477, %v2446
  %v2511 = vmul.f32 %v2481, %v2447
  %v2512 = vmul.f32 %v2481, %v2448
  %v2513 = vmul.f32 %v2481, %v2449
  %v2514 = vmul.f32 %v2481, %v2450
  %v2515 = vmul.f32 %v2485, %v2451
  %v2516 = vmul.f32 %v2485, %v2452
  %v2517 = vmul.f32 %v2485, %v2453
  %v2518 = vmul.f32 %v2485, %v2454
  %v2519 = vmul.f32 %v2489, %v2455
  %v2520 = vmul.f32 %v2489, %v2456
  %v2521 = vmul.f32 %v2489, %v2457
  %v2522 = vmul.f32 %v2489, %v2458
  %v2523 = vmul.f32 %v2493, %v2459
  %v2524 = vmul.f32 %v2493, %v2460
  %v2525 = vmul.f32 %v2493, %v2461
  %v2526 = vmul.f32 %v2493, %v2462
  %v2527 = vmul.f32 %v2497, %v2463
  %v2528 = vmul.f32 %v2497, %v2464
  %v2529 = vmul.f32 %v2497, %v2465
  %v2530 = vmul.f32 %v2497, %v2466
  %v2531 = vadd.f32 %v2250, %v2499
  %v2532 = vadd.f32 %v2251, %v2500
  %v2533 = vadd.f32 %v2252, %v2501
  %v2534 = vadd.f32 %v2253, %v2502
  %v2535 = vadd.f32 %v2254, %v2503
  %v2536 = vadd.f32 %v2255, %v2504
  %v2537 = vadd.f32 %v2256, %v2505
  %v2538 = vadd.f32 %v2257, %v2506
  %v2539 = vadd.f32 %v2258, %v2507
  %v2540 = vadd.f32 %v2259, %v2508
  %v2541 = vadd.f32 %v2260, %v2509
  %v2542 = vadd.f32 %v2261, %v2510
  %v2543 = vadd.f32 %v2262, %v2511
  %v2544 = vadd.f32 %v2263, %v2512
  %v2545 = vadd.f32 %v2264, %v2513
  %v2546 = vadd.f32 %v2265, %v2514
  %v2547 = vadd.f32 %v2266, %v2515
  %v2548 = vadd.f32 %v2267, %v2516
  %v2549 = vadd.f32 %v2268, %v2517
  %v2550 = vadd.f32 %v2269, %v2518
  %v2551 = vadd.f32 %v2270, %v2519
  %v2552 = vadd.f32 %v2271, %v2520
  %v2553 = vadd.f32 %v2272, %v2521
  %v2554 = vadd.f32 %v2273, %v2522
  %v2555 = vadd.f32 %v2274, %v2523
  %v2556 = vadd.f32 %v2275, %v2524
  %v2557 = vadd.f32 %v2276, %v2525
  %v2558 = vadd.f32 %v2277, %v2526
  %v2559 = vadd.f32 %v2278, %v2527
  %v2560 = vadd.f32 %v2279, %v2528
  %v2561 = vadd.f32 %v2280, %v2529
  %v2562 = vadd.f32 %v2281, %v2530
  %2563 = vrot.lane.b32.xlu0 %v1531, 1
  %v2564 = vpop.permute.xlu0 %2563
  %2565 = vrot.lane.b32.xlu0 %v1535, 1
  %v2566 = vpop.permute.xlu0 %2565
  %2567 = vrot.lane.b32.xlu0 %v1539, 1
  %v2568 = vpop.permute.xlu0 %2567
  %2569 = vrot.lane.b32.xlu0 %v1543, 1
  %v2570 = vpop.permute.xlu0 %2569
  %2571 = vrot.lane.b32.xlu0 %v1547, 1
  %v2572 = vpop.permute.xlu0 %2571
  %2573 = vrot.lane.b32.xlu0 %v1551, 1
  %v2574 = vpop.permute.xlu0 %2573
  %2575 = vrot.lane.b32.xlu0 %v1555, 1
  %v2576 = vpop.permute.xlu0 %2575
  %2577 = vrot.lane.b32.xlu0 %v1559, 1
  %v2578 = vpop.permute.xlu0 %2577
  %2587 = vrot.lane.b32.xlu0 %v1528, 1
  %v2588 = vpop.permute.xlu0 %2587
  %2589 = vrot.lane.b32.xlu0 %v1529, 1
  %v2590 = vpop.permute.xlu0 %2589
  %2591 = vrot.lane.b32.xlu0 %v1530, 1
  %v2592 = vpop.permute.xlu0 %2591
  %2593 = vrot.lane.b32.xlu0 %v1532, 1
  %v2594 = vpop.permute.xlu0 %2593
  %2595 = vrot.lane.b32.xlu0 %v1533, 1
  %v2596 = vpop.permute.xlu0 %2595
  %2597 = vrot.lane.b32.xlu0 %v1534, 1
  %v2598 = vpop.permute.xlu0 %2597
  %2599 = vrot.lane.b32.xlu0 %v1536, 1
  %v2600 = vpop.permute.xlu0 %2599
  %2601 = vrot.lane.b32.xlu0 %v1537, 1
  %v2602 = vpop.permute.xlu0 %2601
  %2603 = vrot.lane.b32.xlu0 %v1538, 1
  %v2604 = vpop.permute.xlu0 %2603
  %2605 = vrot.lane.b32.xlu0 %v1540, 1
  %v2606 = vpop.permute.xlu0 %2605
  %2607 = vrot.lane.b32.xlu0 %v1541, 1
  %v2608 = vpop.permute.xlu0 %2607
  %2609 = vrot.lane.b32.xlu0 %v1542, 1
  %v2610 = vpop.permute.xlu0 %2609
  %2611 = vrot.lane.b32.xlu0 %v1544, 1
  %v2612 = vpop.permute.xlu0 %2611
  %2613 = vrot.lane.b32.xlu0 %v1545, 1
  %v2614 = vpop.permute.xlu0 %2613
  %2615 = vrot.lane.b32.xlu0 %v1546, 1
  %v2616 = vpop.permute.xlu0 %2615
  %2617 = vrot.lane.b32.xlu0 %v1548, 1
  %v2618 = vpop.permute.xlu0 %2617
  %2619 = vrot.lane.b32.xlu0 %v1549, 1
  %v2620 = vpop.permute.xlu0 %2619
  %2621 = vrot.lane.b32.xlu0 %v1550, 1
  %v2622 = vpop.permute.xlu0 %2621
  %2623 = vrot.lane.b32.xlu0 %v1552, 1
  %v2624 = vpop.permute.xlu0 %2623
  %2625 = vrot.lane.b32.xlu0 %v1553, 1
  %v2626 = vpop.permute.xlu0 %2625
  %2627 = vrot.lane.b32.xlu0 %v1554, 1
  %v2628 = vpop.permute.xlu0 %2627
  %2629 = vrot.lane.b32.xlu0 %v1556, 1
  %v2630 = vpop.permute.xlu0 %2629
  %2631 = vrot.lane.b32.xlu0 %v1557, 1
  %v2632 = vpop.permute.xlu0 %2631
  %2633 = vrot.lane.b32.xlu0 %v1558, 1
  %v2634 = vpop.permute.xlu0 %2633
  %vm2635 = vcmask 7168
  %v2636 = vsel %vm2635, %v2588, %v2590
  %v2637 = vsel %vm2635, %v2590, %v2592
  %v2638 = vsel %vm2635, %v2592, %v2564
  %v2639 = vsel %vm2635, %v2594, %v2596
  %v2640 = vsel %vm2635, %v2596, %v2598
  %v2641 = vsel %vm2635, %v2598, %v2566
  %v2642 = vsel %vm2635, %v2600, %v2602
  %v2643 = vsel %vm2635, %v2602, %v2604
  %v2644 = vsel %vm2635, %v2604, %v2568
  %v2645 = vsel %vm2635, %v2606, %v2608
  %v2646 = vsel %vm2635, %v2608, %v2610
  %v2647 = vsel %vm2635, %v2610, %v2570
  %v2648 = vsel %vm2635, %v2612, %v2614
  %v2649 = vsel %vm2635, %v2614, %v2616
  %v2650 = vsel %vm2635, %v2616, %v2572
  %v2651 = vsel %vm2635, %v2618, %v2620
  %v2652 = vsel %vm2635, %v2620, %v2622
  %v2653 = vsel %vm2635, %v2622, %v2574
  %v2654 = vsel %vm2635, %v2624, %v2626
  %v2655 = vsel %vm2635, %v2626, %v2628
  %v2656 = vsel %vm2635, %v2628, %v2576
  %v2657 = vsel %vm2635, %v2630, %v2632
  %v2658 = vsel %vm2635, %v2632, %v2634
  %v2659 = vsel %vm2635, %v2634, %v2578
  %v2692 = vsel %vm2635, %v2564, %v2588
  %v2693 = vsel %vm2635, %v2566, %v2594
  %v2694 = vsel %vm2635, %v2568, %v2600
  %v2695 = vsel %vm2635, %v2570, %v2606
  %v2696 = vsel %vm2635, %v2572, %v2612
  %v2697 = vsel %vm2635, %v2574, %v2618
  %v2698 = vsel %vm2635, %v2576, %v2624
  %v2699 = vsel %vm2635, %v2578, %v2630
  %v2700 = vlaneseq
  %v2701 = vshrl.u32 %v2700, 7
  %v2702 = vsub.s32 3, %v2701
  %v2703 = vrot.slane %v123, %v2702
  %v2704 = vlaneseq
  %v2705 = vshrl.u32 %v2704, 7
  %v2706 = vsub.s32 3, %v2705
  %v2707 = vrot.slane %v124, %v2706
  %v2708 = vlaneseq
  %v2709 = vshrl.u32 %v2708, 7
  %v2710 = vsub.s32 3, %v2709
  %v2711 = vrot.slane %v125, %v2710
  %v2712 = vlaneseq
  %v2713 = vshrl.u32 %v2712, 7
  %v2714 = vsub.s32 3, %v2713
  %v2715 = vrot.slane %v126, %v2714
  %v2716 = vmul.f32 %v2703, %v2692
  %v2717 = vmul.f32 %v2707, %v2636
  %v2718 = vmul.f32 %v2711, %v2637
  %v2719 = vmul.f32 %v2715, %v2638
  %v2720 = vmul.f32 %v2703, %v2693
  %v2721 = vmul.f32 %v2707, %v2639
  %v2722 = vmul.f32 %v2711, %v2640
  %v2723 = vmul.f32 %v2715, %v2641
  %v2724 = vmul.f32 %v2703, %v2694
  %v2725 = vmul.f32 %v2707, %v2642
  %v2726 = vmul.f32 %v2711, %v2643
  %v2727 = vmul.f32 %v2715, %v2644
  %v2728 = vmul.f32 %v2703, %v2695
  %v2729 = vmul.f32 %v2707, %v2645
  %v2730 = vmul.f32 %v2711, %v2646
  %v2731 = vmul.f32 %v2715, %v2647
  %v2732 = vmul.f32 %v2703, %v2696
  %v2733 = vmul.f32 %v2707, %v2648
  %v2734 = vmul.f32 %v2711, %v2649
  %v2735 = vmul.f32 %v2715, %v2650
  %v2736 = vmul.f32 %v2703, %v2697
  %v2737 = vmul.f32 %v2707, %v2651
  %v2738 = vmul.f32 %v2711, %v2652
  %v2739 = vmul.f32 %v2715, %v2653
  %v2740 = vmul.f32 %v2703, %v2698
  %v2741 = vmul.f32 %v2707, %v2654
  %v2742 = vmul.f32 %v2711, %v2655
  %v2743 = vmul.f32 %v2715, %v2656
  %v2744 = vmul.f32 %v2703, %v2699
  %v2745 = vmul.f32 %v2707, %v2657
  %v2746 = vmul.f32 %v2711, %v2658
  %v2747 = vmul.f32 %v2715, %v2659
  %2748 = vset.pattern.permute.xlu0 8
  %2749 = vperm.xlu0 %2748, %v87
  %v2750 = vpop.permute.xlu0 %2749
  %2752 = vset.pattern.permute.xlu0 8
  %2753 = vperm.xlu0 %2752, %v88
  %v2754 = vpop.permute.xlu0 %2753
  %2756 = vset.pattern.permute.xlu0 8
  %2757 = vperm.xlu0 %2756, %v89
  %v2758 = vpop.permute.xlu0 %2757
  %2760 = vset.pattern.permute.xlu0 8
  %2761 = vperm.xlu0 %2760, %v90
  %v2762 = vpop.permute.xlu0 %2761
  %2764 = vset.pattern.permute.xlu0 8
  %2765 = vperm.xlu0 %2764, %v91
  %v2766 = vpop.permute.xlu0 %2765
  %2768 = vset.pattern.permute.xlu0 8
  %2769 = vperm.xlu0 %2768, %v92
  %v2770 = vpop.permute.xlu0 %2769
  %2772 = vset.pattern.permute.xlu0 8
  %2773 = vperm.xlu0 %2772, %v93
  %v2774 = vpop.permute.xlu0 %2773
  %2776 = vset.pattern.permute.xlu0 8
  %2777 = vperm.xlu0 %2776, %v94
  %v2778 = vpop.permute.xlu0 %2777
  %v2780 = vmul.f32 %v2750, %v2716
  %v2781 = vmul.f32 %v2750, %v2717
  %v2782 = vmul.f32 %v2750, %v2718
  %v2783 = vmul.f32 %v2750, %v2719
  %v2784 = vmul.f32 %v2754, %v2720
  %v2785 = vmul.f32 %v2754, %v2721
  %v2786 = vmul.f32 %v2754, %v2722
  %v2787 = vmul.f32 %v2754, %v2723
  %v2788 = vmul.f32 %v2758, %v2724
  %v2789 = vmul.f32 %v2758, %v2725
  %v2790 = vmul.f32 %v2758, %v2726
  %v2791 = vmul.f32 %v2758, %v2727
  %v2792 = vmul.f32 %v2762, %v2728
  %v2793 = vmul.f32 %v2762, %v2729
  %v2794 = vmul.f32 %v2762, %v2730
  %v2795 = vmul.f32 %v2762, %v2731
  %v2796 = vmul.f32 %v2766, %v2732
  %v2797 = vmul.f32 %v2766, %v2733
  %v2798 = vmul.f32 %v2766, %v2734
  %v2799 = vmul.f32 %v2766, %v2735
  %v2800 = vmul.f32 %v2770, %v2736
  %v2801 = vmul.f32 %v2770, %v2737
  %v2802 = vmul.f32 %v2770, %v2738
  %v2803 = vmul.f32 %v2770, %v2739
  %v2804 = vmul.f32 %v2774, %v2740
  %v2805 = vmul.f32 %v2774, %v2741
  %v2806 = vmul.f32 %v2774, %v2742
  %v2807 = vmul.f32 %v2774, %v2743
  %v2808 = vmul.f32 %v2778, %v2744
  %v2809 = vmul.f32 %v2778, %v2745
  %v2810 = vmul.f32 %v2778, %v2746
  %v2811 = vmul.f32 %v2778, %v2747
  %v2812 = vadd.f32 %v2531, %v2780
  %v2813 = vadd.f32 %v2532, %v2781
  %v2814 = vadd.f32 %v2533, %v2782
  %v2815 = vadd.f32 %v2534, %v2783
  %v2816 = vadd.f32 %v2535, %v2784
  %v2817 = vadd.f32 %v2536, %v2785
  %v2818 = vadd.f32 %v2537, %v2786
  %v2819 = vadd.f32 %v2538, %v2787
  %v2820 = vadd.f32 %v2539, %v2788
  %v2821 = vadd.f32 %v2540, %v2789
  %v2822 = vadd.f32 %v2541, %v2790
  %v2823 = vadd.f32 %v2542, %v2791
  %v2824 = vadd.f32 %v2543, %v2792
  %v2825 = vadd.f32 %v2544, %v2793
  %v2826 = vadd.f32 %v2545, %v2794
  %v2827 = vadd.f32 %v2546, %v2795
  %v2828 = vadd.f32 %v2547, %v2796
  %v2829 = vadd.f32 %v2548, %v2797
  %v2830 = vadd.f32 %v2549, %v2798
  %v2831 = vadd.f32 %v2550, %v2799
  %v2832 = vadd.f32 %v2551, %v2800
  %v2833 = vadd.f32 %v2552, %v2801
  %v2834 = vadd.f32 %v2553, %v2802
  %v2835 = vadd.f32 %v2554, %v2803
  %v2836 = vadd.f32 %v2555, %v2804
  %v2837 = vadd.f32 %v2556, %v2805
  %v2838 = vadd.f32 %v2557, %v2806
  %v2839 = vadd.f32 %v2558, %v2807
  %v2840 = vadd.f32 %v2559, %v2808
  %v2841 = vadd.f32 %v2560, %v2809
  %v2842 = vadd.f32 %v2561, %v2810
  %v2843 = vadd.f32 %v2562, %v2811
  %2844 = vrot.lane.b32.xlu0 %v1528, 127
  %v2845 = vpop.permute.xlu0 %2844
  %2846 = vrot.lane.b32.xlu0 %v1529, 127
  %v2847 = vpop.permute.xlu0 %2846
  %2848 = vrot.lane.b32.xlu0 %v1530, 127
  %v2849 = vpop.permute.xlu0 %2848
  %2850 = vrot.lane.b32.xlu0 %v1531, 127
  %v2851 = vpop.permute.xlu0 %2850
  %2852 = vrot.lane.b32.xlu0 %v1532, 127
  %v2853 = vpop.permute.xlu0 %2852
  %2854 = vrot.lane.b32.xlu0 %v1533, 127
  %v2855 = vpop.permute.xlu0 %2854
  %2856 = vrot.lane.b32.xlu0 %v1534, 127
  %v2857 = vpop.permute.xlu0 %2856
  %2858 = vrot.lane.b32.xlu0 %v1535, 127
  %v2859 = vpop.permute.xlu0 %2858
  %2860 = vrot.lane.b32.xlu0 %v1536, 127
  %v2861 = vpop.permute.xlu0 %2860
  %2862 = vrot.lane.b32.xlu0 %v1537, 127
  %v2863 = vpop.permute.xlu0 %2862
  %2864 = vrot.lane.b32.xlu0 %v1538, 127
  %v2865 = vpop.permute.xlu0 %2864
  %2866 = vrot.lane.b32.xlu0 %v1539, 127
  %v2867 = vpop.permute.xlu0 %2866
  %2868 = vrot.lane.b32.xlu0 %v1540, 127
  %v2869 = vpop.permute.xlu0 %2868
  %2870 = vrot.lane.b32.xlu0 %v1541, 127
  %v2871 = vpop.permute.xlu0 %2870
  %2872 = vrot.lane.b32.xlu0 %v1542, 127
  %v2873 = vpop.permute.xlu0 %2872
  %2874 = vrot.lane.b32.xlu0 %v1543, 127
  %v2875 = vpop.permute.xlu0 %2874
  %2876 = vrot.lane.b32.xlu0 %v1544, 127
  %v2877 = vpop.permute.xlu0 %2876
  %2878 = vrot.lane.b32.xlu0 %v1545, 127
  %v2879 = vpop.permute.xlu0 %2878
  %2880 = vrot.lane.b32.xlu0 %v1546, 127
  %v2881 = vpop.permute.xlu0 %2880
  %2882 = vrot.lane.b32.xlu0 %v1547, 127
  %v2883 = vpop.permute.xlu0 %2882
  %2884 = vrot.lane.b32.xlu0 %v1548, 127
  %v2885 = vpop.permute.xlu0 %2884
  %2886 = vrot.lane.b32.xlu0 %v1549, 127
  %v2887 = vpop.permute.xlu0 %2886
  %2888 = vrot.lane.b32.xlu0 %v1550, 127
  %v2889 = vpop.permute.xlu0 %2888
  %2890 = vrot.lane.b32.xlu0 %v1551, 127
  %v2891 = vpop.permute.xlu0 %2890
  %2892 = vrot.lane.b32.xlu0 %v1552, 127
  %v2893 = vpop.permute.xlu0 %2892
  %2894 = vrot.lane.b32.xlu0 %v1553, 127
  %v2895 = vpop.permute.xlu0 %2894
  %2896 = vrot.lane.b32.xlu0 %v1554, 127
  %v2897 = vpop.permute.xlu0 %2896
  %2898 = vrot.lane.b32.xlu0 %v1555, 127
  %v2899 = vpop.permute.xlu0 %2898
  %2900 = vrot.lane.b32.xlu0 %v1556, 127
  %v2901 = vpop.permute.xlu0 %2900
  %2902 = vrot.lane.b32.xlu0 %v1557, 127
  %v2903 = vpop.permute.xlu0 %2902
  %2904 = vrot.lane.b32.xlu0 %v1558, 127
  %v2905 = vpop.permute.xlu0 %2904
  %2906 = vrot.lane.b32.xlu0 %v1559, 127
  %v2907 = vpop.permute.xlu0 %2906
  %vm2908 = vcmask 1039360
  %v2909 = vsel %vm2908, %v2845, %v2847
  %v2910 = vsel %vm2908, %v2847, %v2849
  %v2911 = vsel %vm2908, %v2849, %v2851
  %v2912 = vsel %vm2908, %v2853, %v2855
  %v2913 = vsel %vm2908, %v2855, %v2857
  %v2914 = vsel %vm2908, %v2857, %v2859
  %v2915 = vsel %vm2908, %v2861, %v2863
  %v2916 = vsel %vm2908, %v2863, %v2865
  %v2917 = vsel %vm2908, %v2865, %v2867
  %v2918 = vsel %vm2908, %v2869, %v2871
  %v2919 = vsel %vm2908, %v2871, %v2873
  %v2920 = vsel %vm2908, %v2873, %v2875
  %v2921 = vsel %vm2908, %v2877, %v2879
  %v2922 = vsel %vm2908, %v2879, %v2881
  %v2923 = vsel %vm2908, %v2881, %v2883
  %v2924 = vsel %vm2908, %v2885, %v2887
  %v2925 = vsel %vm2908, %v2887, %v2889
  %v2926 = vsel %vm2908, %v2889, %v2891
  %v2927 = vsel %vm2908, %v2893, %v2895
  %v2928 = vsel %vm2908, %v2895, %v2897
  %v2929 = vsel %vm2908, %v2897, %v2899
  %v2930 = vsel %vm2908, %v2901, %v2903
  %v2931 = vsel %vm2908, %v2903, %v2905
  %v2932 = vsel %vm2908, %v2905, %v2907
  %v2973 = vsel %vm2908, %v2851, %v2845
  %v2974 = vsel %vm2908, %v2859, %v2853
  %v2975 = vsel %vm2908, %v2867, %v2861
  %v2976 = vsel %vm2908, %v2875, %v2869
  %v2977 = vsel %vm2908, %v2883, %v2877
  %v2978 = vsel %vm2908, %v2891, %v2885
  %v2979 = vsel %vm2908, %v2899, %v2893
  %v2980 = vsel %vm2908, %v2907, %v2901
  %v2981 = vlaneseq
  %v2982 = vshrl.u32 %v2981, 7
  %v2983 = vsub.s32 4, %v2982
  %v2984 = vrot.slane %v123, %v2983
  %v2985 = vlaneseq
  %v2986 = vshrl.u32 %v2985, 7
  %v2987 = vsub.s32 4, %v2986
  %v2988 = vrot.slane %v124, %v2987
  %v2989 = vlaneseq
  %v2990 = vshrl.u32 %v2989, 7
  %v2991 = vsub.s32 4, %v2990
  %v2992 = vrot.slane %v125, %v2991
  %v2993 = vlaneseq
  %v2994 = vshrl.u32 %v2993, 7
  %v2995 = vsub.s32 4, %v2994
  %v2996 = vrot.slane %v126, %v2995
  %v2997 = vmul.f32 %v2984, %v2909
  %v2998 = vmul.f32 %v2988, %v2910
  %v2999 = vmul.f32 %v2992, %v2911
  %v3000 = vmul.f32 %v2996, %v2973
  %v3001 = vmul.f32 %v2984, %v2912
  %v3002 = vmul.f32 %v2988, %v2913
  %v3003 = vmul.f32 %v2992, %v2914
  %v3004 = vmul.f32 %v2996, %v2974
  %v3005 = vmul.f32 %v2984, %v2915
  %v3006 = vmul.f32 %v2988, %v2916
  %v3007 = vmul.f32 %v2992, %v2917
  %v3008 = vmul.f32 %v2996, %v2975
  %v3009 = vmul.f32 %v2984, %v2918
  %v3010 = vmul.f32 %v2988, %v2919
  %v3011 = vmul.f32 %v2992, %v2920
  %v3012 = vmul.f32 %v2996, %v2976
  %v3013 = vmul.f32 %v2984, %v2921
  %v3014 = vmul.f32 %v2988, %v2922
  %v3015 = vmul.f32 %v2992, %v2923
  %v3016 = vmul.f32 %v2996, %v2977
  %v3017 = vmul.f32 %v2984, %v2924
  %v3018 = vmul.f32 %v2988, %v2925
  %v3019 = vmul.f32 %v2992, %v2926
  %v3020 = vmul.f32 %v2996, %v2978
  %v3021 = vmul.f32 %v2984, %v2927
  %v3022 = vmul.f32 %v2988, %v2928
  %v3023 = vmul.f32 %v2992, %v2929
  %v3024 = vmul.f32 %v2996, %v2979
  %v3025 = vmul.f32 %v2984, %v2930
  %v3026 = vmul.f32 %v2988, %v2931
  %v3027 = vmul.f32 %v2992, %v2932
  %v3028 = vmul.f32 %v2996, %v2980
  %3029 = vset.pattern.permute.xlu0 9
  %3030 = vperm.xlu0 %3029, %v87
  %v3031 = vpop.permute.xlu0 %3030
  %3033 = vset.pattern.permute.xlu0 9
  %3034 = vperm.xlu0 %3033, %v88
  %v3035 = vpop.permute.xlu0 %3034
  %3037 = vset.pattern.permute.xlu0 9
  %3038 = vperm.xlu0 %3037, %v89
  %v3039 = vpop.permute.xlu0 %3038
  %3041 = vset.pattern.permute.xlu0 9
  %3042 = vperm.xlu0 %3041, %v90
  %v3043 = vpop.permute.xlu0 %3042
  %3045 = vset.pattern.permute.xlu0 9
  %3046 = vperm.xlu0 %3045, %v91
  %v3047 = vpop.permute.xlu0 %3046
  %3049 = vset.pattern.permute.xlu0 9
  %3050 = vperm.xlu0 %3049, %v92
  %v3051 = vpop.permute.xlu0 %3050
  %3053 = vset.pattern.permute.xlu0 9
  %3054 = vperm.xlu0 %3053, %v93
  %v3055 = vpop.permute.xlu0 %3054
  %3057 = vset.pattern.permute.xlu0 9
  %3058 = vperm.xlu0 %3057, %v94
  %v3059 = vpop.permute.xlu0 %3058
  %v3061 = vmul.f32 %v3031, %v2997
  %v3062 = vmul.f32 %v3031, %v2998
  %v3063 = vmul.f32 %v3031, %v2999
  %v3064 = vmul.f32 %v3031, %v3000
  %v3065 = vmul.f32 %v3035, %v3001
  %v3066 = vmul.f32 %v3035, %v3002
  %v3067 = vmul.f32 %v3035, %v3003
  %v3068 = vmul.f32 %v3035, %v3004
  %v3069 = vmul.f32 %v3039, %v3005
  %v3070 = vmul.f32 %v3039, %v3006
  %v3071 = vmul.f32 %v3039, %v3007
  %v3072 = vmul.f32 %v3039, %v3008
  %v3073 = vmul.f32 %v3043, %v3009
  %v3074 = vmul.f32 %v3043, %v3010
  %v3075 = vmul.f32 %v3043, %v3011
  %v3076 = vmul.f32 %v3043, %v3012
  %v3077 = vmul.f32 %v3047, %v3013
  %v3078 = vmul.f32 %v3047, %v3014
  %v3079 = vmul.f32 %v3047, %v3015
  %v3080 = vmul.f32 %v3047, %v3016
  %v3081 = vmul.f32 %v3051, %v3017
  %v3082 = vmul.f32 %v3051, %v3018
  %v3083 = vmul.f32 %v3051, %v3019
  %v3084 = vmul.f32 %v3051, %v3020
  %v3085 = vmul.f32 %v3055, %v3021
  %v3086 = vmul.f32 %v3055, %v3022
  %v3087 = vmul.f32 %v3055, %v3023
  %v3088 = vmul.f32 %v3055, %v3024
  %v3089 = vmul.f32 %v3059, %v3025
  %v3090 = vmul.f32 %v3059, %v3026
  %v3091 = vmul.f32 %v3059, %v3027
  %v3092 = vmul.f32 %v3059, %v3028
  %v3093 = vadd.f32 %v2812, %v3061
  %v3094 = vadd.f32 %v2813, %v3062
  %v3095 = vadd.f32 %v2814, %v3063
  %v3096 = vadd.f32 %v2815, %v3064
  %v3097 = vadd.f32 %v2816, %v3065
  %v3098 = vadd.f32 %v2817, %v3066
  %v3099 = vadd.f32 %v2818, %v3067
  %v3100 = vadd.f32 %v2819, %v3068
  %v3101 = vadd.f32 %v2820, %v3069
  %v3102 = vadd.f32 %v2821, %v3070
  %v3103 = vadd.f32 %v2822, %v3071
  %v3104 = vadd.f32 %v2823, %v3072
  %v3105 = vadd.f32 %v2824, %v3073
  %v3106 = vadd.f32 %v2825, %v3074
  %v3107 = vadd.f32 %v2826, %v3075
  %v3108 = vadd.f32 %v2827, %v3076
  %v3109 = vadd.f32 %v2828, %v3077
  %v3110 = vadd.f32 %v2829, %v3078
  %v3111 = vadd.f32 %v2830, %v3079
  %v3112 = vadd.f32 %v2831, %v3080
  %v3113 = vadd.f32 %v2832, %v3081
  %v3114 = vadd.f32 %v2833, %v3082
  %v3115 = vadd.f32 %v2834, %v3083
  %v3116 = vadd.f32 %v2835, %v3084
  %v3117 = vadd.f32 %v2836, %v3085
  %v3118 = vadd.f32 %v2837, %v3086
  %v3119 = vadd.f32 %v2838, %v3087
  %v3120 = vadd.f32 %v2839, %v3088
  %v3121 = vadd.f32 %v2840, %v3089
  %v3122 = vadd.f32 %v2841, %v3090
  %v3123 = vadd.f32 %v2842, %v3091
  %v3124 = vadd.f32 %v2843, %v3092
  %3125 = vrot.lane.b32.xlu0 %v1528, 113
  %v3126 = vpop.permute.xlu0 %3125
  %3127 = vrot.lane.b32.xlu0 %v1529, 113
  %v3128 = vpop.permute.xlu0 %3127
  %3129 = vrot.lane.b32.xlu0 %v1530, 113
  %v3130 = vpop.permute.xlu0 %3129
  %3131 = vrot.lane.b32.xlu0 %v1531, 113
  %v3132 = vpop.permute.xlu0 %3131
  %3133 = vrot.lane.b32.xlu0 %v1532, 113
  %v3134 = vpop.permute.xlu0 %3133
  %3135 = vrot.lane.b32.xlu0 %v1533, 113
  %v3136 = vpop.permute.xlu0 %3135
  %3137 = vrot.lane.b32.xlu0 %v1534, 113
  %v3138 = vpop.permute.xlu0 %3137
  %3139 = vrot.lane.b32.xlu0 %v1535, 113
  %v3140 = vpop.permute.xlu0 %3139
  %3141 = vrot.lane.b32.xlu0 %v1536, 113
  %v3142 = vpop.permute.xlu0 %3141
  %3143 = vrot.lane.b32.xlu0 %v1537, 113
  %v3144 = vpop.permute.xlu0 %3143
  %3145 = vrot.lane.b32.xlu0 %v1538, 113
  %v3146 = vpop.permute.xlu0 %3145
  %3147 = vrot.lane.b32.xlu0 %v1539, 113
  %v3148 = vpop.permute.xlu0 %3147
  %3149 = vrot.lane.b32.xlu0 %v1540, 113
  %v3150 = vpop.permute.xlu0 %3149
  %3151 = vrot.lane.b32.xlu0 %v1541, 113
  %v3152 = vpop.permute.xlu0 %3151
  %3153 = vrot.lane.b32.xlu0 %v1542, 113
  %v3154 = vpop.permute.xlu0 %3153
  %3155 = vrot.lane.b32.xlu0 %v1543, 113
  %v3156 = vpop.permute.xlu0 %3155
  %3157 = vrot.lane.b32.xlu0 %v1544, 113
  %v3158 = vpop.permute.xlu0 %3157
  %3159 = vrot.lane.b32.xlu0 %v1545, 113
  %v3160 = vpop.permute.xlu0 %3159
  %3161 = vrot.lane.b32.xlu0 %v1546, 113
  %v3162 = vpop.permute.xlu0 %3161
  %3163 = vrot.lane.b32.xlu0 %v1547, 113
  %v3164 = vpop.permute.xlu0 %3163
  %3165 = vrot.lane.b32.xlu0 %v1548, 113
  %v3166 = vpop.permute.xlu0 %3165
  %3167 = vrot.lane.b32.xlu0 %v1549, 113
  %v3168 = vpop.permute.xlu0 %3167
  %3169 = vrot.lane.b32.xlu0 %v1550, 113
  %v3170 = vpop.permute.xlu0 %3169
  %3171 = vrot.lane.b32.xlu0 %v1551, 113
  %v3172 = vpop.permute.xlu0 %3171
  %3173 = vrot.lane.b32.xlu0 %v1552, 113
  %v3174 = vpop.permute.xlu0 %3173
  %3175 = vrot.lane.b32.xlu0 %v1553, 113
  %v3176 = vpop.permute.xlu0 %3175
  %3177 = vrot.lane.b32.xlu0 %v1554, 113
  %v3178 = vpop.permute.xlu0 %3177
  %3179 = vrot.lane.b32.xlu0 %v1555, 113
  %v3180 = vpop.permute.xlu0 %3179
  %3181 = vrot.lane.b32.xlu0 %v1556, 113
  %v3182 = vpop.permute.xlu0 %3181
  %3183 = vrot.lane.b32.xlu0 %v1557, 113
  %v3184 = vpop.permute.xlu0 %3183
  %3185 = vrot.lane.b32.xlu0 %v1558, 113
  %v3186 = vpop.permute.xlu0 %3185
  %3187 = vrot.lane.b32.xlu0 %v1559, 113
  %v3188 = vpop.permute.xlu0 %3187
  %vm3189 = vcmask 924672
  %v3190 = vsel %vm3189, %v3126, %v3128
  %v3191 = vsel %vm3189, %v3128, %v3130
  %v3192 = vsel %vm3189, %v3130, %v3132
  %v3193 = vsel %vm3189, %v3134, %v3136
  %v3194 = vsel %vm3189, %v3136, %v3138
  %v3195 = vsel %vm3189, %v3138, %v3140
  %v3196 = vsel %vm3189, %v3142, %v3144
  %v3197 = vsel %vm3189, %v3144, %v3146
  %v3198 = vsel %vm3189, %v3146, %v3148
  %v3199 = vsel %vm3189, %v3150, %v3152
  %v3200 = vsel %vm3189, %v3152, %v3154
  %v3201 = vsel %vm3189, %v3154, %v3156
  %v3202 = vsel %vm3189, %v3158, %v3160
  %v3203 = vsel %vm3189, %v3160, %v3162
  %v3204 = vsel %vm3189, %v3162, %v3164
  %v3205 = vsel %vm3189, %v3166, %v3168
  %v3206 = vsel %vm3189, %v3168, %v3170
  %v3207 = vsel %vm3189, %v3170, %v3172
  %v3208 = vsel %vm3189, %v3174, %v3176
  %v3209 = vsel %vm3189, %v3176, %v3178
  %v3210 = vsel %vm3189, %v3178, %v3180
  %v3211 = vsel %vm3189, %v3182, %v3184
  %v3212 = vsel %vm3189, %v3184, %v3186
  %v3213 = vsel %vm3189, %v3186, %v3188
  %v3254 = vsel %vm3189, %v3132, %v3126
  %v3255 = vsel %vm3189, %v3140, %v3134
  %v3256 = vsel %vm3189, %v3148, %v3142
  %v3257 = vsel %vm3189, %v3156, %v3150
  %v3258 = vsel %vm3189, %v3164, %v3158
  %v3259 = vsel %vm3189, %v3172, %v3166
  %v3260 = vsel %vm3189, %v3180, %v3174
  %v3261 = vsel %vm3189, %v3188, %v3182
  %v3262 = vlaneseq
  %v3263 = vshrl.u32 %v3262, 7
  %v3264 = vsub.s32 5, %v3263
  %v3265 = vrot.slane %v123, %v3264
  %v3266 = vlaneseq
  %v3267 = vshrl.u32 %v3266, 7
  %v3268 = vsub.s32 5, %v3267
  %v3269 = vrot.slane %v124, %v3268
  %v3270 = vlaneseq
  %v3271 = vshrl.u32 %v3270, 7
  %v3272 = vsub.s32 5, %v3271
  %v3273 = vrot.slane %v125, %v3272
  %v3274 = vlaneseq
  %v3275 = vshrl.u32 %v3274, 7
  %v3276 = vsub.s32 5, %v3275
  %v3277 = vrot.slane %v126, %v3276
  %v3278 = vmul.f32 %v3265, %v3190
  %v3279 = vmul.f32 %v3269, %v3191
  %v3280 = vmul.f32 %v3273, %v3192
  %v3281 = vmul.f32 %v3277, %v3254
  %v3282 = vmul.f32 %v3265, %v3193
  %v3283 = vmul.f32 %v3269, %v3194
  %v3284 = vmul.f32 %v3273, %v3195
  %v3285 = vmul.f32 %v3277, %v3255
  %v3286 = vmul.f32 %v3265, %v3196
  %v3287 = vmul.f32 %v3269, %v3197
  %v3288 = vmul.f32 %v3273, %v3198
  %v3289 = vmul.f32 %v3277, %v3256
  %v3290 = vmul.f32 %v3265, %v3199
  %v3291 = vmul.f32 %v3269, %v3200
  %v3292 = vmul.f32 %v3273, %v3201
  %v3293 = vmul.f32 %v3277, %v3257
  %v3294 = vmul.f32 %v3265, %v3202
  %v3295 = vmul.f32 %v3269, %v3203
  %v3296 = vmul.f32 %v3273, %v3204
  %v3297 = vmul.f32 %v3277, %v3258
  %v3298 = vmul.f32 %v3265, %v3205
  %v3299 = vmul.f32 %v3269, %v3206
  %v3300 = vmul.f32 %v3273, %v3207
  %v3301 = vmul.f32 %v3277, %v3259
  %v3302 = vmul.f32 %v3265, %v3208
  %v3303 = vmul.f32 %v3269, %v3209
  %v3304 = vmul.f32 %v3273, %v3210
  %v3305 = vmul.f32 %v3277, %v3260
  %v3306 = vmul.f32 %v3265, %v3211
  %v3307 = vmul.f32 %v3269, %v3212
  %v3308 = vmul.f32 %v3273, %v3213
  %v3309 = vmul.f32 %v3277, %v3261
  %3310 = vset.pattern.permute.xlu0 10
  %3311 = vperm.xlu0 %3310, %v87
  %v3312 = vpop.permute.xlu0 %3311
  %3314 = vset.pattern.permute.xlu0 10
  %3315 = vperm.xlu0 %3314, %v88
  %v3316 = vpop.permute.xlu0 %3315
  %3318 = vset.pattern.permute.xlu0 10
  %3319 = vperm.xlu0 %3318, %v89
  %v3320 = vpop.permute.xlu0 %3319
  %3322 = vset.pattern.permute.xlu0 10
  %3323 = vperm.xlu0 %3322, %v90
  %v3324 = vpop.permute.xlu0 %3323
  %3326 = vset.pattern.permute.xlu0 10
  %3327 = vperm.xlu0 %3326, %v91
  %v3328 = vpop.permute.xlu0 %3327
  %3330 = vset.pattern.permute.xlu0 10
  %3331 = vperm.xlu0 %3330, %v92
  %v3332 = vpop.permute.xlu0 %3331
  %3334 = vset.pattern.permute.xlu0 10
  %3335 = vperm.xlu0 %3334, %v93
  %v3336 = vpop.permute.xlu0 %3335
  %3338 = vset.pattern.permute.xlu0 10
  %3339 = vperm.xlu0 %3338, %v94
  %v3340 = vpop.permute.xlu0 %3339
  %v3342 = vmul.f32 %v3312, %v3278
  %v3343 = vmul.f32 %v3312, %v3279
  %v3344 = vmul.f32 %v3312, %v3280
  %v3345 = vmul.f32 %v3312, %v3281
  %v3346 = vmul.f32 %v3316, %v3282
  %v3347 = vmul.f32 %v3316, %v3283
  %v3348 = vmul.f32 %v3316, %v3284
  %v3349 = vmul.f32 %v3316, %v3285
  %v3350 = vmul.f32 %v3320, %v3286
  %v3351 = vmul.f32 %v3320, %v3287
  %v3352 = vmul.f32 %v3320, %v3288
  %v3353 = vmul.f32 %v3320, %v3289
  %v3354 = vmul.f32 %v3324, %v3290
  %v3355 = vmul.f32 %v3324, %v3291
  %v3356 = vmul.f32 %v3324, %v3292
  %v3357 = vmul.f32 %v3324, %v3293
  %v3358 = vmul.f32 %v3328, %v3294
  %v3359 = vmul.f32 %v3328, %v3295
  %v3360 = vmul.f32 %v3328, %v3296
  %v3361 = vmul.f32 %v3328, %v3297
  %v3362 = vmul.f32 %v3332, %v3298
  %v3363 = vmul.f32 %v3332, %v3299
  %v3364 = vmul.f32 %v3332, %v3300
  %v3365 = vmul.f32 %v3332, %v3301
  %v3366 = vmul.f32 %v3336, %v3302
  %v3367 = vmul.f32 %v3336, %v3303
  %v3368 = vmul.f32 %v3336, %v3304
  %v3369 = vmul.f32 %v3336, %v3305
  %v3370 = vmul.f32 %v3340, %v3306
  %v3371 = vmul.f32 %v3340, %v3307
  %v3372 = vmul.f32 %v3340, %v3308
  %v3373 = vmul.f32 %v3340, %v3309
  %v3374 = vadd.f32 %v3093, %v3342
  %v3375 = vadd.f32 %v3094, %v3343
  %v3376 = vadd.f32 %v3095, %v3344
  %v3377 = vadd.f32 %v3096, %v3345
  %v3378 = vadd.f32 %v3097, %v3346
  %v3379 = vadd.f32 %v3098, %v3347
  %v3380 = vadd.f32 %v3099, %v3348
  %v3381 = vadd.f32 %v3100, %v3349
  %v3382 = vadd.f32 %v3101, %v3350
  %v3383 = vadd.f32 %v3102, %v3351
  %v3384 = vadd.f32 %v3103, %v3352
  %v3385 = vadd.f32 %v3104, %v3353
  %v3386 = vadd.f32 %v3105, %v3354
  %v3387 = vadd.f32 %v3106, %v3355
  %v3388 = vadd.f32 %v3107, %v3356
  %v3389 = vadd.f32 %v3108, %v3357
  %v3390 = vadd.f32 %v3109, %v3358
  %v3391 = vadd.f32 %v3110, %v3359
  %v3392 = vadd.f32 %v3111, %v3360
  %v3393 = vadd.f32 %v3112, %v3361
  %v3394 = vadd.f32 %v3113, %v3362
  %v3395 = vadd.f32 %v3114, %v3363
  %v3396 = vadd.f32 %v3115, %v3364
  %v3397 = vadd.f32 %v3116, %v3365
  %v3398 = vadd.f32 %v3117, %v3366
  %v3399 = vadd.f32 %v3118, %v3367
  %v3400 = vadd.f32 %v3119, %v3368
  %v3401 = vadd.f32 %v3120, %v3369
  %v3402 = vadd.f32 %v3121, %v3370
  %v3403 = vadd.f32 %v3122, %v3371
  %v3404 = vadd.f32 %v3123, %v3372
  %v3405 = vadd.f32 %v3124, %v3373
  %3406 = vrot.lane.b32.xlu0 %v1528, 112
  %v3407 = vpop.permute.xlu0 %3406
  %3408 = vrot.lane.b32.xlu0 %v1529, 112
  %v3409 = vpop.permute.xlu0 %3408
  %3410 = vrot.lane.b32.xlu0 %v1530, 112
  %v3411 = vpop.permute.xlu0 %3410
  %3412 = vrot.lane.b32.xlu0 %v1531, 112
  %v3413 = vpop.permute.xlu0 %3412
  %3414 = vrot.lane.b32.xlu0 %v1532, 112
  %v3415 = vpop.permute.xlu0 %3414
  %3416 = vrot.lane.b32.xlu0 %v1533, 112
  %v3417 = vpop.permute.xlu0 %3416
  %3418 = vrot.lane.b32.xlu0 %v1534, 112
  %v3419 = vpop.permute.xlu0 %3418
  %3420 = vrot.lane.b32.xlu0 %v1535, 112
  %v3421 = vpop.permute.xlu0 %3420
  %3422 = vrot.lane.b32.xlu0 %v1536, 112
  %v3423 = vpop.permute.xlu0 %3422
  %3424 = vrot.lane.b32.xlu0 %v1537, 112
  %v3425 = vpop.permute.xlu0 %3424
  %3426 = vrot.lane.b32.xlu0 %v1538, 112
  %v3427 = vpop.permute.xlu0 %3426
  %3428 = vrot.lane.b32.xlu0 %v1539, 112
  %v3429 = vpop.permute.xlu0 %3428
  %3430 = vrot.lane.b32.xlu0 %v1540, 112
  %v3431 = vpop.permute.xlu0 %3430
  %3432 = vrot.lane.b32.xlu0 %v1541, 112
  %v3433 = vpop.permute.xlu0 %3432
  %3434 = vrot.lane.b32.xlu0 %v1542, 112
  %v3435 = vpop.permute.xlu0 %3434
  %3436 = vrot.lane.b32.xlu0 %v1543, 112
  %v3437 = vpop.permute.xlu0 %3436
  %3438 = vrot.lane.b32.xlu0 %v1544, 112
  %v3439 = vpop.permute.xlu0 %3438
  %3440 = vrot.lane.b32.xlu0 %v1545, 112
  %v3441 = vpop.permute.xlu0 %3440
  %3442 = vrot.lane.b32.xlu0 %v1546, 112
  %v3443 = vpop.permute.xlu0 %3442
  %3444 = vrot.lane.b32.xlu0 %v1547, 112
  %v3445 = vpop.permute.xlu0 %3444
  %3446 = vrot.lane.b32.xlu0 %v1548, 112
  %v3447 = vpop.permute.xlu0 %3446
  %3448 = vrot.lane.b32.xlu0 %v1549, 112
  %v3449 = vpop.permute.xlu0 %3448
  %3450 = vrot.lane.b32.xlu0 %v1550, 112
  %v3451 = vpop.permute.xlu0 %3450
  %3452 = vrot.lane.b32.xlu0 %v1551, 112
  %v3453 = vpop.permute.xlu0 %3452
  %3454 = vrot.lane.b32.xlu0 %v1552, 112
  %v3455 = vpop.permute.xlu0 %3454
  %3456 = vrot.lane.b32.xlu0 %v1553, 112
  %v3457 = vpop.permute.xlu0 %3456
  %3458 = vrot.lane.b32.xlu0 %v1554, 112
  %v3459 = vpop.permute.xlu0 %3458
  %3460 = vrot.lane.b32.xlu0 %v1555, 112
  %v3461 = vpop.permute.xlu0 %3460
  %3462 = vrot.lane.b32.xlu0 %v1556, 112
  %v3463 = vpop.permute.xlu0 %3462
  %3464 = vrot.lane.b32.xlu0 %v1557, 112
  %v3465 = vpop.permute.xlu0 %3464
  %3466 = vrot.lane.b32.xlu0 %v1558, 112
  %v3467 = vpop.permute.xlu0 %3466
  %3468 = vrot.lane.b32.xlu0 %v1559, 112
  %v3469 = vpop.permute.xlu0 %3468
  %vm3470 = vcmask 916480
  %v3471 = vsel %vm3470, %v3407, %v3409
  %v3472 = vsel %vm3470, %v3409, %v3411
  %v3473 = vsel %vm3470, %v3411, %v3413
  %v3474 = vsel %vm3470, %v3415, %v3417
  %v3475 = vsel %vm3470, %v3417, %v3419
  %v3476 = vsel %vm3470, %v3419, %v3421
  %v3477 = vsel %vm3470, %v3423, %v3425
  %v3478 = vsel %vm3470, %v3425, %v3427
  %v3479 = vsel %vm3470, %v3427, %v3429
  %v3480 = vsel %vm3470, %v3431, %v3433
  %v3481 = vsel %vm3470, %v3433, %v3435
  %v3482 = vsel %vm3470, %v3435, %v3437
  %v3483 = vsel %vm3470, %v3439, %v3441
  %v3484 = vsel %vm3470, %v3441, %v3443
  %v3485 = vsel %vm3470, %v3443, %v3445
  %v3486 = vsel %vm3470, %v3447, %v3449
  %v3487 = vsel %vm3470, %v3449, %v3451
  %v3488 = vsel %vm3470, %v3451, %v3453
  %v3489 = vsel %vm3470, %v3455, %v3457
  %v3490 = vsel %vm3470, %v3457, %v3459
  %v3491 = vsel %vm3470, %v3459, %v3461
  %v3492 = vsel %vm3470, %v3463, %v3465
  %v3493 = vsel %vm3470, %v3465, %v3467
  %v3494 = vsel %vm3470, %v3467, %v3469
  %v3535 = vsel %vm3470, %v3413, %v3407
  %v3536 = vsel %vm3470, %v3421, %v3415
  %v3537 = vsel %vm3470, %v3429, %v3423
  %v3538 = vsel %vm3470, %v3437, %v3431
  %v3539 = vsel %vm3470, %v3445, %v3439
  %v3540 = vsel %vm3470, %v3453, %v3447
  %v3541 = vsel %vm3470, %v3461, %v3455
  %v3542 = vsel %vm3470, %v3469, %v3463
  %v3543 = vlaneseq
  %v3544 = vshrl.u32 %v3543, 7
  %v3545 = vsub.s32 6, %v3544
  %v3546 = vrot.slane %v123, %v3545
  %v3547 = vlaneseq
  %v3548 = vshrl.u32 %v3547, 7
  %v3549 = vsub.s32 6, %v3548
  %v3550 = vrot.slane %v124, %v3549
  %v3551 = vlaneseq
  %v3552 = vshrl.u32 %v3551, 7
  %v3553 = vsub.s32 6, %v3552
  %v3554 = vrot.slane %v125, %v3553
  %v3555 = vlaneseq
  %v3556 = vshrl.u32 %v3555, 7
  %v3557 = vsub.s32 6, %v3556
  %v3558 = vrot.slane %v126, %v3557
  %v3559 = vmul.f32 %v3546, %v3471
  %v3560 = vmul.f32 %v3550, %v3472
  %v3561 = vmul.f32 %v3554, %v3473
  %v3562 = vmul.f32 %v3558, %v3535
  %v3563 = vmul.f32 %v3546, %v3474
  %v3564 = vmul.f32 %v3550, %v3475
  %v3565 = vmul.f32 %v3554, %v3476
  %v3566 = vmul.f32 %v3558, %v3536
  %v3567 = vmul.f32 %v3546, %v3477
  %v3568 = vmul.f32 %v3550, %v3478
  %v3569 = vmul.f32 %v3554, %v3479
  %v3570 = vmul.f32 %v3558, %v3537
  %v3571 = vmul.f32 %v3546, %v3480
  %v3572 = vmul.f32 %v3550, %v3481
  %v3573 = vmul.f32 %v3554, %v3482
  %v3574 = vmul.f32 %v3558, %v3538
  %v3575 = vmul.f32 %v3546, %v3483
  %v3576 = vmul.f32 %v3550, %v3484
  %v3577 = vmul.f32 %v3554, %v3485
  %v3578 = vmul.f32 %v3558, %v3539
  %v3579 = vmul.f32 %v3546, %v3486
  %v3580 = vmul.f32 %v3550, %v3487
  %v3581 = vmul.f32 %v3554, %v3488
  %v3582 = vmul.f32 %v3558, %v3540
  %v3583 = vmul.f32 %v3546, %v3489
  %v3584 = vmul.f32 %v3550, %v3490
  %v3585 = vmul.f32 %v3554, %v3491
  %v3586 = vmul.f32 %v3558, %v3541
  %v3587 = vmul.f32 %v3546, %v3492
  %v3588 = vmul.f32 %v3550, %v3493
  %v3589 = vmul.f32 %v3554, %v3494
  %v3590 = vmul.f32 %v3558, %v3542
  %3591 = vset.pattern.permute.xlu0 11
  %3592 = vperm.xlu0 %3591, %v87
  %v3593 = vpop.permute.xlu0 %3592
  %3595 = vset.pattern.permute.xlu0 11
  %3596 = vperm.xlu0 %3595, %v88
  %v3597 = vpop.permute.xlu0 %3596
  %3599 = vset.pattern.permute.xlu0 11
  %3600 = vperm.xlu0 %3599, %v89
  %v3601 = vpop.permute.xlu0 %3600
  %3603 = vset.pattern.permute.xlu0 11
  %3604 = vperm.xlu0 %3603, %v90
  %v3605 = vpop.permute.xlu0 %3604
  %3607 = vset.pattern.permute.xlu0 11
  %3608 = vperm.xlu0 %3607, %v91
  %v3609 = vpop.permute.xlu0 %3608
  %3611 = vset.pattern.permute.xlu0 11
  %3612 = vperm.xlu0 %3611, %v92
  %v3613 = vpop.permute.xlu0 %3612
  %3615 = vset.pattern.permute.xlu0 11
  %3616 = vperm.xlu0 %3615, %v93
  %v3617 = vpop.permute.xlu0 %3616
  %3619 = vset.pattern.permute.xlu0 11
  %3620 = vperm.xlu0 %3619, %v94
  %v3621 = vpop.permute.xlu0 %3620
  %v3623 = vmul.f32 %v3593, %v3559
  %v3624 = vmul.f32 %v3593, %v3560
  %v3625 = vmul.f32 %v3593, %v3561
  %v3626 = vmul.f32 %v3593, %v3562
  %v3627 = vmul.f32 %v3597, %v3563
  %v3628 = vmul.f32 %v3597, %v3564
  %v3629 = vmul.f32 %v3597, %v3565
  %v3630 = vmul.f32 %v3597, %v3566
  %v3631 = vmul.f32 %v3601, %v3567
  %v3632 = vmul.f32 %v3601, %v3568
  %v3633 = vmul.f32 %v3601, %v3569
  %v3634 = vmul.f32 %v3601, %v3570
  %v3635 = vmul.f32 %v3605, %v3571
  %v3636 = vmul.f32 %v3605, %v3572
  %v3637 = vmul.f32 %v3605, %v3573
  %v3638 = vmul.f32 %v3605, %v3574
  %v3639 = vmul.f32 %v3609, %v3575
  %v3640 = vmul.f32 %v3609, %v3576
  %v3641 = vmul.f32 %v3609, %v3577
  %v3642 = vmul.f32 %v3609, %v3578
  %v3643 = vmul.f32 %v3613, %v3579
  %v3644 = vmul.f32 %v3613, %v3580
  %v3645 = vmul.f32 %v3613, %v3581
  %v3646 = vmul.f32 %v3613, %v3582
  %v3647 = vmul.f32 %v3617, %v3583
  %v3648 = vmul.f32 %v3617, %v3584
  %v3649 = vmul.f32 %v3617, %v3585
  %v3650 = vmul.f32 %v3617, %v3586
  %v3651 = vmul.f32 %v3621, %v3587
  %v3652 = vmul.f32 %v3621, %v3588
  %v3653 = vmul.f32 %v3621, %v3589
  %v3654 = vmul.f32 %v3621, %v3590
  %v3655 = vadd.f32 %v3374, %v3623
  %v3656 = vadd.f32 %v3375, %v3624
  %v3657 = vadd.f32 %v3376, %v3625
  %v3658 = vadd.f32 %v3377, %v3626
  %v3659 = vadd.f32 %v3378, %v3627
  %v3660 = vadd.f32 %v3379, %v3628
  %v3661 = vadd.f32 %v3380, %v3629
  %v3662 = vadd.f32 %v3381, %v3630
  %v3663 = vadd.f32 %v3382, %v3631
  %v3664 = vadd.f32 %v3383, %v3632
  %v3665 = vadd.f32 %v3384, %v3633
  %v3666 = vadd.f32 %v3385, %v3634
  %v3667 = vadd.f32 %v3386, %v3635
  %v3668 = vadd.f32 %v3387, %v3636
  %v3669 = vadd.f32 %v3388, %v3637
  %v3670 = vadd.f32 %v3389, %v3638
  %v3671 = vadd.f32 %v3390, %v3639
  %v3672 = vadd.f32 %v3391, %v3640
  %v3673 = vadd.f32 %v3392, %v3641
  %v3674 = vadd.f32 %v3393, %v3642
  %v3675 = vadd.f32 %v3394, %v3643
  %v3676 = vadd.f32 %v3395, %v3644
  %v3677 = vadd.f32 %v3396, %v3645
  %v3678 = vadd.f32 %v3397, %v3646
  %v3679 = vadd.f32 %v3398, %v3647
  %v3680 = vadd.f32 %v3399, %v3648
  %v3681 = vadd.f32 %v3400, %v3649
  %v3682 = vadd.f32 %v3401, %v3650
  %v3683 = vadd.f32 %v3402, %v3651
  %v3684 = vadd.f32 %v3403, %v3652
  %v3685 = vadd.f32 %v3404, %v3653
  %v3686 = vadd.f32 %v3405, %v3654
  %3687 = vrot.lane.b32.xlu0 %v1528, 111
  %v3688 = vpop.permute.xlu0 %3687
  %3689 = vrot.lane.b32.xlu0 %v1529, 111
  %v3690 = vpop.permute.xlu0 %3689
  %3691 = vrot.lane.b32.xlu0 %v1530, 111
  %v3692 = vpop.permute.xlu0 %3691
  %3693 = vrot.lane.b32.xlu0 %v1531, 111
  %v3694 = vpop.permute.xlu0 %3693
  %3695 = vrot.lane.b32.xlu0 %v1532, 111
  %v3696 = vpop.permute.xlu0 %3695
  %3697 = vrot.lane.b32.xlu0 %v1533, 111
  %v3698 = vpop.permute.xlu0 %3697
  %3699 = vrot.lane.b32.xlu0 %v1534, 111
  %v3700 = vpop.permute.xlu0 %3699
  %3701 = vrot.lane.b32.xlu0 %v1535, 111
  %v3702 = vpop.permute.xlu0 %3701
  %3703 = vrot.lane.b32.xlu0 %v1536, 111
  %v3704 = vpop.permute.xlu0 %3703
  %3705 = vrot.lane.b32.xlu0 %v1537, 111
  %v3706 = vpop.permute.xlu0 %3705
  %3707 = vrot.lane.b32.xlu0 %v1538, 111
  %v3708 = vpop.permute.xlu0 %3707
  %3709 = vrot.lane.b32.xlu0 %v1539, 111
  %v3710 = vpop.permute.xlu0 %3709
  %3711 = vrot.lane.b32.xlu0 %v1540, 111
  %v3712 = vpop.permute.xlu0 %3711
  %3713 = vrot.lane.b32.xlu0 %v1541, 111
  %v3714 = vpop.permute.xlu0 %3713
  %3715 = vrot.lane.b32.xlu0 %v1542, 111
  %v3716 = vpop.permute.xlu0 %3715
  %3717 = vrot.lane.b32.xlu0 %v1543, 111
  %v3718 = vpop.permute.xlu0 %3717
  %3719 = vrot.lane.b32.xlu0 %v1544, 111
  %v3720 = vpop.permute.xlu0 %3719
  %3721 = vrot.lane.b32.xlu0 %v1545, 111
  %v3722 = vpop.permute.xlu0 %3721
  %3723 = vrot.lane.b32.xlu0 %v1546, 111
  %v3724 = vpop.permute.xlu0 %3723
  %3725 = vrot.lane.b32.xlu0 %v1547, 111
  %v3726 = vpop.permute.xlu0 %3725
  %3727 = vrot.lane.b32.xlu0 %v1548, 111
  %v3728 = vpop.permute.xlu0 %3727
  %3729 = vrot.lane.b32.xlu0 %v1549, 111
  %v3730 = vpop.permute.xlu0 %3729
  %3731 = vrot.lane.b32.xlu0 %v1550, 111
  %v3732 = vpop.permute.xlu0 %3731
  %3733 = vrot.lane.b32.xlu0 %v1551, 111
  %v3734 = vpop.permute.xlu0 %3733
  %3735 = vrot.lane.b32.xlu0 %v1552, 111
  %v3736 = vpop.permute.xlu0 %3735
  %3737 = vrot.lane.b32.xlu0 %v1553, 111
  %v3738 = vpop.permute.xlu0 %3737
  %3739 = vrot.lane.b32.xlu0 %v1554, 111
  %v3740 = vpop.permute.xlu0 %3739
  %3741 = vrot.lane.b32.xlu0 %v1555, 111
  %v3742 = vpop.permute.xlu0 %3741
  %3743 = vrot.lane.b32.xlu0 %v1556, 111
  %v3744 = vpop.permute.xlu0 %3743
  %3745 = vrot.lane.b32.xlu0 %v1557, 111
  %v3746 = vpop.permute.xlu0 %3745
  %3747 = vrot.lane.b32.xlu0 %v1558, 111
  %v3748 = vpop.permute.xlu0 %3747
  %3749 = vrot.lane.b32.xlu0 %v1559, 111
  %v3750 = vpop.permute.xlu0 %3749
  %vm3751 = vcmask 908288
  %v3752 = vsel %vm3751, %v3688, %v3690
  %v3753 = vsel %vm3751, %v3690, %v3692
  %v3754 = vsel %vm3751, %v3692, %v3694
  %v3755 = vsel %vm3751, %v3696, %v3698
  %v3756 = vsel %vm3751, %v3698, %v3700
  %v3757 = vsel %vm3751, %v3700, %v3702
  %v3758 = vsel %vm3751, %v3704, %v3706
  %v3759 = vsel %vm3751, %v3706, %v3708
  %v3760 = vsel %vm3751, %v3708, %v3710
  %v3761 = vsel %vm3751, %v3712, %v3714
  %v3762 = vsel %vm3751, %v3714, %v3716
  %v3763 = vsel %vm3751, %v3716, %v3718
  %v3764 = vsel %vm3751, %v3720, %v3722
  %v3765 = vsel %vm3751, %v3722, %v3724
  %v3766 = vsel %vm3751, %v3724, %v3726
  %v3767 = vsel %vm3751, %v3728, %v3730
  %v3768 = vsel %vm3751, %v3730, %v3732
  %v3769 = vsel %vm3751, %v3732, %v3734
  %v3770 = vsel %vm3751, %v3736, %v3738
  %v3771 = vsel %vm3751, %v3738, %v3740
  %v3772 = vsel %vm3751, %v3740, %v3742
  %v3773 = vsel %vm3751, %v3744, %v3746
  %v3774 = vsel %vm3751, %v3746, %v3748
  %v3775 = vsel %vm3751, %v3748, %v3750
  %v3816 = vsel %vm3751, %v3694, %v3688
  %v3817 = vsel %vm3751, %v3702, %v3696
  %v3818 = vsel %vm3751, %v3710, %v3704
  %v3819 = vsel %vm3751, %v3718, %v3712
  %v3820 = vsel %vm3751, %v3726, %v3720
  %v3821 = vsel %vm3751, %v3734, %v3728
  %v3822 = vsel %vm3751, %v3742, %v3736
  %v3823 = vsel %vm3751, %v3750, %v3744
  %v3824 = vlaneseq
  %v3825 = vshrl.u32 %v3824, 7
  %v3826 = vsub.s32 7, %v3825
  %v3827 = vrot.slane %v123, %v3826
  %v3828 = vlaneseq
  %v3829 = vshrl.u32 %v3828, 7
  %v3830 = vsub.s32 7, %v3829
  %v3831 = vrot.slane %v124, %v3830
  %v3832 = vlaneseq
  %v3833 = vshrl.u32 %v3832, 7
  %v3834 = vsub.s32 7, %v3833
  %v3835 = vrot.slane %v125, %v3834
  %v3836 = vlaneseq
  %v3837 = vshrl.u32 %v3836, 7
  %v3838 = vsub.s32 7, %v3837
  %v3839 = vrot.slane %v126, %v3838
  %v3840 = vmul.f32 %v3827, %v3752
  %v3841 = vmul.f32 %v3831, %v3753
  %v3842 = vmul.f32 %v3835, %v3754
  %v3843 = vmul.f32 %v3839, %v3816
  %v3844 = vmul.f32 %v3827, %v3755
  %v3845 = vmul.f32 %v3831, %v3756
  %v3846 = vmul.f32 %v3835, %v3757
  %v3847 = vmul.f32 %v3839, %v3817
  %v3848 = vmul.f32 %v3827, %v3758
  %v3849 = vmul.f32 %v3831, %v3759
  %v3850 = vmul.f32 %v3835, %v3760
  %v3851 = vmul.f32 %v3839, %v3818
  %v3852 = vmul.f32 %v3827, %v3761
  %v3853 = vmul.f32 %v3831, %v3762
  %v3854 = vmul.f32 %v3835, %v3763
  %v3855 = vmul.f32 %v3839, %v3819
  %v3856 = vmul.f32 %v3827, %v3764
  %v3857 = vmul.f32 %v3831, %v3765
  %v3858 = vmul.f32 %v3835, %v3766
  %v3859 = vmul.f32 %v3839, %v3820
  %v3860 = vmul.f32 %v3827, %v3767
  %v3861 = vmul.f32 %v3831, %v3768
  %v3862 = vmul.f32 %v3835, %v3769
  %v3863 = vmul.f32 %v3839, %v3821
  %v3864 = vmul.f32 %v3827, %v3770
  %v3865 = vmul.f32 %v3831, %v3771
  %v3866 = vmul.f32 %v3835, %v3772
  %v3867 = vmul.f32 %v3839, %v3822
  %v3868 = vmul.f32 %v3827, %v3773
  %v3869 = vmul.f32 %v3831, %v3774
  %v3870 = vmul.f32 %v3835, %v3775
  %v3871 = vmul.f32 %v3839, %v3823
  %3872 = vset.pattern.permute.xlu0 12
  %3873 = vperm.xlu0 %3872, %v87
  %v3874 = vpop.permute.xlu0 %3873
  %3876 = vset.pattern.permute.xlu0 12
  %3877 = vperm.xlu0 %3876, %v88
  %v3878 = vpop.permute.xlu0 %3877
  %3880 = vset.pattern.permute.xlu0 12
  %3881 = vperm.xlu0 %3880, %v89
  %v3882 = vpop.permute.xlu0 %3881
  %3884 = vset.pattern.permute.xlu0 12
  %3885 = vperm.xlu0 %3884, %v90
  %v3886 = vpop.permute.xlu0 %3885
  %3888 = vset.pattern.permute.xlu0 12
  %3889 = vperm.xlu0 %3888, %v91
  %v3890 = vpop.permute.xlu0 %3889
  %3892 = vset.pattern.permute.xlu0 12
  %3893 = vperm.xlu0 %3892, %v92
  %v3894 = vpop.permute.xlu0 %3893
  %3896 = vset.pattern.permute.xlu0 12
  %3897 = vperm.xlu0 %3896, %v93
  %v3898 = vpop.permute.xlu0 %3897
  %3900 = vset.pattern.permute.xlu0 12
  %3901 = vperm.xlu0 %3900, %v94
  %v3902 = vpop.permute.xlu0 %3901
  %v3904 = vmul.f32 %v3874, %v3840
  %v3905 = vmul.f32 %v3874, %v3841
  %v3906 = vmul.f32 %v3874, %v3842
  %v3907 = vmul.f32 %v3874, %v3843
  %v3908 = vmul.f32 %v3878, %v3844
  %v3909 = vmul.f32 %v3878, %v3845
  %v3910 = vmul.f32 %v3878, %v3846
  %v3911 = vmul.f32 %v3878, %v3847
  %v3912 = vmul.f32 %v3882, %v3848
  %v3913 = vmul.f32 %v3882, %v3849
  %v3914 = vmul.f32 %v3882, %v3850
  %v3915 = vmul.f32 %v3882, %v3851
  %v3916 = vmul.f32 %v3886, %v3852
  %v3917 = vmul.f32 %v3886, %v3853
  %v3918 = vmul.f32 %v3886, %v3854
  %v3919 = vmul.f32 %v3886, %v3855
  %v3920 = vmul.f32 %v3890, %v3856
  %v3921 = vmul.f32 %v3890, %v3857
  %v3922 = vmul.f32 %v3890, %v3858
  %v3923 = vmul.f32 %v3890, %v3859
  %v3924 = vmul.f32 %v3894, %v3860
  %v3925 = vmul.f32 %v3894, %v3861
  %v3926 = vmul.f32 %v3894, %v3862
  %v3927 = vmul.f32 %v3894, %v3863
  %v3928 = vmul.f32 %v3898, %v3864
  %v3929 = vmul.f32 %v3898, %v3865
  %v3930 = vmul.f32 %v3898, %v3866
  %v3931 = vmul.f32 %v3898, %v3867
  %v3932 = vmul.f32 %v3902, %v3868
  %v3933 = vmul.f32 %v3902, %v3869
  %v3934 = vmul.f32 %v3902, %v3870
  %v3935 = vmul.f32 %v3902, %v3871
  %v3936 = vadd.f32 %v3655, %v3904
  %v3937 = vadd.f32 %v3656, %v3905
  %v3938 = vadd.f32 %v3657, %v3906
  %v3939 = vadd.f32 %v3658, %v3907
  %v3940 = vadd.f32 %v3659, %v3908
  %v3941 = vadd.f32 %v3660, %v3909
  %v3942 = vadd.f32 %v3661, %v3910
  %v3943 = vadd.f32 %v3662, %v3911
  %v3944 = vadd.f32 %v3663, %v3912
  %v3945 = vadd.f32 %v3664, %v3913
  %v3946 = vadd.f32 %v3665, %v3914
  %v3947 = vadd.f32 %v3666, %v3915
  %v3948 = vadd.f32 %v3667, %v3916
  %v3949 = vadd.f32 %v3668, %v3917
  %v3950 = vadd.f32 %v3669, %v3918
  %v3951 = vadd.f32 %v3670, %v3919
  %v3952 = vadd.f32 %v3671, %v3920
  %v3953 = vadd.f32 %v3672, %v3921
  %v3954 = vadd.f32 %v3673, %v3922
  %v3955 = vadd.f32 %v3674, %v3923
  %v3956 = vadd.f32 %v3675, %v3924
  %v3957 = vadd.f32 %v3676, %v3925
  %v3958 = vadd.f32 %v3677, %v3926
  %v3959 = vadd.f32 %v3678, %v3927
  %v3960 = vadd.f32 %v3679, %v3928
  %v3961 = vadd.f32 %v3680, %v3929
  %v3962 = vadd.f32 %v3681, %v3930
  %v3963 = vadd.f32 %v3682, %v3931
  %v3964 = vadd.f32 %v3683, %v3932
  %v3965 = vadd.f32 %v3684, %v3933
  %v3966 = vadd.f32 %v3685, %v3934
  %v3967 = vadd.f32 %v3686, %v3935
  %v3968 = vpack.c.bf16 %v3940, %v3936
  %v3969 = vpack.c.bf16 %v3941, %v3937
  %v3970 = vpack.c.bf16 %v3942, %v3938
  %v3971 = vpack.c.bf16 %v3943, %v3939
  %v3972 = vpack.c.bf16 %v3948, %v3944
  %v3973 = vpack.c.bf16 %v3949, %v3945
  %v3974 = vpack.c.bf16 %v3950, %v3946
  %v3975 = vpack.c.bf16 %v3951, %v3947
  %v3976 = vpack.c.bf16 %v3956, %v3952
  %v3977 = vpack.c.bf16 %v3957, %v3953
  %v3978 = vpack.c.bf16 %v3958, %v3954
  %v3979 = vpack.c.bf16 %v3959, %v3955
  %v3980 = vpack.c.bf16 %v3964, %v3960
  %v3981 = vpack.c.bf16 %v3965, %v3961
  %v3982 = vpack.c.bf16 %v3966, %v3962
  %v3983 = vpack.c.bf16 %v3967, %v3963
  %3985 = vset.pattern.permute.xlu0 0
  %3986 = vperm.xlu0 %3985, %v95
  %v3987 = vpop.permute.xlu0 %3986
  %3990 = vset.pattern.permute.xlu0 0
  %3991 = vperm.xlu0 %3990, %v96
  %v3992 = vpop.permute.xlu0 %3991
  %3995 = vset.pattern.permute.xlu0 0
  %3996 = vperm.xlu0 %3995, %v97
  %v3997 = vpop.permute.xlu0 %3996
  %4000 = vset.pattern.permute.xlu0 0
  %4001 = vperm.xlu0 %4000, %v98
  %v4002 = vpop.permute.xlu0 %4001
  %4005 = vset.pattern.permute.xlu0 0
  %4006 = vperm.xlu0 %4005, %v99
  %v4007 = vpop.permute.xlu0 %4006
  %4010 = vset.pattern.permute.xlu0 0
  %4011 = vperm.xlu0 %4010, %v100
  %v4012 = vpop.permute.xlu0 %4011
  %4015 = vset.pattern.permute.xlu0 0
  %4016 = vperm.xlu0 %4015, %v101
  %v4017 = vpop.permute.xlu0 %4016
  %4020 = vset.pattern.permute.xlu0 0
  %4021 = vperm.xlu0 %4020, %v102
  %v4022 = vpop.permute.xlu0 %4021
  %4025 = vset.pattern.permute.xlu0 0
  %4026 = vperm.xlu0 %4025, %v103
  %v4027 = vpop.permute.xlu0 %4026
  %4030 = vset.pattern.permute.xlu0 0
  %4031 = vperm.xlu0 %4030, %v104
  %v4032 = vpop.permute.xlu0 %4031
  %4035 = vset.pattern.permute.xlu0 0
  %4036 = vperm.xlu0 %4035, %v105
  %v4037 = vpop.permute.xlu0 %4036
  %4040 = vset.pattern.permute.xlu0 0
  %4041 = vperm.xlu0 %4040, %v106
  %v4042 = vpop.permute.xlu0 %4041
  %4045 = vset.pattern.permute.xlu0 0
  %4046 = vperm.xlu0 %4045, %v107
  %v4047 = vpop.permute.xlu0 %4046
  %4050 = vset.pattern.permute.xlu0 0
  %4051 = vperm.xlu0 %4050, %v108
  %v4052 = vpop.permute.xlu0 %4051
  %4055 = vset.pattern.permute.xlu0 0
  %4056 = vperm.xlu0 %4055, %v109
  %v4057 = vpop.permute.xlu0 %4056
  %4060 = vset.pattern.permute.xlu0 0
  %4061 = vperm.xlu0 %4060, %v110
  %v4062 = vpop.permute.xlu0 %4061
  %v4072 = vunpack.c.l.b16 %v71
  %v4073 = vunpack.c.l.b16 %v72
  %v4074 = vunpack.c.l.b16 %v73
  %v4075 = vunpack.c.l.b16 %v74
  %v4076 = vunpack.c.l.b16 %v75
  %v4077 = vunpack.c.l.b16 %v76
  %v4078 = vunpack.c.l.b16 %v77
  %v4079 = vunpack.c.l.b16 %v78
  %v4080 = vpack.c.b16 %v4073, %v4072
  %v4081 = vpack.c.b16 %v4075, %v4074
  %v4082 = vpack.c.b16 %v4077, %v4076
  %v4083 = vpack.c.b16 %v4079, %v4078
  %4088 = vxpose.xlu0.c.b16.start [1/8] %v4080, 128
  %4089 = vxpose.xlu0.c.b16.cont [2/8] %v4081, 128
  %4090 = vxpose.xlu0.c.b16.cont [3/8] %v4082, 128
  %4091 = vxpose.xlu0.c.b16.cont [4/8] %v4083, 128
  %4092 = vxpose.xlu0.c.b16.cont [5/8] 0, 128
  %4093 = vxpose.xlu0.c.b16.cont [6/8] 0, 128
  %4094 = vxpose.xlu0.c.b16.cont [7/8] 0, 128
  %4095 = vxpose.xlu0.c.b16.end [8/8] 0, 128
  %v4096 = vpop.trf.xlu0
  %v4097 = vpop.trf.xlu0
  %v4098 = vpop.trf.xlu0
  %v4099 = vpop.trf.xlu0
  %v4100 = vpop.trf.xlu0
  %v4101 = vpop.trf.xlu0
  %v4102 = vpop.trf.xlu0
  %v4103 = vpop.trf.xlu0
  %v4105 = vsel %vm907, %v4096, 0
  %v4108 = vsel %vm907, %v4097, 0
  %v4111 = vsel %vm907, %v4098, 0
  %v4114 = vsel %vm907, %v4099, 0
  %v4117 = vsel %vm907, %v4100, 0
  %v4120 = vsel %vm907, %v4101, 0
  %v4123 = vsel %vm907, %v4102, 0
  %v4126 = vsel %vm907, %v4103, 0
  %4128 = vmatprep.subr.bf16.mxu0 0
  %4129 = vmatpush1.bf16.msra.mxu0 0
  %4130 = vmatprep.subr.bf16.mxu0 0
  %4131 = vmatpush1.bf16.msra.mxu0 0
  %4132 = vmatprep.subr.bf16.mxu0 0
  %4133 = vmatpush1.bf16.msra.mxu0 0
  %4134 = vmatprep.subr.bf16.mxu0 0
  %4135 = vmatpush1.bf16.msra.mxu0 0
  %4136 = vmatprep.subr.bf16.mxu0 %v3981
  %4137 = vmatpush1.bf16.msra.mxu0 %v3980
  %4138 = vmatprep.subr.bf16.mxu0 %v3977
  %4139 = vmatpush1.bf16.msra.mxu0 %v3976
  %4140 = vmatprep.subr.bf16.mxu0 %v3973
  %4141 = vmatpush1.bf16.msra.mxu0 %v3972
  %4142 = vmatprep.subr.bf16.mxu0 %v3969
  %4143 = vmatpush1.bf16.msra.mxu0 %v3968
  %4144 = vmatprep.subr.bf16.mxu0 0
  %4145 = vmatpush2.bf16.msra.mxu0 0
  %4146 = vmatprep.subr.bf16.mxu0 0
  %4147 = vmatpush2.bf16.msra.mxu0 0
  %4148 = vmatprep.subr.bf16.mxu0 0
  %4149 = vmatpush2.bf16.msra.mxu0 0
  %4150 = vmatprep.subr.bf16.mxu0 0
  %4151 = vmatpush2.bf16.msra.mxu0 0
  %4152 = vmatprep.subr.bf16.mxu0 0
  %4153 = vmatpush2.bf16.msra.mxu0 0
  %4154 = vmatprep.subr.bf16.mxu0 0
  %4155 = vmatpush2.bf16.msra.mxu0 0
  %4156 = vmatprep.subr.bf16.mxu0 0
  %4157 = vmatpush2.bf16.msra.mxu0 0
  %4158 = vmatprep.subr.bf16.mxu0 0
  %4159 = vmatpush2.bf16.msra.mxu0 0
  %4160 = vmatprep.mubr.bf16.mxu0 0
  %4161 = vmatmul.mubr.bf16.gmra.mxu0 %v4105
  %v4162 = vpop.f32.mrf.mxu0
  %v4163 = vadd.f32 %v3987, %v4162
  %v4164 = vpop.f32.mrf.mxu0
  %v4165 = vadd.f32 %v3987, %v4164
  %v4166 = vpop.f32.mrf.mxu0
  %v4167 = vadd.f32 %v3992, %v4166
  %v4168 = vpop.f32.mrf.mxu0
  %v4169 = vadd.f32 %v3992, %v4168
  %4170 = vmatprep.mubr.bf16.mxu0 0
  %4171 = vmatmul.mubr.bf16.gmra.mxu0 %v4108
  %v4172 = vpop.f32.mrf.mxu0
  %v4173 = vadd.f32 %v3997, %v4172
  %v4174 = vpop.f32.mrf.mxu0
  %v4175 = vadd.f32 %v3997, %v4174
  %v4176 = vpop.f32.mrf.mxu0
  %v4177 = vadd.f32 %v4002, %v4176
  %v4178 = vpop.f32.mrf.mxu0
  %v4179 = vadd.f32 %v4002, %v4178
  %4180 = vmatprep.mubr.bf16.mxu0 0
  %4181 = vmatmul.mubr.bf16.gmra.mxu0 %v4111
  %v4182 = vpop.f32.mrf.mxu0
  %v4183 = vadd.f32 %v4007, %v4182
  %v4184 = vpop.f32.mrf.mxu0
  %v4185 = vadd.f32 %v4007, %v4184
  %v4186 = vpop.f32.mrf.mxu0
  %v4187 = vadd.f32 %v4012, %v4186
  %v4188 = vpop.f32.mrf.mxu0
  %v4189 = vadd.f32 %v4012, %v4188
  %4190 = vmatprep.mubr.bf16.mxu0 0
  %4191 = vmatmul.mubr.bf16.gmra.mxu0 %v4114
  %v4192 = vpop.f32.mrf.mxu0
  %v4193 = vadd.f32 %v4017, %v4192
  %v4194 = vpop.f32.mrf.mxu0
  %v4195 = vadd.f32 %v4017, %v4194
  %v4196 = vpop.f32.mrf.mxu0
  %v4197 = vadd.f32 %v4022, %v4196
  %v4198 = vpop.f32.mrf.mxu0
  %v4199 = vadd.f32 %v4022, %v4198
  %4200 = vmatprep.mubr.bf16.mxu0 0
  %4201 = vmatmul.mubr.bf16.gmra.mxu0 %v4117
  %v4202 = vpop.f32.mrf.mxu0
  %v4203 = vadd.f32 %v4027, %v4202
  %v4204 = vpop.f32.mrf.mxu0
  %v4205 = vadd.f32 %v4027, %v4204
  %v4206 = vpop.f32.mrf.mxu0
  %v4207 = vadd.f32 %v4032, %v4206
  %v4208 = vpop.f32.mrf.mxu0
  %v4209 = vadd.f32 %v4032, %v4208
  %4210 = vmatprep.mubr.bf16.mxu0 0
  %4211 = vmatmul.mubr.bf16.gmra.mxu0 %v4120
  %v4212 = vpop.f32.mrf.mxu0
  %v4213 = vadd.f32 %v4037, %v4212
  %v4214 = vpop.f32.mrf.mxu0
  %v4215 = vadd.f32 %v4037, %v4214
  %v4216 = vpop.f32.mrf.mxu0
  %v4217 = vadd.f32 %v4042, %v4216
  %v4218 = vpop.f32.mrf.mxu0
  %v4219 = vadd.f32 %v4042, %v4218
  %4220 = vmatprep.mubr.bf16.mxu0 0
  %4221 = vmatmul.mubr.bf16.gmra.mxu0 %v4123
  %v4222 = vpop.f32.mrf.mxu0
  %v4223 = vadd.f32 %v4047, %v4222
  %v4224 = vpop.f32.mrf.mxu0
  %v4225 = vadd.f32 %v4047, %v4224
  %v4226 = vpop.f32.mrf.mxu0
  %v4227 = vadd.f32 %v4052, %v4226
  %v4228 = vpop.f32.mrf.mxu0
  %v4229 = vadd.f32 %v4052, %v4228
  %4230 = vmatprep.mubr.bf16.mxu0 0
  %4231 = vmatmul.mubr.bf16.gmra.mxu0 %v4126
  %v4232 = vpop.f32.mrf.mxu0
  %v4233 = vadd.f32 %v4057, %v4232
  %v4234 = vpop.f32.mrf.mxu0
  %v4235 = vadd.f32 %v4057, %v4234
  %v4236 = vpop.f32.mrf.mxu0
  %v4237 = vadd.f32 %v4062, %v4236
  %v4238 = vpop.f32.mrf.mxu0
  %v4239 = vadd.f32 %v4062, %v4238
  %4240 = vdwg.mxu0
  %4241 = vmatprep.subr.bf16.mxu0 0
  %4242 = vmatpush1.bf16.msra.mxu0 0
  %4243 = vmatprep.subr.bf16.mxu0 0
  %4244 = vmatpush1.bf16.msra.mxu0 0
  %4245 = vmatprep.subr.bf16.mxu0 0
  %4246 = vmatpush1.bf16.msra.mxu0 0
  %4247 = vmatprep.subr.bf16.mxu0 0
  %4248 = vmatpush1.bf16.msra.mxu0 0
  %4249 = vmatprep.subr.bf16.mxu0 %v3983
  %4250 = vmatpush1.bf16.msra.mxu0 %v3982
  %4251 = vmatprep.subr.bf16.mxu0 %v3979
  %4252 = vmatpush1.bf16.msra.mxu0 %v3978
  %4253 = vmatprep.subr.bf16.mxu0 %v3975
  %4254 = vmatpush1.bf16.msra.mxu0 %v3974
  %4255 = vmatprep.subr.bf16.mxu0 %v3971
  %4256 = vmatpush1.bf16.msra.mxu0 %v3970
  %4257 = vmatprep.subr.bf16.mxu0 0
  %4258 = vmatpush2.bf16.msra.mxu0 0
  %4259 = vmatprep.subr.bf16.mxu0 0
  %4260 = vmatpush2.bf16.msra.mxu0 0
  %4261 = vmatprep.subr.bf16.mxu0 0
  %4262 = vmatpush2.bf16.msra.mxu0 0
  %4263 = vmatprep.subr.bf16.mxu0 0
  %4264 = vmatpush2.bf16.msra.mxu0 0
  %4265 = vmatprep.subr.bf16.mxu0 0
  %4266 = vmatpush2.bf16.msra.mxu0 0
  %4267 = vmatprep.subr.bf16.mxu0 0
  %4268 = vmatpush2.bf16.msra.mxu0 0
  %4269 = vmatprep.subr.bf16.mxu0 0
  %4270 = vmatpush2.bf16.msra.mxu0 0
  %4271 = vmatprep.subr.bf16.mxu0 0
  %4272 = vmatpush2.bf16.msra.mxu0 0
  %4273 = vmatprep.mubr.bf16.mxu0 0
  %4274 = vmatmul.mubr.bf16.gmra.mxu0 %v4105
  %v4275 = vpop.f32.mrf.mxu0
  %v4276 = vadd.f32 %v3987, %v4275
  %v4277 = vpop.f32.mrf.mxu0
  %v4278 = vadd.f32 %v3987, %v4277
  %v4279 = vpop.f32.mrf.mxu0
  %v4280 = vadd.f32 %v3992, %v4279
  %v4281 = vpop.f32.mrf.mxu0
  %v4282 = vadd.f32 %v3992, %v4281
  %4283 = vmatprep.mubr.bf16.mxu0 0
  %4284 = vmatmul.mubr.bf16.gmra.mxu0 %v4108
  %v4285 = vpop.f32.mrf.mxu0
  %v4286 = vadd.f32 %v3997, %v4285
  %v4287 = vpop.f32.mrf.mxu0
  %v4288 = vadd.f32 %v3997, %v4287
  %v4289 = vpop.f32.mrf.mxu0
  %v4290 = vadd.f32 %v4002, %v4289
  %v4291 = vpop.f32.mrf.mxu0
  %v4292 = vadd.f32 %v4002, %v4291
  %4293 = vmatprep.mubr.bf16.mxu0 0
  %4294 = vmatmul.mubr.bf16.gmra.mxu0 %v4111
  %v4295 = vpop.f32.mrf.mxu0
  %v4296 = vadd.f32 %v4007, %v4295
  %v4297 = vpop.f32.mrf.mxu0
  %v4298 = vadd.f32 %v4007, %v4297
  %v4299 = vpop.f32.mrf.mxu0
  %v4300 = vadd.f32 %v4012, %v4299
  %v4301 = vpop.f32.mrf.mxu0
  %v4302 = vadd.f32 %v4012, %v4301
  %4303 = vmatprep.mubr.bf16.mxu0 0
  %4304 = vmatmul.mubr.bf16.gmra.mxu0 %v4114
  %v4305 = vpop.f32.mrf.mxu0
  %v4306 = vadd.f32 %v4017, %v4305
  %v4307 = vpop.f32.mrf.mxu0
  %v4308 = vadd.f32 %v4017, %v4307
  %v4309 = vpop.f32.mrf.mxu0
  %v4310 = vadd.f32 %v4022, %v4309
  %v4311 = vpop.f32.mrf.mxu0
  %v4312 = vadd.f32 %v4022, %v4311
  %4313 = vmatprep.mubr.bf16.mxu0 0
  %4314 = vmatmul.mubr.bf16.gmra.mxu0 %v4117
  %v4315 = vpop.f32.mrf.mxu0
  %v4316 = vadd.f32 %v4027, %v4315
  %v4317 = vpop.f32.mrf.mxu0
  %v4318 = vadd.f32 %v4027, %v4317
  %v4319 = vpop.f32.mrf.mxu0
  %v4320 = vadd.f32 %v4032, %v4319
  %v4321 = vpop.f32.mrf.mxu0
  %v4322 = vadd.f32 %v4032, %v4321
  %4323 = vmatprep.mubr.bf16.mxu0 0
  %4324 = vmatmul.mubr.bf16.gmra.mxu0 %v4120
  %v4325 = vpop.f32.mrf.mxu0
  %v4326 = vadd.f32 %v4037, %v4325
  %v4327 = vpop.f32.mrf.mxu0
  %v4328 = vadd.f32 %v4037, %v4327
  %v4329 = vpop.f32.mrf.mxu0
  %v4330 = vadd.f32 %v4042, %v4329
  %v4331 = vpop.f32.mrf.mxu0
  %v4332 = vadd.f32 %v4042, %v4331
  %4333 = vmatprep.mubr.bf16.mxu0 0
  %4334 = vmatmul.mubr.bf16.gmra.mxu0 %v4123
  %v4335 = vpop.f32.mrf.mxu0
  %v4336 = vadd.f32 %v4047, %v4335
  %v4337 = vpop.f32.mrf.mxu0
  %v4338 = vadd.f32 %v4047, %v4337
  %v4339 = vpop.f32.mrf.mxu0
  %v4340 = vadd.f32 %v4052, %v4339
  %v4341 = vpop.f32.mrf.mxu0
  %v4342 = vadd.f32 %v4052, %v4341
  %4343 = vmatprep.mubr.bf16.mxu0 0
  %4344 = vmatmul.mubr.bf16.gmra.mxu0 %v4126
  %v4345 = vpop.f32.mrf.mxu0
  %v4346 = vadd.f32 %v4057, %v4345
  %v4347 = vpop.f32.mrf.mxu0
  %v4348 = vadd.f32 %v4057, %v4347
  %v4349 = vpop.f32.mrf.mxu0
  %v4350 = vadd.f32 %v4062, %v4349
  %v4351 = vpop.f32.mrf.mxu0
  %v4352 = vadd.f32 %v4062, %v4351
  %4353 = vdwg.mxu0
  %v4354 = vand.u32 2147483647, %v4163
  %v4355 = vand.u32 2147483647, %v4165
  %v4356 = vand.u32 2147483647, %v4276
  %v4357 = vand.u32 2147483647, %v4278
  %v4358 = vand.u32 2147483647, %v4167
  %v4359 = vand.u32 2147483647, %v4169
  %v4360 = vand.u32 2147483647, %v4280
  %v4361 = vand.u32 2147483647, %v4282
  %v4362 = vand.u32 2147483647, %v4173
  %v4363 = vand.u32 2147483647, %v4175
  %v4364 = vand.u32 2147483647, %v4286
  %v4365 = vand.u32 2147483647, %v4288
  %v4366 = vand.u32 2147483647, %v4177
  %v4367 = vand.u32 2147483647, %v4179
  %v4368 = vand.u32 2147483647, %v4290
  %v4369 = vand.u32 2147483647, %v4292
  %v4370 = vand.u32 2147483647, %v4183
  %v4371 = vand.u32 2147483647, %v4185
  %v4372 = vand.u32 2147483647, %v4296
  %v4373 = vand.u32 2147483647, %v4298
  %v4374 = vand.u32 2147483647, %v4187
  %v4375 = vand.u32 2147483647, %v4189
  %v4376 = vand.u32 2147483647, %v4300
  %v4377 = vand.u32 2147483647, %v4302
  %v4378 = vand.u32 2147483647, %v4193
  %v4379 = vand.u32 2147483647, %v4195
  %v4380 = vand.u32 2147483647, %v4306
  %v4381 = vand.u32 2147483647, %v4308
  %v4382 = vand.u32 2147483647, %v4197
  %v4383 = vand.u32 2147483647, %v4199
  %v4384 = vand.u32 2147483647, %v4310
  %v4385 = vand.u32 2147483647, %v4312
  %v4386 = vand.u32 2147483647, %v4203
  %v4387 = vand.u32 2147483647, %v4205
  %v4388 = vand.u32 2147483647, %v4316
  %v4389 = vand.u32 2147483647, %v4318
  %v4390 = vand.u32 2147483647, %v4207
  %v4391 = vand.u32 2147483647, %v4209
  %v4392 = vand.u32 2147483647, %v4320
  %v4393 = vand.u32 2147483647, %v4322
  %v4394 = vand.u32 2147483647, %v4213
  %v4395 = vand.u32 2147483647, %v4215
  %v4396 = vand.u32 2147483647, %v4326
  %v4397 = vand.u32 2147483647, %v4328
  %v4398 = vand.u32 2147483647, %v4217
  %v4399 = vand.u32 2147483647, %v4219
  %v4400 = vand.u32 2147483647, %v4330
  %v4401 = vand.u32 2147483647, %v4332
  %v4402 = vand.u32 2147483647, %v4223
  %v4403 = vand.u32 2147483647, %v4225
  %v4404 = vand.u32 2147483647, %v4336
  %v4405 = vand.u32 2147483647, %v4338
  %v4406 = vand.u32 2147483647, %v4227
  %v4407 = vand.u32 2147483647, %v4229
  %v4408 = vand.u32 2147483647, %v4340
  %v4409 = vand.u32 2147483647, %v4342
  %v4410 = vand.u32 2147483647, %v4233
  %v4411 = vand.u32 2147483647, %v4235
  %v4412 = vand.u32 2147483647, %v4346
  %v4413 = vand.u32 2147483647, %v4348
  %v4414 = vand.u32 2147483647, %v4237
  %v4415 = vand.u32 2147483647, %v4239
  %v4416 = vand.u32 2147483647, %v4350
  %v4417 = vand.u32 2147483647, %v4352
  %v4418 = vmul.f32 %v4354, 0.70710677
  %v4419 = vmul.f32 %v4355, 0.70710677
  %v4420 = vmul.f32 %v4356, 0.70710677
  %v4421 = vmul.f32 %v4357, 0.70710677
  %v4422 = vmul.f32 %v4358, 0.70710677
  %v4423 = vmul.f32 %v4359, 0.70710677
  %v4424 = vmul.f32 %v4360, 0.70710677
  %v4425 = vmul.f32 %v4361, 0.70710677
  %v4426 = vmul.f32 %v4362, 0.70710677
  %v4427 = vmul.f32 %v4363, 0.70710677
  %v4428 = vmul.f32 %v4364, 0.70710677
  %v4429 = vmul.f32 %v4365, 0.70710677
  %v4430 = vmul.f32 %v4366, 0.70710677
  %v4431 = vmul.f32 %v4367, 0.70710677
  %v4432 = vmul.f32 %v4368, 0.70710677
  %v4433 = vmul.f32 %v4369, 0.70710677
  %v4434 = vmul.f32 %v4370, 0.70710677
  %v4435 = vmul.f32 %v4371, 0.70710677
  %v4436 = vmul.f32 %v4372, 0.70710677
  %v4437 = vmul.f32 %v4373, 0.70710677
  %v4438 = vmul.f32 %v4374, 0.70710677
  %v4439 = vmul.f32 %v4375, 0.70710677
  %v4440 = vmul.f32 %v4376, 0.70710677
  %v4441 = vmul.f32 %v4377, 0.70710677
  %v4442 = vmul.f32 %v4378, 0.70710677
  %v4443 = vmul.f32 %v4379, 0.70710677
  %v4444 = vmul.f32 %v4380, 0.70710677
  %v4445 = vmul.f32 %v4381, 0.70710677
  %v4446 = vmul.f32 %v4382, 0.70710677
  %v4447 = vmul.f32 %v4383, 0.70710677
  %v4448 = vmul.f32 %v4384, 0.70710677
  %v4449 = vmul.f32 %v4385, 0.70710677
  %v4450 = vmul.f32 %v4386, 0.70710677
  %v4451 = vmul.f32 %v4387, 0.70710677
  %v4452 = vmul.f32 %v4388, 0.70710677
  %v4453 = vmul.f32 %v4389, 0.70710677
  %v4454 = vmul.f32 %v4390, 0.70710677
  %v4455 = vmul.f32 %v4391, 0.70710677
  %v4456 = vmul.f32 %v4392, 0.70710677
  %v4457 = vmul.f32 %v4393, 0.70710677
  %v4458 = vmul.f32 %v4394, 0.70710677
  %v4459 = vmul.f32 %v4395, 0.70710677
  %v4460 = vmul.f32 %v4396, 0.70710677
  %v4461 = vmul.f32 %v4397, 0.70710677
  %v4462 = vmul.f32 %v4398, 0.70710677
  %v4463 = vmul.f32 %v4399, 0.70710677
  %v4464 = vmul.f32 %v4400, 0.70710677
  %v4465 = vmul.f32 %v4401, 0.70710677
  %v4466 = vmul.f32 %v4402, 0.70710677
  %v4467 = vmul.f32 %v4403, 0.70710677
  %v4468 = vmul.f32 %v4404, 0.70710677
  %v4469 = vmul.f32 %v4405, 0.70710677
  %v4470 = vmul.f32 %v4406, 0.70710677
  %v4471 = vmul.f32 %v4407, 0.70710677
  %v4472 = vmul.f32 %v4408, 0.70710677
  %v4473 = vmul.f32 %v4409, 0.70710677
  %v4474 = vmul.f32 %v4410, 0.70710677
  %v4475 = vmul.f32 %v4411, 0.70710677
  %v4476 = vmul.f32 %v4412, 0.70710677
  %v4477 = vmul.f32 %v4413, 0.70710677
  %v4478 = vmul.f32 %v4414, 0.70710677
  %v4479 = vmul.f32 %v4415, 0.70710677
  %v4480 = vmul.f32 %v4416, 0.70710677
  %v4481 = vmul.f32 %v4417, 0.70710677
  %v4482 = vmul.f32 %v4418, 0.3275911
  %v4483 = vmul.f32 %v4419, 0.3275911
  %v4484 = vmul.f32 %v4420, 0.3275911
  %v4485 = vmul.f32 %v4421, 0.3275911
  %v4486 = vmul.f32 %v4422, 0.3275911
  %v4487 = vmul.f32 %v4423, 0.3275911
  %v4488 = vmul.f32 %v4424, 0.3275911
  %v4489 = vmul.f32 %v4425, 0.3275911
  %v4490 = vmul.f32 %v4426, 0.3275911
  %v4491 = vmul.f32 %v4427, 0.3275911
  %v4492 = vmul.f32 %v4428, 0.3275911
  %v4493 = vmul.f32 %v4429, 0.3275911
  %v4494 = vmul.f32 %v4430, 0.3275911
  %v4495 = vmul.f32 %v4431, 0.3275911
  %v4496 = vmul.f32 %v4432, 0.3275911
  %v4497 = vmul.f32 %v4433, 0.3275911
  %v4498 = vmul.f32 %v4434, 0.3275911
  %v4499 = vmul.f32 %v4435, 0.3275911
  %v4500 = vmul.f32 %v4436, 0.3275911
  %v4501 = vmul.f32 %v4437, 0.3275911
  %v4502 = vmul.f32 %v4438, 0.3275911
  %v4503 = vmul.f32 %v4439, 0.3275911
  %v4504 = vmul.f32 %v4440, 0.3275911
  %v4505 = vmul.f32 %v4441, 0.3275911
  %v4506 = vmul.f32 %v4442, 0.3275911
  %v4507 = vmul.f32 %v4443, 0.3275911
  %v4508 = vmul.f32 %v4444, 0.3275911
  %v4509 = vmul.f32 %v4445, 0.3275911
  %v4510 = vmul.f32 %v4446, 0.3275911
  %v4511 = vmul.f32 %v4447, 0.3275911
  %v4512 = vmul.f32 %v4448, 0.3275911
  %v4513 = vmul.f32 %v4449, 0.3275911
  %v4514 = vmul.f32 %v4450, 0.3275911
  %v4515 = vmul.f32 %v4451, 0.3275911
  %v4516 = vmul.f32 %v4452, 0.3275911
  %v4517 = vmul.f32 %v4453, 0.3275911
  %v4518 = vmul.f32 %v4454, 0.3275911
  %v4519 = vmul.f32 %v4455, 0.3275911
  %v4520 = vmul.f32 %v4456, 0.3275911
  %v4521 = vmul.f32 %v4457, 0.3275911
  %v4522 = vmul.f32 %v4458, 0.3275911
  %v4523 = vmul.f32 %v4459, 0.3275911
  %v4524 = vmul.f32 %v4460, 0.3275911
  %v4525 = vmul.f32 %v4461, 0.3275911
  %v4526 = vmul.f32 %v4462, 0.3275911
  %v4527 = vmul.f32 %v4463, 0.3275911
  %v4528 = vmul.f32 %v4464, 0.3275911
  %v4529 = vmul.f32 %v4465, 0.3275911
  %v4530 = vmul.f32 %v4466, 0.3275911
  %v4531 = vmul.f32 %v4467, 0.3275911
  %v4532 = vmul.f32 %v4468, 0.3275911
  %v4533 = vmul.f32 %v4469, 0.3275911
  %v4534 = vmul.f32 %v4470, 0.3275911
  %v4535 = vmul.f32 %v4471, 0.3275911
  %v4536 = vmul.f32 %v4472, 0.3275911
  %v4537 = vmul.f32 %v4473, 0.3275911
  %v4538 = vmul.f32 %v4474, 0.3275911
  %v4539 = vmul.f32 %v4475, 0.3275911
  %v4540 = vmul.f32 %v4476, 0.3275911
  %v4541 = vmul.f32 %v4477, 0.3275911
  %v4542 = vmul.f32 %v4478, 0.3275911
  %v4543 = vmul.f32 %v4479, 0.3275911
  %v4544 = vmul.f32 %v4480, 0.3275911
  %v4545 = vmul.f32 %v4481, 0.3275911
  %v4546 = vadd.f32 %v4482, 1.0
  %v4547 = vadd.f32 %v4483, 1.0
  %v4548 = vadd.f32 %v4484, 1.0
  %v4549 = vadd.f32 %v4485, 1.0
  %v4550 = vadd.f32 %v4486, 1.0
  %v4551 = vadd.f32 %v4487, 1.0
  %v4552 = vadd.f32 %v4488, 1.0
  %v4553 = vadd.f32 %v4489, 1.0
  %v4554 = vadd.f32 %v4490, 1.0
  %v4555 = vadd.f32 %v4491, 1.0
  %v4556 = vadd.f32 %v4492, 1.0
  %v4557 = vadd.f32 %v4493, 1.0
  %v4558 = vadd.f32 %v4494, 1.0
  %v4559 = vadd.f32 %v4495, 1.0
  %v4560 = vadd.f32 %v4496, 1.0
  %v4561 = vadd.f32 %v4497, 1.0
  %v4562 = vadd.f32 %v4498, 1.0
  %v4563 = vadd.f32 %v4499, 1.0
  %v4564 = vadd.f32 %v4500, 1.0
  %v4565 = vadd.f32 %v4501, 1.0
  %v4566 = vadd.f32 %v4502, 1.0
  %v4567 = vadd.f32 %v4503, 1.0
  %v4568 = vadd.f32 %v4504, 1.0
  %v4569 = vadd.f32 %v4505, 1.0
  %v4570 = vadd.f32 %v4506, 1.0
  %v4571 = vadd.f32 %v4507, 1.0
  %v4572 = vadd.f32 %v4508, 1.0
  %v4573 = vadd.f32 %v4509, 1.0
  %v4574 = vadd.f32 %v4510, 1.0
  %v4575 = vadd.f32 %v4511, 1.0
  %v4576 = vadd.f32 %v4512, 1.0
  %v4577 = vadd.f32 %v4513, 1.0
  %v4578 = vadd.f32 %v4514, 1.0
  %v4579 = vadd.f32 %v4515, 1.0
  %v4580 = vadd.f32 %v4516, 1.0
  %v4581 = vadd.f32 %v4517, 1.0
  %v4582 = vadd.f32 %v4518, 1.0
  %v4583 = vadd.f32 %v4519, 1.0
  %v4584 = vadd.f32 %v4520, 1.0
  %v4585 = vadd.f32 %v4521, 1.0
  %v4586 = vadd.f32 %v4522, 1.0
  %v4587 = vadd.f32 %v4523, 1.0
  %v4588 = vadd.f32 %v4524, 1.0
  %v4589 = vadd.f32 %v4525, 1.0
  %v4590 = vadd.f32 %v4526, 1.0
  %v4591 = vadd.f32 %v4527, 1.0
  %v4592 = vadd.f32 %v4528, 1.0
  %v4593 = vadd.f32 %v4529, 1.0
  %v4594 = vadd.f32 %v4530, 1.0
  %v4595 = vadd.f32 %v4531, 1.0
  %v4596 = vadd.f32 %v4532, 1.0
  %v4597 = vadd.f32 %v4533, 1.0
  %v4598 = vadd.f32 %v4534, 1.0
  %v4599 = vadd.f32 %v4535, 1.0
  %v4600 = vadd.f32 %v4536, 1.0
  %v4601 = vadd.f32 %v4537, 1.0
  %v4602 = vadd.f32 %v4538, 1.0
  %v4603 = vadd.f32 %v4539, 1.0
  %v4604 = vadd.f32 %v4540, 1.0
  %v4605 = vadd.f32 %v4541, 1.0
  %v4606 = vadd.f32 %v4542, 1.0
  %v4607 = vadd.f32 %v4543, 1.0
  %v4608 = vadd.f32 %v4544, 1.0
  %v4609 = vadd.f32 %v4545, 1.0
  %v4610 = vrcp.pop %v4546
  %v4611 = vrcp.pop %v4547
  %v4612 = vrcp.pop %v4548
  %v4613 = vrcp.pop %v4549
  %v4614 = vrcp.pop %v4550
  %v4615 = vrcp.pop %v4551
  %v4616 = vrcp.pop %v4552
  %v4617 = vrcp.pop %v4553
  %v4618 = vrcp.pop %v4554
  %v4619 = vrcp.pop %v4555
  %v4620 = vrcp.pop %v4556
  %v4621 = vrcp.pop %v4557
  %v4622 = vrcp.pop %v4558
  %v4623 = vrcp.pop %v4559
  %v4624 = vrcp.pop %v4560
  %v4625 = vrcp.pop %v4561
  %v4626 = vrcp.pop %v4562
  %v4627 = vrcp.pop %v4563
  %v4628 = vrcp.pop %v4564
  %v4629 = vrcp.pop %v4565
  %v4630 = vrcp.pop %v4566
  %v4631 = vrcp.pop %v4567
  %v4632 = vrcp.pop %v4568
  %v4633 = vrcp.pop %v4569
  %v4634 = vrcp.pop %v4570
  %v4635 = vrcp.pop %v4571
  %v4636 = vrcp.pop %v4572
  %v4637 = vrcp.pop %v4573
  %v4638 = vrcp.pop %v4574
  %v4639 = vrcp.pop %v4575
  %v4640 = vrcp.pop %v4576
  %v4641 = vrcp.pop %v4577
  %v4642 = vrcp.pop %v4578
  %v4643 = vrcp.pop %v4579
  %v4644 = vrcp.pop %v4580
  %v4645 = vrcp.pop %v4581
  %v4646 = vrcp.pop %v4582
  %v4647 = vrcp.pop %v4583
  %v4648 = vrcp.pop %v4584
  %v4649 = vrcp.pop %v4585
  %v4650 = vrcp.pop %v4586
  %v4651 = vrcp.pop %v4587
  %v4652 = vrcp.pop %v4588
  %v4653 = vrcp.pop %v4589
  %v4654 = vrcp.pop %v4590
  %v4655 = vrcp.pop %v4591
  %v4656 = vrcp.pop %v4592
  %v4657 = vrcp.pop %v4593
  %v4658 = vrcp.pop %v4594
  %v4659 = vrcp.pop %v4595
  %v4660 = vrcp.pop %v4596
  %v4661 = vrcp.pop %v4597
  %v4662 = vrcp.pop %v4598
  %v4663 = vrcp.pop %v4599
  %v4664 = vrcp.pop %v4600
  %v4665 = vrcp.pop %v4601
  %v4666 = vrcp.pop %v4602
  %v4667 = vrcp.pop %v4603
  %v4668 = vrcp.pop %v4604
  %v4669 = vrcp.pop %v4605
  %v4670 = vrcp.pop %v4606
  %v4671 = vrcp.pop %v4607
  %v4672 = vrcp.pop %v4608
  %v4673 = vrcp.pop %v4609
  %v4674 = vmul.f32 %v4610, 1.0614054
  %v4675 = vmul.f32 %v4611, 1.0614054
  %v4676 = vmul.f32 %v4612, 1.0614054
  %v4677 = vmul.f32 %v4613, 1.0614054
  %v4678 = vmul.f32 %v4614, 1.0614054
  %v4679 = vmul.f32 %v4615, 1.0614054
  %v4680 = vmul.f32 %v4616, 1.0614054
  %v4681 = vmul.f32 %v4617, 1.0614054
  %v4682 = vmul.f32 %v4618, 1.0614054
  %v4683 = vmul.f32 %v4619, 1.0614054
  %v4684 = vmul.f32 %v4620, 1.0614054
  %v4685 = vmul.f32 %v4621, 1.0614054
  %v4686 = vmul.f32 %v4622, 1.0614054
  %v4687 = vmul.f32 %v4623, 1.0614054
  %v4688 = vmul.f32 %v4624, 1.0614054
  %v4689 = vmul.f32 %v4625, 1.0614054
  %v4690 = vmul.f32 %v4626, 1.0614054
  %v4691 = vmul.f32 %v4627, 1.0614054
  %v4692 = vmul.f32 %v4628, 1.0614054
  %v4693 = vmul.f32 %v4629, 1.0614054
  %v4694 = vmul.f32 %v4630, 1.0614054
  %v4695 = vmul.f32 %v4631, 1.0614054
  %v4696 = vmul.f32 %v4632, 1.0614054
  %v4697 = vmul.f32 %v4633, 1.0614054
  %v4698 = vmul.f32 %v4634, 1.0614054
  %v4699 = vmul.f32 %v4635, 1.0614054
  %v4700 = vmul.f32 %v4636, 1.0614054
  %v4701 = vmul.f32 %v4637, 1.0614054
  %v4702 = vmul.f32 %v4638, 1.0614054
  %v4703 = vmul.f32 %v4639, 1.0614054
  %v4704 = vmul.f32 %v4640, 1.0614054
  %v4705 = vmul.f32 %v4641, 1.0614054
  %v4706 = vmul.f32 %v4642, 1.0614054
  %v4707 = vmul.f32 %v4643, 1.0614054
  %v4708 = vmul.f32 %v4644, 1.0614054
  %v4709 = vmul.f32 %v4645, 1.0614054
  %v4710 = vmul.f32 %v4646, 1.0614054
  %v4711 = vmul.f32 %v4647, 1.0614054
  %v4712 = vmul.f32 %v4648, 1.0614054
  %v4713 = vmul.f32 %v4649, 1.0614054
  %v4714 = vmul.f32 %v4650, 1.0614054
  %v4715 = vmul.f32 %v4651, 1.0614054
  %v4716 = vmul.f32 %v4652, 1.0614054
  %v4717 = vmul.f32 %v4653, 1.0614054
  %v4718 = vmul.f32 %v4654, 1.0614054
  %v4719 = vmul.f32 %v4655, 1.0614054
  %v4720 = vmul.f32 %v4656, 1.0614054
  %v4721 = vmul.f32 %v4657, 1.0614054
  %v4722 = vmul.f32 %v4658, 1.0614054
  %v4723 = vmul.f32 %v4659, 1.0614054
  %v4724 = vmul.f32 %v4660, 1.0614054
  %v4725 = vmul.f32 %v4661, 1.0614054
  %v4726 = vmul.f32 %v4662, 1.0614054
  %v4727 = vmul.f32 %v4663, 1.0614054
  %v4728 = vmul.f32 %v4664, 1.0614054
  %v4729 = vmul.f32 %v4665, 1.0614054
  %v4730 = vmul.f32 %v4666, 1.0614054
  %v4731 = vmul.f32 %v4667, 1.0614054
  %v4732 = vmul.f32 %v4668, 1.0614054
  %v4733 = vmul.f32 %v4669, 1.0614054
  %v4734 = vmul.f32 %v4670, 1.0614054
  %v4735 = vmul.f32 %v4671, 1.0614054
  %v4736 = vmul.f32 %v4672, 1.0614054
  %v4737 = vmul.f32 %v4673, 1.0614054
  %v4738 = vsub.f32 %v4674, 1.4531521
  %v4739 = vsub.f32 %v4675, 1.4531521
  %v4740 = vsub.f32 %v4676, 1.4531521
  %v4741 = vsub.f32 %v4677, 1.4531521
  %v4742 = vsub.f32 %v4678, 1.4531521
  %v4743 = vsub.f32 %v4679, 1.4531521
  %v4744 = vsub.f32 %v4680, 1.4531521
  %v4745 = vsub.f32 %v4681, 1.4531521
  %v4746 = vsub.f32 %v4682, 1.4531521
  %v4747 = vsub.f32 %v4683, 1.4531521
  %v4748 = vsub.f32 %v4684, 1.4531521
  %v4749 = vsub.f32 %v4685, 1.4531521
  %v4750 = vsub.f32 %v4686, 1.4531521
  %v4751 = vsub.f32 %v4687, 1.4531521
  %v4752 = vsub.f32 %v4688, 1.4531521
  %v4753 = vsub.f32 %v4689, 1.4531521
  %v4754 = vsub.f32 %v4690, 1.4531521
  %v4755 = vsub.f32 %v4691, 1.4531521
  %v4756 = vsub.f32 %v4692, 1.4531521
  %v4757 = vsub.f32 %v4693, 1.4531521
  %v4758 = vsub.f32 %v4694, 1.4531521
  %v4759 = vsub.f32 %v4695, 1.4531521
  %v4760 = vsub.f32 %v4696, 1.4531521
  %v4761 = vsub.f32 %v4697, 1.4531521
  %v4762 = vsub.f32 %v4698, 1.4531521
  %v4763 = vsub.f32 %v4699, 1.4531521
  %v4764 = vsub.f32 %v4700, 1.4531521
  %v4765 = vsub.f32 %v4701, 1.4531521
  %v4766 = vsub.f32 %v4702, 1.4531521
  %v4767 = vsub.f32 %v4703, 1.4531521
  %v4768 = vsub.f32 %v4704, 1.4531521
  %v4769 = vsub.f32 %v4705, 1.4531521
  %v4770 = vsub.f32 %v4706, 1.4531521
  %v4771 = vsub.f32 %v4707, 1.4531521
  %v4772 = vsub.f32 %v4708, 1.4531521
  %v4773 = vsub.f32 %v4709, 1.4531521
  %v4774 = vsub.f32 %v4710, 1.4531521
  %v4775 = vsub.f32 %v4711, 1.4531521
  %v4776 = vsub.f32 %v4712, 1.4531521
  %v4777 = vsub.f32 %v4713, 1.4531521
  %v4778 = vsub.f32 %v4714, 1.4531521
  %v4779 = vsub.f32 %v4715, 1.4531521
  %v4780 = vsub.f32 %v4716, 1.4531521
  %v4781 = vsub.f32 %v4717, 1.4531521
  %v4782 = vsub.f32 %v4718, 1.4531521
  %v4783 = vsub.f32 %v4719, 1.4531521
  %v4784 = vsub.f32 %v4720, 1.4531521
  %v4785 = vsub.f32 %v4721, 1.4531521
  %v4786 = vsub.f32 %v4722, 1.4531521
  %v4787 = vsub.f32 %v4723, 1.4531521
  %v4788 = vsub.f32 %v4724, 1.4531521
  %v4789 = vsub.f32 %v4725, 1.4531521
  %v4790 = vsub.f32 %v4726, 1.4531521
  %v4791 = vsub.f32 %v4727, 1.4531521
  %v4792 = vsub.f32 %v4728, 1.4531521
  %v4793 = vsub.f32 %v4729, 1.4531521
  %v4794 = vsub.f32 %v4730, 1.4531521
  %v4795 = vsub.f32 %v4731, 1.4531521
  %v4796 = vsub.f32 %v4732, 1.4531521
  %v4797 = vsub.f32 %v4733, 1.4531521
  %v4798 = vsub.f32 %v4734, 1.4531521
  %v4799 = vsub.f32 %v4735, 1.4531521
  %v4800 = vsub.f32 %v4736, 1.4531521
  %v4801 = vsub.f32 %v4737, 1.4531521
  %v4802 = vmul.f32 %v4738, %v4610
  %v4803 = vmul.f32 %v4739, %v4611
  %v4804 = vmul.f32 %v4740, %v4612
  %v4805 = vmul.f32 %v4741, %v4613
  %v4806 = vmul.f32 %v4742, %v4614
  %v4807 = vmul.f32 %v4743, %v4615
  %v4808 = vmul.f32 %v4744, %v4616
  %v4809 = vmul.f32 %v4745, %v4617
  %v4810 = vmul.f32 %v4746, %v4618
  %v4811 = vmul.f32 %v4747, %v4619
  %v4812 = vmul.f32 %v4748, %v4620
  %v4813 = vmul.f32 %v4749, %v4621
  %v4814 = vmul.f32 %v4750, %v4622
  %v4815 = vmul.f32 %v4751, %v4623
  %v4816 = vmul.f32 %v4752, %v4624
  %v4817 = vmul.f32 %v4753, %v4625
  %v4818 = vmul.f32 %v4754, %v4626
  %v4819 = vmul.f32 %v4755, %v4627
  %v4820 = vmul.f32 %v4756, %v4628
  %v4821 = vmul.f32 %v4757, %v4629
  %v4822 = vmul.f32 %v4758, %v4630
  %v4823 = vmul.f32 %v4759, %v4631
  %v4824 = vmul.f32 %v4760, %v4632
  %v4825 = vmul.f32 %v4761, %v4633
  %v4826 = vmul.f32 %v4762, %v4634
  %v4827 = vmul.f32 %v4763, %v4635
  %v4828 = vmul.f32 %v4764, %v4636
  %v4829 = vmul.f32 %v4765, %v4637
  %v4830 = vmul.f32 %v4766, %v4638
  %v4831 = vmul.f32 %v4767, %v4639
  %v4832 = vmul.f32 %v4768, %v4640
  %v4833 = vmul.f32 %v4769, %v4641
  %v4834 = vmul.f32 %v4770, %v4642
  %v4835 = vmul.f32 %v4771, %v4643
  %v4836 = vmul.f32 %v4772, %v4644
  %v4837 = vmul.f32 %v4773, %v4645
  %v4838 = vmul.f32 %v4774, %v4646
  %v4839 = vmul.f32 %v4775, %v4647
  %v4840 = vmul.f32 %v4776, %v4648
  %v4841 = vmul.f32 %v4777, %v4649
  %v4842 = vmul.f32 %v4778, %v4650
  %v4843 = vmul.f32 %v4779, %v4651
  %v4844 = vmul.f32 %v4780, %v4652
  %v4845 = vmul.f32 %v4781, %v4653
  %v4846 = vmul.f32 %v4782, %v4654
  %v4847 = vmul.f32 %v4783, %v4655
  %v4848 = vmul.f32 %v4784, %v4656
  %v4849 = vmul.f32 %v4785, %v4657
  %v4850 = vmul.f32 %v4786, %v4658
  %v4851 = vmul.f32 %v4787, %v4659
  %v4852 = vmul.f32 %v4788, %v4660
  %v4853 = vmul.f32 %v4789, %v4661
  %v4854 = vmul.f32 %v4790, %v4662
  %v4855 = vmul.f32 %v4791, %v4663
  %v4856 = vmul.f32 %v4792, %v4664
  %v4857 = vmul.f32 %v4793, %v4665
  %v4858 = vmul.f32 %v4794, %v4666
  %v4859 = vmul.f32 %v4795, %v4667
  %v4860 = vmul.f32 %v4796, %v4668
  %v4861 = vmul.f32 %v4797, %v4669
  %v4862 = vmul.f32 %v4798, %v4670
  %v4863 = vmul.f32 %v4799, %v4671
  %v4864 = vmul.f32 %v4800, %v4672
  %v4865 = vmul.f32 %v4801, %v4673
  %v4866 = vadd.f32 %v4802, 1.4214138
  %v4867 = vadd.f32 %v4803, 1.4214138
  %v4868 = vadd.f32 %v4804, 1.4214138
  %v4869 = vadd.f32 %v4805, 1.4214138
  %v4870 = vadd.f32 %v4806, 1.4214138
  %v4871 = vadd.f32 %v4807, 1.4214138
  %v4872 = vadd.f32 %v4808, 1.4214138
  %v4873 = vadd.f32 %v4809, 1.4214138
  %v4874 = vadd.f32 %v4810, 1.4214138
  %v4875 = vadd.f32 %v4811, 1.4214138
  %v4876 = vadd.f32 %v4812, 1.4214138
  %v4877 = vadd.f32 %v4813, 1.4214138
  %v4878 = vadd.f32 %v4814, 1.4214138
  %v4879 = vadd.f32 %v4815, 1.4214138
  %v4880 = vadd.f32 %v4816, 1.4214138
  %v4881 = vadd.f32 %v4817, 1.4214138
  %v4882 = vadd.f32 %v4818, 1.4214138
  %v4883 = vadd.f32 %v4819, 1.4214138
  %v4884 = vadd.f32 %v4820, 1.4214138
  %v4885 = vadd.f32 %v4821, 1.4214138
  %v4886 = vadd.f32 %v4822, 1.4214138
  %v4887 = vadd.f32 %v4823, 1.4214138
  %v4888 = vadd.f32 %v4824, 1.4214138
  %v4889 = vadd.f32 %v4825, 1.4214138
  %v4890 = vadd.f32 %v4826, 1.4214138
  %v4891 = vadd.f32 %v4827, 1.4214138
  %v4892 = vadd.f32 %v4828, 1.4214138
  %v4893 = vadd.f32 %v4829, 1.4214138
  %v4894 = vadd.f32 %v4830, 1.4214138
  %v4895 = vadd.f32 %v4831, 1.4214138
  %v4896 = vadd.f32 %v4832, 1.4214138
  %v4897 = vadd.f32 %v4833, 1.4214138
  %v4898 = vadd.f32 %v4834, 1.4214138
  %v4899 = vadd.f32 %v4835, 1.4214138
  %v4900 = vadd.f32 %v4836, 1.4214138
  %v4901 = vadd.f32 %v4837, 1.4214138
  %v4902 = vadd.f32 %v4838, 1.4214138
  %v4903 = vadd.f32 %v4839, 1.4214138
  %v4904 = vadd.f32 %v4840, 1.4214138
  %v4905 = vadd.f32 %v4841, 1.4214138
  %v4906 = vadd.f32 %v4842, 1.4214138
  %v4907 = vadd.f32 %v4843, 1.4214138
  %v4908 = vadd.f32 %v4844, 1.4214138
  %v4909 = vadd.f32 %v4845, 1.4214138
  %v4910 = vadd.f32 %v4846, 1.4214138
  %v4911 = vadd.f32 %v4847, 1.4214138
  %v4912 = vadd.f32 %v4848, 1.4214138
  %v4913 = vadd.f32 %v4849, 1.4214138
  %v4914 = vadd.f32 %v4850, 1.4214138
  %v4915 = vadd.f32 %v4851, 1.4214138
  %v4916 = vadd.f32 %v4852, 1.4214138
  %v4917 = vadd.f32 %v4853, 1.4214138
  %v4918 = vadd.f32 %v4854, 1.4214138
  %v4919 = vadd.f32 %v4855, 1.4214138
  %v4920 = vadd.f32 %v4856, 1.4214138
  %v4921 = vadd.f32 %v4857, 1.4214138
  %v4922 = vadd.f32 %v4858, 1.4214138
  %v4923 = vadd.f32 %v4859, 1.4214138
  %v4924 = vadd.f32 %v4860, 1.4214138
  %v4925 = vadd.f32 %v4861, 1.4214138
  %v4926 = vadd.f32 %v4862, 1.4214138
  %v4927 = vadd.f32 %v4863, 1.4214138
  %v4928 = vadd.f32 %v4864, 1.4214138
  %v4929 = vadd.f32 %v4865, 1.4214138
  %v4930 = vmul.f32 %v4866, %v4610
  %v4931 = vmul.f32 %v4867, %v4611
  %v4932 = vmul.f32 %v4868, %v4612
  %v4933 = vmul.f32 %v4869, %v4613
  %v4934 = vmul.f32 %v4870, %v4614
  %v4935 = vmul.f32 %v4871, %v4615
  %v4936 = vmul.f32 %v4872, %v4616
  %v4937 = vmul.f32 %v4873, %v4617
  %v4938 = vmul.f32 %v4874, %v4618
  %v4939 = vmul.f32 %v4875, %v4619
  %v4940 = vmul.f32 %v4876, %v4620
  %v4941 = vmul.f32 %v4877, %v4621
  %v4942 = vmul.f32 %v4878, %v4622
  %v4943 = vmul.f32 %v4879, %v4623
  %v4944 = vmul.f32 %v4880, %v4624
  %v4945 = vmul.f32 %v4881, %v4625
  %v4946 = vmul.f32 %v4882, %v4626
  %v4947 = vmul.f32 %v4883, %v4627
  %v4948 = vmul.f32 %v4884, %v4628
  %v4949 = vmul.f32 %v4885, %v4629
  %v4950 = vmul.f32 %v4886, %v4630
  %v4951 = vmul.f32 %v4887, %v4631
  %v4952 = vmul.f32 %v4888, %v4632
  %v4953 = vmul.f32 %v4889, %v4633
  %v4954 = vmul.f32 %v4890, %v4634
  %v4955 = vmul.f32 %v4891, %v4635
  %v4956 = vmul.f32 %v4892, %v4636
  %v4957 = vmul.f32 %v4893, %v4637
  %v4958 = vmul.f32 %v4894, %v4638
  %v4959 = vmul.f32 %v4895, %v4639
  %v4960 = vmul.f32 %v4896, %v4640
  %v4961 = vmul.f32 %v4897, %v4641
  %v4962 = vmul.f32 %v4898, %v4642
  %v4963 = vmul.f32 %v4899, %v4643
  %v4964 = vmul.f32 %v4900, %v4644
  %v4965 = vmul.f32 %v4901, %v4645
  %v4966 = vmul.f32 %v4902, %v4646
  %v4967 = vmul.f32 %v4903, %v4647
  %v4968 = vmul.f32 %v4904, %v4648
  %v4969 = vmul.f32 %v4905, %v4649
  %v4970 = vmul.f32 %v4906, %v4650
  %v4971 = vmul.f32 %v4907, %v4651
  %v4972 = vmul.f32 %v4908, %v4652
  %v4973 = vmul.f32 %v4909, %v4653
  %v4974 = vmul.f32 %v4910, %v4654
  %v4975 = vmul.f32 %v4911, %v4655
  %v4976 = vmul.f32 %v4912, %v4656
  %v4977 = vmul.f32 %v4913, %v4657
  %v4978 = vmul.f32 %v4914, %v4658
  %v4979 = vmul.f32 %v4915, %v4659
  %v4980 = vmul.f32 %v4916, %v4660
  %v4981 = vmul.f32 %v4917, %v4661
  %v4982 = vmul.f32 %v4918, %v4662
  %v4983 = vmul.f32 %v4919, %v4663
  %v4984 = vmul.f32 %v4920, %v4664
  %v4985 = vmul.f32 %v4921, %v4665
  %v4986 = vmul.f32 %v4922, %v4666
  %v4987 = vmul.f32 %v4923, %v4667
  %v4988 = vmul.f32 %v4924, %v4668
  %v4989 = vmul.f32 %v4925, %v4669
  %v4990 = vmul.f32 %v4926, %v4670
  %v4991 = vmul.f32 %v4927, %v4671
  %v4992 = vmul.f32 %v4928, %v4672
  %v4993 = vmul.f32 %v4929, %v4673
  %v4994 = vsub.f32 %v4930, 0.28449672
  %v4995 = vsub.f32 %v4931, 0.28449672
  %v4996 = vsub.f32 %v4932, 0.28449672
  %v4997 = vsub.f32 %v4933, 0.28449672
  %v4998 = vsub.f32 %v4934, 0.28449672
  %v4999 = vsub.f32 %v4935, 0.28449672
  %v5000 = vsub.f32 %v4936, 0.28449672
  %v5001 = vsub.f32 %v4937, 0.28449672
  %v5002 = vsub.f32 %v4938, 0.28449672
  %v5003 = vsub.f32 %v4939, 0.28449672
  %v5004 = vsub.f32 %v4940, 0.28449672
  %v5005 = vsub.f32 %v4941, 0.28449672
  %v5006 = vsub.f32 %v4942, 0.28449672
  %v5007 = vsub.f32 %v4943, 0.28449672
  %v5008 = vsub.f32 %v4944, 0.28449672
  %v5009 = vsub.f32 %v4945, 0.28449672
  %v5010 = vsub.f32 %v4946, 0.28449672
  %v5011 = vsub.f32 %v4947, 0.28449672
  %v5012 = vsub.f32 %v4948, 0.28449672
  %v5013 = vsub.f32 %v4949, 0.28449672
  %v5014 = vsub.f32 %v4950, 0.28449672
  %v5015 = vsub.f32 %v4951, 0.28449672
  %v5016 = vsub.f32 %v4952, 0.28449672
  %v5017 = vsub.f32 %v4953, 0.28449672
  %v5018 = vsub.f32 %v4954, 0.28449672
  %v5019 = vsub.f32 %v4955, 0.28449672
  %v5020 = vsub.f32 %v4956, 0.28449672
  %v5021 = vsub.f32 %v4957, 0.28449672
  %v5022 = vsub.f32 %v4958, 0.28449672
  %v5023 = vsub.f32 %v4959, 0.28449672
  %v5024 = vsub.f32 %v4960, 0.28449672
  %v5025 = vsub.f32 %v4961, 0.28449672
  %v5026 = vsub.f32 %v4962, 0.28449672
  %v5027 = vsub.f32 %v4963, 0.28449672
  %v5028 = vsub.f32 %v4964, 0.28449672
  %v5029 = vsub.f32 %v4965, 0.28449672
  %v5030 = vsub.f32 %v4966, 0.28449672
  %v5031 = vsub.f32 %v4967, 0.28449672
  %v5032 = vsub.f32 %v4968, 0.28449672
  %v5033 = vsub.f32 %v4969, 0.28449672
  %v5034 = vsub.f32 %v4970, 0.28449672
  %v5035 = vsub.f32 %v4971, 0.28449672
  %v5036 = vsub.f32 %v4972, 0.28449672
  %v5037 = vsub.f32 %v4973, 0.28449672
  %v5038 = vsub.f32 %v4974, 0.28449672
  %v5039 = vsub.f32 %v4975, 0.28449672
  %v5040 = vsub.f32 %v4976, 0.28449672
  %v5041 = vsub.f32 %v4977, 0.28449672
  %v5042 = vsub.f32 %v4978, 0.28449672
  %v5043 = vsub.f32 %v4979, 0.28449672
  %v5044 = vsub.f32 %v4980, 0.28449672
  %v5045 = vsub.f32 %v4981, 0.28449672
  %v5046 = vsub.f32 %v4982, 0.28449672
  %v5047 = vsub.f32 %v4983, 0.28449672
  %v5048 = vsub.f32 %v4984, 0.28449672
  %v5049 = vsub.f32 %v4985, 0.28449672
  %v5050 = vsub.f32 %v4986, 0.28449672
  %v5051 = vsub.f32 %v4987, 0.28449672
  %v5052 = vsub.f32 %v4988, 0.28449672
  %v5053 = vsub.f32 %v4989, 0.28449672
  %v5054 = vsub.f32 %v4990, 0.28449672
  %v5055 = vsub.f32 %v4991, 0.28449672
  %v5056 = vsub.f32 %v4992, 0.28449672
  %v5057 = vsub.f32 %v4993, 0.28449672
  %v5058 = vmul.f32 %v4994, %v4610
  %v5059 = vmul.f32 %v4995, %v4611
  %v5060 = vmul.f32 %v4996, %v4612
  %v5061 = vmul.f32 %v4997, %v4613
  %v5062 = vmul.f32 %v4998, %v4614
  %v5063 = vmul.f32 %v4999, %v4615
  %v5064 = vmul.f32 %v5000, %v4616
  %v5065 = vmul.f32 %v5001, %v4617
  %v5066 = vmul.f32 %v5002, %v4618
  %v5067 = vmul.f32 %v5003, %v4619
  %v5068 = vmul.f32 %v5004, %v4620
  %v5069 = vmul.f32 %v5005, %v4621
  %v5070 = vmul.f32 %v5006, %v4622
  %v5071 = vmul.f32 %v5007, %v4623
  %v5072 = vmul.f32 %v5008, %v4624
  %v5073 = vmul.f32 %v5009, %v4625
  %v5074 = vmul.f32 %v5010, %v4626
  %v5075 = vmul.f32 %v5011, %v4627
  %v5076 = vmul.f32 %v5012, %v4628
  %v5077 = vmul.f32 %v5013, %v4629
  %v5078 = vmul.f32 %v5014, %v4630
  %v5079 = vmul.f32 %v5015, %v4631
  %v5080 = vmul.f32 %v5016, %v4632
  %v5081 = vmul.f32 %v5017, %v4633
  %v5082 = vmul.f32 %v5018, %v4634
  %v5083 = vmul.f32 %v5019, %v4635
  %v5084 = vmul.f32 %v5020, %v4636
  %v5085 = vmul.f32 %v5021, %v4637
  %v5086 = vmul.f32 %v5022, %v4638
  %v5087 = vmul.f32 %v5023, %v4639
  %v5088 = vmul.f32 %v5024, %v4640
  %v5089 = vmul.f32 %v5025, %v4641
  %v5090 = vmul.f32 %v5026, %v4642
  %v5091 = vmul.f32 %v5027, %v4643
  %v5092 = vmul.f32 %v5028, %v4644
  %v5093 = vmul.f32 %v5029, %v4645
  %v5094 = vmul.f32 %v5030, %v4646
  %v5095 = vmul.f32 %v5031, %v4647
  %v5096 = vmul.f32 %v5032, %v4648
  %v5097 = vmul.f32 %v5033, %v4649
  %v5098 = vmul.f32 %v5034, %v4650
  %v5099 = vmul.f32 %v5035, %v4651
  %v5100 = vmul.f32 %v5036, %v4652
  %v5101 = vmul.f32 %v5037, %v4653
  %v5102 = vmul.f32 %v5038, %v4654
  %v5103 = vmul.f32 %v5039, %v4655
  %v5104 = vmul.f32 %v5040, %v4656
  %v5105 = vmul.f32 %v5041, %v4657
  %v5106 = vmul.f32 %v5042, %v4658
  %v5107 = vmul.f32 %v5043, %v4659
  %v5108 = vmul.f32 %v5044, %v4660
  %v5109 = vmul.f32 %v5045, %v4661
  %v5110 = vmul.f32 %v5046, %v4662
  %v5111 = vmul.f32 %v5047, %v4663
  %v5112 = vmul.f32 %v5048, %v4664
  %v5113 = vmul.f32 %v5049, %v4665
  %v5114 = vmul.f32 %v5050, %v4666
  %v5115 = vmul.f32 %v5051, %v4667
  %v5116 = vmul.f32 %v5052, %v4668
  %v5117 = vmul.f32 %v5053, %v4669
  %v5118 = vmul.f32 %v5054, %v4670
  %v5119 = vmul.f32 %v5055, %v4671
  %v5120 = vmul.f32 %v5056, %v4672
  %v5121 = vmul.f32 %v5057, %v4673
  %v5122 = vadd.f32 %v5058, 0.2548296
  %v5123 = vadd.f32 %v5059, 0.2548296
  %v5124 = vadd.f32 %v5060, 0.2548296
  %v5125 = vadd.f32 %v5061, 0.2548296
  %v5126 = vadd.f32 %v5062, 0.2548296
  %v5127 = vadd.f32 %v5063, 0.2548296
  %v5128 = vadd.f32 %v5064, 0.2548296
  %v5129 = vadd.f32 %v5065, 0.2548296
  %v5130 = vadd.f32 %v5066, 0.2548296
  %v5131 = vadd.f32 %v5067, 0.2548296
  %v5132 = vadd.f32 %v5068, 0.2548296
  %v5133 = vadd.f32 %v5069, 0.2548296
  %v5134 = vadd.f32 %v5070, 0.2548296
  %v5135 = vadd.f32 %v5071, 0.2548296
  %v5136 = vadd.f32 %v5072, 0.2548296
  %v5137 = vadd.f32 %v5073, 0.2548296
  %v5138 = vadd.f32 %v5074, 0.2548296
  %v5139 = vadd.f32 %v5075, 0.2548296
  %v5140 = vadd.f32 %v5076, 0.2548296
  %v5141 = vadd.f32 %v5077, 0.2548296
  %v5142 = vadd.f32 %v5078, 0.2548296
  %v5143 = vadd.f32 %v5079, 0.2548296
  %v5144 = vadd.f32 %v5080, 0.2548296
  %v5145 = vadd.f32 %v5081, 0.2548296
  %v5146 = vadd.f32 %v5082, 0.2548296
  %v5147 = vadd.f32 %v5083, 0.2548296
  %v5148 = vadd.f32 %v5084, 0.2548296
  %v5149 = vadd.f32 %v5085, 0.2548296
  %v5150 = vadd.f32 %v5086, 0.2548296
  %v5151 = vadd.f32 %v5087, 0.2548296
  %v5152 = vadd.f32 %v5088, 0.2548296
  %v5153 = vadd.f32 %v5089, 0.2548296
  %v5154 = vadd.f32 %v5090, 0.2548296
  %v5155 = vadd.f32 %v5091, 0.2548296
  %v5156 = vadd.f32 %v5092, 0.2548296
  %v5157 = vadd.f32 %v5093, 0.2548296
  %v5158 = vadd.f32 %v5094, 0.2548296
  %v5159 = vadd.f32 %v5095, 0.2548296
  %v5160 = vadd.f32 %v5096, 0.2548296
  %v5161 = vadd.f32 %v5097, 0.2548296
  %v5162 = vadd.f32 %v5098, 0.2548296
  %v5163 = vadd.f32 %v5099, 0.2548296
  %v5164 = vadd.f32 %v5100, 0.2548296
  %v5165 = vadd.f32 %v5101, 0.2548296
  %v5166 = vadd.f32 %v5102, 0.2548296
  %v5167 = vadd.f32 %v5103, 0.2548296
  %v5168 = vadd.f32 %v5104, 0.2548296
  %v5169 = vadd.f32 %v5105, 0.2548296
  %v5170 = vadd.f32 %v5106, 0.2548296
  %v5171 = vadd.f32 %v5107, 0.2548296
  %v5172 = vadd.f32 %v5108, 0.2548296
  %v5173 = vadd.f32 %v5109, 0.2548296
  %v5174 = vadd.f32 %v5110, 0.2548296
  %v5175 = vadd.f32 %v5111, 0.2548296
  %v5176 = vadd.f32 %v5112, 0.2548296
  %v5177 = vadd.f32 %v5113, 0.2548296
  %v5178 = vadd.f32 %v5114, 0.2548296
  %v5179 = vadd.f32 %v5115, 0.2548296
  %v5180 = vadd.f32 %v5116, 0.2548296
  %v5181 = vadd.f32 %v5117, 0.2548296
  %v5182 = vadd.f32 %v5118, 0.2548296
  %v5183 = vadd.f32 %v5119, 0.2548296
  %v5184 = vadd.f32 %v5120, 0.2548296
  %v5185 = vadd.f32 %v5121, 0.2548296
  %v5186 = vmul.f32 %v5122, %v4610
  %v5187 = vmul.f32 %v5123, %v4611
  %v5188 = vmul.f32 %v5124, %v4612
  %v5189 = vmul.f32 %v5125, %v4613
  %v5190 = vmul.f32 %v5126, %v4614
  %v5191 = vmul.f32 %v5127, %v4615
  %v5192 = vmul.f32 %v5128, %v4616
  %v5193 = vmul.f32 %v5129, %v4617
  %v5194 = vmul.f32 %v5130, %v4618
  %v5195 = vmul.f32 %v5131, %v4619
  %v5196 = vmul.f32 %v5132, %v4620
  %v5197 = vmul.f32 %v5133, %v4621
  %v5198 = vmul.f32 %v5134, %v4622
  %v5199 = vmul.f32 %v5135, %v4623
  %v5200 = vmul.f32 %v5136, %v4624
  %v5201 = vmul.f32 %v5137, %v4625
  %v5202 = vmul.f32 %v5138, %v4626
  %v5203 = vmul.f32 %v5139, %v4627
  %v5204 = vmul.f32 %v5140, %v4628
  %v5205 = vmul.f32 %v5141, %v4629
  %v5206 = vmul.f32 %v5142, %v4630
  %v5207 = vmul.f32 %v5143, %v4631
  %v5208 = vmul.f32 %v5144, %v4632
  %v5209 = vmul.f32 %v5145, %v4633
  %v5210 = vmul.f32 %v5146, %v4634
  %v5211 = vmul.f32 %v5147, %v4635
  %v5212 = vmul.f32 %v5148, %v4636
  %v5213 = vmul.f32 %v5149, %v4637
  %v5214 = vmul.f32 %v5150, %v4638
  %v5215 = vmul.f32 %v5151, %v4639
  %v5216 = vmul.f32 %v5152, %v4640
  %v5217 = vmul.f32 %v5153, %v4641
  %v5218 = vmul.f32 %v5154, %v4642
  %v5219 = vmul.f32 %v5155, %v4643
  %v5220 = vmul.f32 %v5156, %v4644
  %v5221 = vmul.f32 %v5157, %v4645
  %v5222 = vmul.f32 %v5158, %v4646
  %v5223 = vmul.f32 %v5159, %v4647
  %v5224 = vmul.f32 %v5160, %v4648
  %v5225 = vmul.f32 %v5161, %v4649
  %v5226 = vmul.f32 %v5162, %v4650
  %v5227 = vmul.f32 %v5163, %v4651
  %v5228 = vmul.f32 %v5164, %v4652
  %v5229 = vmul.f32 %v5165, %v4653
  %v5230 = vmul.f32 %v5166, %v4654
  %v5231 = vmul.f32 %v5167, %v4655
  %v5232 = vmul.f32 %v5168, %v4656
  %v5233 = vmul.f32 %v5169, %v4657
  %v5234 = vmul.f32 %v5170, %v4658
  %v5235 = vmul.f32 %v5171, %v4659
  %v5236 = vmul.f32 %v5172, %v4660
  %v5237 = vmul.f32 %v5173, %v4661
  %v5238 = vmul.f32 %v5174, %v4662
  %v5239 = vmul.f32 %v5175, %v4663
  %v5240 = vmul.f32 %v5176, %v4664
  %v5241 = vmul.f32 %v5177, %v4665
  %v5242 = vmul.f32 %v5178, %v4666
  %v5243 = vmul.f32 %v5179, %v4667
  %v5244 = vmul.f32 %v5180, %v4668
  %v5245 = vmul.f32 %v5181, %v4669
  %v5246 = vmul.f32 %v5182, %v4670
  %v5247 = vmul.f32 %v5183, %v4671
  %v5248 = vmul.f32 %v5184, %v4672
  %v5249 = vmul.f32 %v5185, %v4673
  %v5250 = vmul.f32 %v4163, 0.5
  %v5251 = vmul.f32 %v4165, 0.5
  %v5252 = vmul.f32 %v4276, 0.5
  %v5253 = vmul.f32 %v4278, 0.5
  %v5254 = vmul.f32 %v4167, 0.5
  %v5255 = vmul.f32 %v4169, 0.5
  %v5256 = vmul.f32 %v4280, 0.5
  %v5257 = vmul.f32 %v4282, 0.5
  %v5258 = vmul.f32 %v4173, 0.5
  %v5259 = vmul.f32 %v4175, 0.5
  %v5260 = vmul.f32 %v4286, 0.5
  %v5261 = vmul.f32 %v4288, 0.5
  %v5262 = vmul.f32 %v4177, 0.5
  %v5263 = vmul.f32 %v4179, 0.5
  %v5264 = vmul.f32 %v4290, 0.5
  %v5265 = vmul.f32 %v4292, 0.5
  %v5266 = vmul.f32 %v4183, 0.5
  %v5267 = vmul.f32 %v4185, 0.5
  %v5268 = vmul.f32 %v4296, 0.5
  %v5269 = vmul.f32 %v4298, 0.5
  %v5270 = vmul.f32 %v4187, 0.5
  %v5271 = vmul.f32 %v4189, 0.5
  %v5272 = vmul.f32 %v4300, 0.5
  %v5273 = vmul.f32 %v4302, 0.5
  %v5274 = vmul.f32 %v4193, 0.5
  %v5275 = vmul.f32 %v4195, 0.5
  %v5276 = vmul.f32 %v4306, 0.5
  %v5277 = vmul.f32 %v4308, 0.5
  %v5278 = vmul.f32 %v4197, 0.5
  %v5279 = vmul.f32 %v4199, 0.5
  %v5280 = vmul.f32 %v4310, 0.5
  %v5281 = vmul.f32 %v4312, 0.5
  %v5282 = vmul.f32 %v4203, 0.5
  %v5283 = vmul.f32 %v4205, 0.5
  %v5284 = vmul.f32 %v4316, 0.5
  %v5285 = vmul.f32 %v4318, 0.5
  %v5286 = vmul.f32 %v4207, 0.5
  %v5287 = vmul.f32 %v4209, 0.5
  %v5288 = vmul.f32 %v4320, 0.5
  %v5289 = vmul.f32 %v4322, 0.5
  %v5290 = vmul.f32 %v4213, 0.5
  %v5291 = vmul.f32 %v4215, 0.5
  %v5292 = vmul.f32 %v4326, 0.5
  %v5293 = vmul.f32 %v4328, 0.5
  %v5294 = vmul.f32 %v4217, 0.5
  %v5295 = vmul.f32 %v4219, 0.5
  %v5296 = vmul.f32 %v4330, 0.5
  %v5297 = vmul.f32 %v4332, 0.5
  %v5298 = vmul.f32 %v4223, 0.5
  %v5299 = vmul.f32 %v4225, 0.5
  %v5300 = vmul.f32 %v4336, 0.5
  %v5301 = vmul.f32 %v4338, 0.5
  %v5302 = vmul.f32 %v4227, 0.5
  %v5303 = vmul.f32 %v4229, 0.5
  %v5304 = vmul.f32 %v4340, 0.5
  %v5305 = vmul.f32 %v4342, 0.5
  %v5306 = vmul.f32 %v4233, 0.5
  %v5307 = vmul.f32 %v4235, 0.5
  %v5308 = vmul.f32 %v4346, 0.5
  %v5309 = vmul.f32 %v4348, 0.5
  %v5310 = vmul.f32 %v4237, 0.5
  %v5311 = vmul.f32 %v4239, 0.5
  %v5312 = vmul.f32 %v4350, 0.5
  %v5313 = vmul.f32 %v4352, 0.5
  %v5314 = vmul.f32 %v4354, 0.5
  %v5315 = vmul.f32 %v4355, 0.5
  %v5316 = vmul.f32 %v4356, 0.5
  %v5317 = vmul.f32 %v4357, 0.5
  %v5318 = vmul.f32 %v4358, 0.5
  %v5319 = vmul.f32 %v4359, 0.5
  %v5320 = vmul.f32 %v4360, 0.5
  %v5321 = vmul.f32 %v4361, 0.5
  %v5322 = vmul.f32 %v4362, 0.5
  %v5323 = vmul.f32 %v4363, 0.5
  %v5324 = vmul.f32 %v4364, 0.5
  %v5325 = vmul.f32 %v4365, 0.5
  %v5326 = vmul.f32 %v4366, 0.5
  %v5327 = vmul.f32 %v4367, 0.5
  %v5328 = vmul.f32 %v4368, 0.5
  %v5329 = vmul.f32 %v4369, 0.5
  %v5330 = vmul.f32 %v4370, 0.5
  %v5331 = vmul.f32 %v4371, 0.5
  %v5332 = vmul.f32 %v4372, 0.5
  %v5333 = vmul.f32 %v4373, 0.5
  %v5334 = vmul.f32 %v4374, 0.5
  %v5335 = vmul.f32 %v4375, 0.5
  %v5336 = vmul.f32 %v4376, 0.5
  %v5337 = vmul.f32 %v4377, 0.5
  %v5338 = vmul.f32 %v4378, 0.5
  %v5339 = vmul.f32 %v4379, 0.5
  %v5340 = vmul.f32 %v4380, 0.5
  %v5341 = vmul.f32 %v4381, 0.5
  %v5342 = vmul.f32 %v4382, 0.5
  %v5343 = vmul.f32 %v4383, 0.5
  %v5344 = vmul.f32 %v4384, 0.5
  %v5345 = vmul.f32 %v4385, 0.5
  %v5346 = vmul.f32 %v4386, 0.5
  %v5347 = vmul.f32 %v4387, 0.5
  %v5348 = vmul.f32 %v4388, 0.5
  %v5349 = vmul.f32 %v4389, 0.5
  %v5350 = vmul.f32 %v4390, 0.5
  %v5351 = vmul.f32 %v4391, 0.5
  %v5352 = vmul.f32 %v4392, 0.5
  %v5353 = vmul.f32 %v4393, 0.5
  %v5354 = vmul.f32 %v4394, 0.5
  %v5355 = vmul.f32 %v4395, 0.5
  %v5356 = vmul.f32 %v4396, 0.5
  %v5357 = vmul.f32 %v4397, 0.5
  %v5358 = vmul.f32 %v4398, 0.5
  %v5359 = vmul.f32 %v4399, 0.5
  %v5360 = vmul.f32 %v4400, 0.5
  %v5361 = vmul.f32 %v4401, 0.5
  %v5362 = vmul.f32 %v4402, 0.5
  %v5363 = vmul.f32 %v4403, 0.5
  %v5364 = vmul.f32 %v4404, 0.5
  %v5365 = vmul.f32 %v4405, 0.5
  %v5366 = vmul.f32 %v4406, 0.5
  %v5367 = vmul.f32 %v4407, 0.5
  %v5368 = vmul.f32 %v4408, 0.5
  %v5369 = vmul.f32 %v4409, 0.5
  %v5370 = vmul.f32 %v4410, 0.5
  %v5371 = vmul.f32 %v4411, 0.5
  %v5372 = vmul.f32 %v4412, 0.5
  %v5373 = vmul.f32 %v4413, 0.5
  %v5374 = vmul.f32 %v4414, 0.5
  %v5375 = vmul.f32 %v4415, 0.5
  %v5376 = vmul.f32 %v4416, 0.5
  %v5377 = vmul.f32 %v4417, 0.5
  %v5378 = vsub.f32 0.0, %v4418
  %v5379 = vsub.f32 0.0, %v4419
  %v5380 = vsub.f32 0.0, %v4420
  %v5381 = vsub.f32 0.0, %v4421
  %v5382 = vsub.f32 0.0, %v4422
  %v5383 = vsub.f32 0.0, %v4423
  %v5384 = vsub.f32 0.0, %v4424
  %v5385 = vsub.f32 0.0, %v4425
  %v5386 = vsub.f32 0.0, %v4426
  %v5387 = vsub.f32 0.0, %v4427
  %v5388 = vsub.f32 0.0, %v4428
  %v5389 = vsub.f32 0.0, %v4429
  %v5390 = vsub.f32 0.0, %v4430
  %v5391 = vsub.f32 0.0, %v4431
  %v5392 = vsub.f32 0.0, %v4432
  %v5393 = vsub.f32 0.0, %v4433
  %v5394 = vsub.f32 0.0, %v4434
  %v5395 = vsub.f32 0.0, %v4435
  %v5396 = vsub.f32 0.0, %v4436
  %v5397 = vsub.f32 0.0, %v4437
  %v5398 = vsub.f32 0.0, %v4438
  %v5399 = vsub.f32 0.0, %v4439
  %v5400 = vsub.f32 0.0, %v4440
  %v5401 = vsub.f32 0.0, %v4441
  %v5402 = vsub.f32 0.0, %v4442
  %v5403 = vsub.f32 0.0, %v4443
  %v5404 = vsub.f32 0.0, %v4444
  %v5405 = vsub.f32 0.0, %v4445
  %v5406 = vsub.f32 0.0, %v4446
  %v5407 = vsub.f32 0.0, %v4447
  %v5408 = vsub.f32 0.0, %v4448
  %v5409 = vsub.f32 0.0, %v4449
  %v5410 = vsub.f32 0.0, %v4450
  %v5411 = vsub.f32 0.0, %v4451
  %v5412 = vsub.f32 0.0, %v4452
  %v5413 = vsub.f32 0.0, %v4453
  %v5414 = vsub.f32 0.0, %v4454
  %v5415 = vsub.f32 0.0, %v4455
  %v5416 = vsub.f32 0.0, %v4456
  %v5417 = vsub.f32 0.0, %v4457
  %v5418 = vsub.f32 0.0, %v4458
  %v5419 = vsub.f32 0.0, %v4459
  %v5420 = vsub.f32 0.0, %v4460
  %v5421 = vsub.f32 0.0, %v4461
  %v5422 = vsub.f32 0.0, %v4462
  %v5423 = vsub.f32 0.0, %v4463
  %v5424 = vsub.f32 0.0, %v4464
  %v5425 = vsub.f32 0.0, %v4465
  %v5426 = vsub.f32 0.0, %v4466
  %v5427 = vsub.f32 0.0, %v4467
  %v5428 = vsub.f32 0.0, %v4468
  %v5429 = vsub.f32 0.0, %v4469
  %v5430 = vsub.f32 0.0, %v4470
  %v5431 = vsub.f32 0.0, %v4471
  %v5432 = vsub.f32 0.0, %v4472
  %v5433 = vsub.f32 0.0, %v4473
  %v5434 = vsub.f32 0.0, %v4474
  %v5435 = vsub.f32 0.0, %v4475
  %v5436 = vsub.f32 0.0, %v4476
  %v5437 = vsub.f32 0.0, %v4477
  %v5438 = vsub.f32 0.0, %v4478
  %v5439 = vsub.f32 0.0, %v4479
  %v5440 = vsub.f32 0.0, %v4480
  %v5441 = vsub.f32 0.0, %v4481
  %v5442 = vmul.f32 %v5378, %v4418
  %v5443 = vmul.f32 %v5379, %v4419
  %v5444 = vmul.f32 %v5380, %v4420
  %v5445 = vmul.f32 %v5381, %v4421
  %v5446 = vmul.f32 %v5382, %v4422
  %v5447 = vmul.f32 %v5383, %v4423
  %v5448 = vmul.f32 %v5384, %v4424
  %v5449 = vmul.f32 %v5385, %v4425
  %v5450 = vmul.f32 %v5386, %v4426
  %v5451 = vmul.f32 %v5387, %v4427
  %v5452 = vmul.f32 %v5388, %v4428
  %v5453 = vmul.f32 %v5389, %v4429
  %v5454 = vmul.f32 %v5390, %v4430
  %v5455 = vmul.f32 %v5391, %v4431
  %v5456 = vmul.f32 %v5392, %v4432
  %v5457 = vmul.f32 %v5393, %v4433
  %v5458 = vmul.f32 %v5394, %v4434
  %v5459 = vmul.f32 %v5395, %v4435
  %v5460 = vmul.f32 %v5396, %v4436
  %v5461 = vmul.f32 %v5397, %v4437
  %v5462 = vmul.f32 %v5398, %v4438
  %v5463 = vmul.f32 %v5399, %v4439
  %v5464 = vmul.f32 %v5400, %v4440
  %v5465 = vmul.f32 %v5401, %v4441
  %v5466 = vmul.f32 %v5402, %v4442
  %v5467 = vmul.f32 %v5403, %v4443
  %v5468 = vmul.f32 %v5404, %v4444
  %v5469 = vmul.f32 %v5405, %v4445
  %v5470 = vmul.f32 %v5406, %v4446
  %v5471 = vmul.f32 %v5407, %v4447
  %v5472 = vmul.f32 %v5408, %v4448
  %v5473 = vmul.f32 %v5409, %v4449
  %v5474 = vmul.f32 %v5410, %v4450
  %v5475 = vmul.f32 %v5411, %v4451
  %v5476 = vmul.f32 %v5412, %v4452
  %v5477 = vmul.f32 %v5413, %v4453
  %v5478 = vmul.f32 %v5414, %v4454
  %v5479 = vmul.f32 %v5415, %v4455
  %v5480 = vmul.f32 %v5416, %v4456
  %v5481 = vmul.f32 %v5417, %v4457
  %v5482 = vmul.f32 %v5418, %v4458
  %v5483 = vmul.f32 %v5419, %v4459
  %v5484 = vmul.f32 %v5420, %v4460
  %v5485 = vmul.f32 %v5421, %v4461
  %v5486 = vmul.f32 %v5422, %v4462
  %v5487 = vmul.f32 %v5423, %v4463
  %v5488 = vmul.f32 %v5424, %v4464
  %v5489 = vmul.f32 %v5425, %v4465
  %v5490 = vmul.f32 %v5426, %v4466
  %v5491 = vmul.f32 %v5427, %v4467
  %v5492 = vmul.f32 %v5428, %v4468
  %v5493 = vmul.f32 %v5429, %v4469
  %v5494 = vmul.f32 %v5430, %v4470
  %v5495 = vmul.f32 %v5431, %v4471
  %v5496 = vmul.f32 %v5432, %v4472
  %v5497 = vmul.f32 %v5433, %v4473
  %v5498 = vmul.f32 %v5434, %v4474
  %v5499 = vmul.f32 %v5435, %v4475
  %v5500 = vmul.f32 %v5436, %v4476
  %v5501 = vmul.f32 %v5437, %v4477
  %v5502 = vmul.f32 %v5438, %v4478
  %v5503 = vmul.f32 %v5439, %v4479
  %v5504 = vmul.f32 %v5440, %v4480
  %v5505 = vmul.f32 %v5441, %v4481
  %v5506 = vmul.f32 %v5442, 1.442695
  %v5507 = vpow.pop %v5506
  %v5508 = vmul.f32 %v5443, 1.442695
  %v5509 = vpow.pop %v5508
  %v5510 = vmul.f32 %v5444, 1.442695
  %v5511 = vpow.pop %v5510
  %v5512 = vmul.f32 %v5445, 1.442695
  %v5513 = vpow.pop %v5512
  %v5514 = vmul.f32 %v5446, 1.442695
  %v5515 = vpow.pop %v5514
  %v5516 = vmul.f32 %v5447, 1.442695
  %v5517 = vpow.pop %v5516
  %v5518 = vmul.f32 %v5448, 1.442695
  %v5519 = vpow.pop %v5518
  %v5520 = vmul.f32 %v5449, 1.442695
  %v5521 = vpow.pop %v5520
  %v5522 = vmul.f32 %v5450, 1.442695
  %v5523 = vpow.pop %v5522
  %v5524 = vmul.f32 %v5451, 1.442695
  %v5525 = vpow.pop %v5524
  %v5526 = vmul.f32 %v5452, 1.442695
  %v5527 = vpow.pop %v5526
  %v5528 = vmul.f32 %v5453, 1.442695
  %v5529 = vpow.pop %v5528
  %v5530 = vmul.f32 %v5454, 1.442695
  %v5531 = vpow.pop %v5530
  %v5532 = vmul.f32 %v5455, 1.442695
  %v5533 = vpow.pop %v5532
  %v5534 = vmul.f32 %v5456, 1.442695
  %v5535 = vpow.pop %v5534
  %v5536 = vmul.f32 %v5457, 1.442695
  %v5537 = vpow.pop %v5536
  %v5538 = vmul.f32 %v5458, 1.442695
  %v5539 = vpow.pop %v5538
  %v5540 = vmul.f32 %v5459, 1.442695
  %v5541 = vpow.pop %v5540
  %v5542 = vmul.f32 %v5460, 1.442695
  %v5543 = vpow.pop %v5542
  %v5544 = vmul.f32 %v5461, 1.442695
  %v5545 = vpow.pop %v5544
  %v5546 = vmul.f32 %v5462, 1.442695
  %v5547 = vpow.pop %v5546
  %v5548 = vmul.f32 %v5463, 1.442695
  %v5549 = vpow.pop %v5548
  %v5550 = vmul.f32 %v5464, 1.442695
  %v5551 = vpow.pop %v5550
  %v5552 = vmul.f32 %v5465, 1.442695
  %v5553 = vpow.pop %v5552
  %v5554 = vmul.f32 %v5466, 1.442695
  %v5555 = vpow.pop %v5554
  %v5556 = vmul.f32 %v5467, 1.442695
  %v5557 = vpow.pop %v5556
  %v5558 = vmul.f32 %v5468, 1.442695
  %v5559 = vpow.pop %v5558
  %v5560 = vmul.f32 %v5469, 1.442695
  %v5561 = vpow.pop %v5560
  %v5562 = vmul.f32 %v5470, 1.442695
  %v5563 = vpow.pop %v5562
  %v5564 = vmul.f32 %v5471, 1.442695
  %v5565 = vpow.pop %v5564
  %v5566 = vmul.f32 %v5472, 1.442695
  %v5567 = vpow.pop %v5566
  %v5568 = vmul.f32 %v5473, 1.442695
  %v5569 = vpow.pop %v5568
  %v5570 = vmul.f32 %v5474, 1.442695
  %v5571 = vpow.pop %v5570
  %v5572 = vmul.f32 %v5475, 1.442695
  %v5573 = vpow.pop %v5572
  %v5574 = vmul.f32 %v5476, 1.442695
  %v5575 = vpow.pop %v5574
  %v5576 = vmul.f32 %v5477, 1.442695
  %v5577 = vpow.pop %v5576
  %v5578 = vmul.f32 %v5478, 1.442695
  %v5579 = vpow.pop %v5578
  %v5580 = vmul.f32 %v5479, 1.442695
  %v5581 = vpow.pop %v5580
  %v5582 = vmul.f32 %v5480, 1.442695
  %v5583 = vpow.pop %v5582
  %v5584 = vmul.f32 %v5481, 1.442695
  %v5585 = vpow.pop %v5584
  %v5586 = vmul.f32 %v5482, 1.442695
  %v5587 = vpow.pop %v5586
  %v5588 = vmul.f32 %v5483, 1.442695
  %v5589 = vpow.pop %v5588
  %v5590 = vmul.f32 %v5484, 1.442695
  %v5591 = vpow.pop %v5590
  %v5592 = vmul.f32 %v5485, 1.442695
  %v5593 = vpow.pop %v5592
  %v5594 = vmul.f32 %v5486, 1.442695
  %v5595 = vpow.pop %v5594
  %v5596 = vmul.f32 %v5487, 1.442695
  %v5597 = vpow.pop %v5596
  %v5598 = vmul.f32 %v5488, 1.442695
  %v5599 = vpow.pop %v5598
  %v5600 = vmul.f32 %v5489, 1.442695
  %v5601 = vpow.pop %v5600
  %v5602 = vmul.f32 %v5490, 1.442695
  %v5603 = vpow.pop %v5602
  %v5604 = vmul.f32 %v5491, 1.442695
  %v5605 = vpow.pop %v5604
  %v5606 = vmul.f32 %v5492, 1.442695
  %v5607 = vpow.pop %v5606
  %v5608 = vmul.f32 %v5493, 1.442695
  %v5609 = vpow.pop %v5608
  %v5610 = vmul.f32 %v5494, 1.442695
  %v5611 = vpow.pop %v5610
  %v5612 = vmul.f32 %v5495, 1.442695
  %v5613 = vpow.pop %v5612
  %v5614 = vmul.f32 %v5496, 1.442695
  %v5615 = vpow.pop %v5614
  %v5616 = vmul.f32 %v5497, 1.442695
  %v5617 = vpow.pop %v5616
  %v5618 = vmul.f32 %v5498, 1.442695
  %v5619 = vpow.pop %v5618
  %v5620 = vmul.f32 %v5499, 1.442695
  %v5621 = vpow.pop %v5620
  %v5622 = vmul.f32 %v5500, 1.442695
  %v5623 = vpow.pop %v5622
  %v5624 = vmul.f32 %v5501, 1.442695
  %v5625 = vpow.pop %v5624
  %v5626 = vmul.f32 %v5502, 1.442695
  %v5627 = vpow.pop %v5626
  %v5628 = vmul.f32 %v5503, 1.442695
  %v5629 = vpow.pop %v5628
  %v5630 = vmul.f32 %v5504, 1.442695
  %v5631 = vpow.pop %v5630
  %v5632 = vmul.f32 %v5505, 1.442695
  %v5633 = vpow.pop %v5632
  %v5634 = vmul.f32 %v5186, %v5507
  %v5635 = vmul.f32 %v5187, %v5509
  %v5636 = vmul.f32 %v5188, %v5511
  %v5637 = vmul.f32 %v5189, %v5513
  %v5638 = vmul.f32 %v5190, %v5515
  %v5639 = vmul.f32 %v5191, %v5517
  %v5640 = vmul.f32 %v5192, %v5519
  %v5641 = vmul.f32 %v5193, %v5521
  %v5642 = vmul.f32 %v5194, %v5523
  %v5643 = vmul.f32 %v5195, %v5525
  %v5644 = vmul.f32 %v5196, %v5527
  %v5645 = vmul.f32 %v5197, %v5529
  %v5646 = vmul.f32 %v5198, %v5531
  %v5647 = vmul.f32 %v5199, %v5533
  %v5648 = vmul.f32 %v5200, %v5535
  %v5649 = vmul.f32 %v5201, %v5537
  %v5650 = vmul.f32 %v5202, %v5539
  %v5651 = vmul.f32 %v5203, %v5541
  %v5652 = vmul.f32 %v5204, %v5543
  %v5653 = vmul.f32 %v5205, %v5545
  %v5654 = vmul.f32 %v5206, %v5547
  %v5655 = vmul.f32 %v5207, %v5549
  %v5656 = vmul.f32 %v5208, %v5551
  %v5657 = vmul.f32 %v5209, %v5553
  %v5658 = vmul.f32 %v5210, %v5555
  %v5659 = vmul.f32 %v5211, %v5557
  %v5660 = vmul.f32 %v5212, %v5559
  %v5661 = vmul.f32 %v5213, %v5561
  %v5662 = vmul.f32 %v5214, %v5563
  %v5663 = vmul.f32 %v5215, %v5565
  %v5664 = vmul.f32 %v5216, %v5567
  %v5665 = vmul.f32 %v5217, %v5569
  %v5666 = vmul.f32 %v5218, %v5571
  %v5667 = vmul.f32 %v5219, %v5573
  %v5668 = vmul.f32 %v5220, %v5575
  %v5669 = vmul.f32 %v5221, %v5577
  %v5670 = vmul.f32 %v5222, %v5579
  %v5671 = vmul.f32 %v5223, %v5581
  %v5672 = vmul.f32 %v5224, %v5583
  %v5673 = vmul.f32 %v5225, %v5585
  %v5674 = vmul.f32 %v5226, %v5587
  %v5675 = vmul.f32 %v5227, %v5589
  %v5676 = vmul.f32 %v5228, %v5591
  %v5677 = vmul.f32 %v5229, %v5593
  %v5678 = vmul.f32 %v5230, %v5595
  %v5679 = vmul.f32 %v5231, %v5597
  %v5680 = vmul.f32 %v5232, %v5599
  %v5681 = vmul.f32 %v5233, %v5601
  %v5682 = vmul.f32 %v5234, %v5603
  %v5683 = vmul.f32 %v5235, %v5605
  %v5684 = vmul.f32 %v5236, %v5607
  %v5685 = vmul.f32 %v5237, %v5609
  %v5686 = vmul.f32 %v5238, %v5611
  %v5687 = vmul.f32 %v5239, %v5613
  %v5688 = vmul.f32 %v5240, %v5615
  %v5689 = vmul.f32 %v5241, %v5617
  %v5690 = vmul.f32 %v5242, %v5619
  %v5691 = vmul.f32 %v5243, %v5621
  %v5692 = vmul.f32 %v5244, %v5623
  %v5693 = vmul.f32 %v5245, %v5625
  %v5694 = vmul.f32 %v5246, %v5627
  %v5695 = vmul.f32 %v5247, %v5629
  %v5696 = vmul.f32 %v5248, %v5631
  %v5697 = vmul.f32 %v5249, %v5633
  %v5698 = vsub.f32 1.0, %v5634
  %v5699 = vsub.f32 1.0, %v5635
  %v5700 = vsub.f32 1.0, %v5636
  %v5701 = vsub.f32 1.0, %v5637
  %v5702 = vsub.f32 1.0, %v5638
  %v5703 = vsub.f32 1.0, %v5639
  %v5704 = vsub.f32 1.0, %v5640
  %v5705 = vsub.f32 1.0, %v5641
  %v5706 = vsub.f32 1.0, %v5642
  %v5707 = vsub.f32 1.0, %v5643
  %v5708 = vsub.f32 1.0, %v5644
  %v5709 = vsub.f32 1.0, %v5645
  %v5710 = vsub.f32 1.0, %v5646
  %v5711 = vsub.f32 1.0, %v5647
  %v5712 = vsub.f32 1.0, %v5648
  %v5713 = vsub.f32 1.0, %v5649
  %v5714 = vsub.f32 1.0, %v5650
  %v5715 = vsub.f32 1.0, %v5651
  %v5716 = vsub.f32 1.0, %v5652
  %v5717 = vsub.f32 1.0, %v5653
  %v5718 = vsub.f32 1.0, %v5654
  %v5719 = vsub.f32 1.0, %v5655
  %v5720 = vsub.f32 1.0, %v5656
  %v5721 = vsub.f32 1.0, %v5657
  %v5722 = vsub.f32 1.0, %v5658
  %v5723 = vsub.f32 1.0, %v5659
  %v5724 = vsub.f32 1.0, %v5660
  %v5725 = vsub.f32 1.0, %v5661
  %v5726 = vsub.f32 1.0, %v5662
  %v5727 = vsub.f32 1.0, %v5663
  %v5728 = vsub.f32 1.0, %v5664
  %v5729 = vsub.f32 1.0, %v5665
  %v5730 = vsub.f32 1.0, %v5666
  %v5731 = vsub.f32 1.0, %v5667
  %v5732 = vsub.f32 1.0, %v5668
  %v5733 = vsub.f32 1.0, %v5669
  %v5734 = vsub.f32 1.0, %v5670
  %v5735 = vsub.f32 1.0, %v5671
  %v5736 = vsub.f32 1.0, %v5672
  %v5737 = vsub.f32 1.0, %v5673
  %v5738 = vsub.f32 1.0, %v5674
  %v5739 = vsub.f32 1.0, %v5675
  %v5740 = vsub.f32 1.0, %v5676
  %v5741 = vsub.f32 1.0, %v5677
  %v5742 = vsub.f32 1.0, %v5678
  %v5743 = vsub.f32 1.0, %v5679
  %v5744 = vsub.f32 1.0, %v5680
  %v5745 = vsub.f32 1.0, %v5681
  %v5746 = vsub.f32 1.0, %v5682
  %v5747 = vsub.f32 1.0, %v5683
  %v5748 = vsub.f32 1.0, %v5684
  %v5749 = vsub.f32 1.0, %v5685
  %v5750 = vsub.f32 1.0, %v5686
  %v5751 = vsub.f32 1.0, %v5687
  %v5752 = vsub.f32 1.0, %v5688
  %v5753 = vsub.f32 1.0, %v5689
  %v5754 = vsub.f32 1.0, %v5690
  %v5755 = vsub.f32 1.0, %v5691
  %v5756 = vsub.f32 1.0, %v5692
  %v5757 = vsub.f32 1.0, %v5693
  %v5758 = vsub.f32 1.0, %v5694
  %v5759 = vsub.f32 1.0, %v5695
  %v5760 = vsub.f32 1.0, %v5696
  %v5761 = vsub.f32 1.0, %v5697
  %v5762 = vmul.f32 %v5314, %v5698
  %v5763 = vmul.f32 %v5315, %v5699
  %v5764 = vmul.f32 %v5316, %v5700
  %v5765 = vmul.f32 %v5317, %v5701
  %v5766 = vmul.f32 %v5318, %v5702
  %v5767 = vmul.f32 %v5319, %v5703
  %v5768 = vmul.f32 %v5320, %v5704
  %v5769 = vmul.f32 %v5321, %v5705
  %v5770 = vmul.f32 %v5322, %v5706
  %v5771 = vmul.f32 %v5323, %v5707
  %v5772 = vmul.f32 %v5324, %v5708
  %v5773 = vmul.f32 %v5325, %v5709
  %v5774 = vmul.f32 %v5326, %v5710
  %v5775 = vmul.f32 %v5327, %v5711
  %v5776 = vmul.f32 %v5328, %v5712
  %v5777 = vmul.f32 %v5329, %v5713
  %v5778 = vmul.f32 %v5330, %v5714
  %v5779 = vmul.f32 %v5331, %v5715
  %v5780 = vmul.f32 %v5332, %v5716
  %v5781 = vmul.f32 %v5333, %v5717
  %v5782 = vmul.f32 %v5334, %v5718
  %v5783 = vmul.f32 %v5335, %v5719
  %v5784 = vmul.f32 %v5336, %v5720
  %v5785 = vmul.f32 %v5337, %v5721
  %v5786 = vmul.f32 %v5338, %v5722
  %v5787 = vmul.f32 %v5339, %v5723
  %v5788 = vmul.f32 %v5340, %v5724
  %v5789 = vmul.f32 %v5341, %v5725
  %v5790 = vmul.f32 %v5342, %v5726
  %v5791 = vmul.f32 %v5343, %v5727
  %v5792 = vmul.f32 %v5344, %v5728
  %v5793 = vmul.f32 %v5345, %v5729
  %v5794 = vmul.f32 %v5346, %v5730
  %v5795 = vmul.f32 %v5347, %v5731
  %v5796 = vmul.f32 %v5348, %v5732
  %v5797 = vmul.f32 %v5349, %v5733
  %v5798 = vmul.f32 %v5350, %v5734
  %v5799 = vmul.f32 %v5351, %v5735
  %v5800 = vmul.f32 %v5352, %v5736
  %v5801 = vmul.f32 %v5353, %v5737
  %v5802 = vmul.f32 %v5354, %v5738
  %v5803 = vmul.f32 %v5355, %v5739
  %v5804 = vmul.f32 %v5356, %v5740
  %v5805 = vmul.f32 %v5357, %v5741
  %v5806 = vmul.f32 %v5358, %v5742
  %v5807 = vmul.f32 %v5359, %v5743
  %v5808 = vmul.f32 %v5360, %v5744
  %v5809 = vmul.f32 %v5361, %v5745
  %v5810 = vmul.f32 %v5362, %v5746
  %v5811 = vmul.f32 %v5363, %v5747
  %v5812 = vmul.f32 %v5364, %v5748
  %v5813 = vmul.f32 %v5365, %v5749
  %v5814 = vmul.f32 %v5366, %v5750
  %v5815 = vmul.f32 %v5367, %v5751
  %v5816 = vmul.f32 %v5368, %v5752
  %v5817 = vmul.f32 %v5369, %v5753
  %v5818 = vmul.f32 %v5370, %v5754
  %v5819 = vmul.f32 %v5371, %v5755
  %v5820 = vmul.f32 %v5372, %v5756
  %v5821 = vmul.f32 %v5373, %v5757
  %v5822 = vmul.f32 %v5374, %v5758
  %v5823 = vmul.f32 %v5375, %v5759
  %v5824 = vmul.f32 %v5376, %v5760
  %v5825 = vmul.f32 %v5377, %v5761
  %v5826 = vadd.f32 %v5250, %v5762
  %v5827 = vadd.f32 %v5251, %v5763
  %v5828 = vadd.f32 %v5252, %v5764
  %v5829 = vadd.f32 %v5253, %v5765
  %v5830 = vadd.f32 %v5254, %v5766
  %v5831 = vadd.f32 %v5255, %v5767
  %v5832 = vadd.f32 %v5256, %v5768
  %v5833 = vadd.f32 %v5257, %v5769
  %v5834 = vadd.f32 %v5258, %v5770
  %v5835 = vadd.f32 %v5259, %v5771
  %v5836 = vadd.f32 %v5260, %v5772
  %v5837 = vadd.f32 %v5261, %v5773
  %v5838 = vadd.f32 %v5262, %v5774
  %v5839 = vadd.f32 %v5263, %v5775
  %v5840 = vadd.f32 %v5264, %v5776
  %v5841 = vadd.f32 %v5265, %v5777
  %v5842 = vadd.f32 %v5266, %v5778
  %v5843 = vadd.f32 %v5267, %v5779
  %v5844 = vadd.f32 %v5268, %v5780
  %v5845 = vadd.f32 %v5269, %v5781
  %v5846 = vadd.f32 %v5270, %v5782
  %v5847 = vadd.f32 %v5271, %v5783
  %v5848 = vadd.f32 %v5272, %v5784
  %v5849 = vadd.f32 %v5273, %v5785
  %v5850 = vadd.f32 %v5274, %v5786
  %v5851 = vadd.f32 %v5275, %v5787
  %v5852 = vadd.f32 %v5276, %v5788
  %v5853 = vadd.f32 %v5277, %v5789
  %v5854 = vadd.f32 %v5278, %v5790
  %v5855 = vadd.f32 %v5279, %v5791
  %v5856 = vadd.f32 %v5280, %v5792
  %v5857 = vadd.f32 %v5281, %v5793
  %v5858 = vadd.f32 %v5282, %v5794
  %v5859 = vadd.f32 %v5283, %v5795
  %v5860 = vadd.f32 %v5284, %v5796
  %v5861 = vadd.f32 %v5285, %v5797
  %v5862 = vadd.f32 %v5286, %v5798
  %v5863 = vadd.f32 %v5287, %v5799
  %v5864 = vadd.f32 %v5288, %v5800
  %v5865 = vadd.f32 %v5289, %v5801
  %v5866 = vadd.f32 %v5290, %v5802
  %v5867 = vadd.f32 %v5291, %v5803
  %v5868 = vadd.f32 %v5292, %v5804
  %v5869 = vadd.f32 %v5293, %v5805
  %v5870 = vadd.f32 %v5294, %v5806
  %v5871 = vadd.f32 %v5295, %v5807
  %v5872 = vadd.f32 %v5296, %v5808
  %v5873 = vadd.f32 %v5297, %v5809
  %v5874 = vadd.f32 %v5298, %v5810
  %v5875 = vadd.f32 %v5299, %v5811
  %v5876 = vadd.f32 %v5300, %v5812
  %v5877 = vadd.f32 %v5301, %v5813
  %v5878 = vadd.f32 %v5302, %v5814
  %v5879 = vadd.f32 %v5303, %v5815
  %v5880 = vadd.f32 %v5304, %v5816
  %v5881 = vadd.f32 %v5305, %v5817
  %v5882 = vadd.f32 %v5306, %v5818
  %v5883 = vadd.f32 %v5307, %v5819
  %v5884 = vadd.f32 %v5308, %v5820
  %v5885 = vadd.f32 %v5309, %v5821
  %v5886 = vadd.f32 %v5310, %v5822
  %v5887 = vadd.f32 %v5311, %v5823
  %v5888 = vadd.f32 %v5312, %v5824
  %v5889 = vadd.f32 %v5313, %v5825
  %v5890 = vpack.c.bf16 %v5830, %v5826
  %v5891 = vpack.c.bf16 %v5831, %v5827
  %v5892 = vpack.c.bf16 %v5832, %v5828
  %v5893 = vpack.c.bf16 %v5833, %v5829
  %v5894 = vpack.c.bf16 %v5838, %v5834
  %v5895 = vpack.c.bf16 %v5839, %v5835
  %v5896 = vpack.c.bf16 %v5840, %v5836
  %v5897 = vpack.c.bf16 %v5841, %v5837
  %v5898 = vpack.c.bf16 %v5846, %v5842
  %v5899 = vpack.c.bf16 %v5847, %v5843
  %v5900 = vpack.c.bf16 %v5848, %v5844
  %v5901 = vpack.c.bf16 %v5849, %v5845
  %v5902 = vpack.c.bf16 %v5854, %v5850
  %v5903 = vpack.c.bf16 %v5855, %v5851
  %v5904 = vpack.c.bf16 %v5856, %v5852
  %v5905 = vpack.c.bf16 %v5857, %v5853
  %v5906 = vpack.c.bf16 %v5862, %v5858
  %v5907 = vpack.c.bf16 %v5863, %v5859
  %v5908 = vpack.c.bf16 %v5864, %v5860
  %v5909 = vpack.c.bf16 %v5865, %v5861
  %v5910 = vpack.c.bf16 %v5870, %v5866
  %v5911 = vpack.c.bf16 %v5871, %v5867
  %v5912 = vpack.c.bf16 %v5872, %v5868
  %v5913 = vpack.c.bf16 %v5873, %v5869
  %v5914 = vpack.c.bf16 %v5878, %v5874
  %v5915 = vpack.c.bf16 %v5879, %v5875
  %v5916 = vpack.c.bf16 %v5880, %v5876
  %v5917 = vpack.c.bf16 %v5881, %v5877
  %v5918 = vpack.c.bf16 %v5886, %v5882
  %v5919 = vpack.c.bf16 %v5887, %v5883
  %v5920 = vpack.c.bf16 %v5888, %v5884
  %v5921 = vpack.c.bf16 %v5889, %v5885
  %v5938 = vunpack.c.l.b16 %v55
  %v5939 = vunpack.c.l.b16 %v56
  %v5940 = vunpack.c.l.b16 %v57
  %v5941 = vunpack.c.l.b16 %v58
  %v5942 = vunpack.c.l.b16 %v59
  %v5943 = vunpack.c.l.b16 %v60
  %v5944 = vunpack.c.l.b16 %v61
  %v5945 = vunpack.c.l.b16 %v62
  %v5946 = vunpack.c.l.b16 %v63
  %v5947 = vunpack.c.l.b16 %v64
  %v5948 = vunpack.c.l.b16 %v65
  %v5949 = vunpack.c.l.b16 %v66
  %v5950 = vunpack.c.l.b16 %v67
  %v5951 = vunpack.c.l.b16 %v68
  %v5952 = vunpack.c.l.b16 %v69
  %v5953 = vunpack.c.l.b16 %v70
  %v5954 = vpack.c.b16 %v5939, %v5938
  %v5955 = vpack.c.b16 %v5941, %v5940
  %v5956 = vpack.c.b16 %v5943, %v5942
  %v5957 = vpack.c.b16 %v5945, %v5944
  %v5958 = vpack.c.b16 %v5947, %v5946
  %v5959 = vpack.c.b16 %v5949, %v5948
  %v5960 = vpack.c.b16 %v5951, %v5950
  %v5961 = vpack.c.b16 %v5953, %v5952
  %5970 = vxpose.xlu0.c.b16.start [1/8] %v5954, 128
  %5971 = vxpose.xlu0.c.b16.cont [2/8] %v5955, 128
  %5972 = vxpose.xlu0.c.b16.cont [3/8] %v5956, 128
  %5973 = vxpose.xlu0.c.b16.cont [4/8] %v5957, 128
  %5974 = vxpose.xlu0.c.b16.cont [5/8] %v5958, 128
  %5975 = vxpose.xlu0.c.b16.cont [6/8] %v5959, 128
  %5976 = vxpose.xlu0.c.b16.cont [7/8] %v5960, 128
  %5977 = vxpose.xlu0.c.b16.end [8/8] %v5961, 128
  %v5978 = vpop.trf.xlu0
  %v5979 = vpop.trf.xlu0
  %v5980 = vpop.trf.xlu0
  %v5981 = vpop.trf.xlu0
  %v5982 = vpop.trf.xlu0
  %v5983 = vpop.trf.xlu0
  %v5984 = vpop.trf.xlu0
  %v5985 = vpop.trf.xlu0
  %5986 = vmatprep.subr.bf16.mxu0 %v5919
  %5987 = vmatpush1.bf16.msra.mxu0 %v5918
  %5988 = vmatprep.subr.bf16.mxu0 %v5915
  %5989 = vmatpush1.bf16.msra.mxu0 %v5914
  %5990 = vmatprep.subr.bf16.mxu0 %v5911
  %5991 = vmatpush1.bf16.msra.mxu0 %v5910
  %5992 = vmatprep.subr.bf16.mxu0 %v5907
  %5993 = vmatpush1.bf16.msra.mxu0 %v5906
  %5994 = vmatprep.subr.bf16.mxu0 %v5903
  %5995 = vmatpush1.bf16.msra.mxu0 %v5902
  %5996 = vmatprep.subr.bf16.mxu0 %v5899
  %5997 = vmatpush1.bf16.msra.mxu0 %v5898
  %5998 = vmatprep.subr.bf16.mxu0 %v5895
  %5999 = vmatpush1.bf16.msra.mxu0 %v5894
  %6000 = vmatprep.subr.bf16.mxu0 %v5891
  %6001 = vmatpush1.bf16.msra.mxu0 %v5890
  %6002 = vmatprep.subr.bf16.mxu0 0
  %6003 = vmatpush2.bf16.msra.mxu0 0
  %6004 = vmatprep.subr.bf16.mxu0 0
  %6005 = vmatpush2.bf16.msra.mxu0 0
  %6006 = vmatprep.subr.bf16.mxu0 0
  %6007 = vmatpush2.bf16.msra.mxu0 0
  %6008 = vmatprep.subr.bf16.mxu0 0
  %6009 = vmatpush2.bf16.msra.mxu0 0
  %6010 = vmatprep.subr.bf16.mxu0 0
  %6011 = vmatpush2.bf16.msra.mxu0 0
  %6012 = vmatprep.subr.bf16.mxu0 0
  %6013 = vmatpush2.bf16.msra.mxu0 0
  %6014 = vmatprep.subr.bf16.mxu0 0
  %6015 = vmatpush2.bf16.msra.mxu0 0
  %6016 = vmatprep.subr.bf16.mxu0 0
  %6017 = vmatpush2.bf16.msra.mxu0 0
  %6018 = vmatprep.mubr.bf16.mxu0 0
  %6019 = vmatmul.mubr.bf16.gmra.mxu0 %v5978
  %v6020 = vpop.f32.mrf.mxu0
  %v6021 = vadd.f32 0.0, %v6020
  %v6022 = vpop.f32.mrf.mxu0
  %v6023 = vadd.f32 0.0, %v6022
  %v6024 = vpop.f32.mrf.mxu0
  %v6025 = vadd.f32 0.0, %v6024
  %v6026 = vpop.f32.mrf.mxu0
  %v6027 = vadd.f32 0.0, %v6026
  %6028 = vmatprep.mubr.bf16.mxu0 0
  %6029 = vmatmul.mubr.bf16.gmra.mxu0 %v5979
  %v6030 = vpop.f32.mrf.mxu0
  %v6031 = vadd.f32 0.0, %v6030
  %v6032 = vpop.f32.mrf.mxu0
  %v6033 = vadd.f32 0.0, %v6032
  %v6034 = vpop.f32.mrf.mxu0
  %v6035 = vadd.f32 0.0, %v6034
  %v6036 = vpop.f32.mrf.mxu0
  %v6037 = vadd.f32 0.0, %v6036
  %6038 = vmatprep.mubr.bf16.mxu0 0
  %6039 = vmatmul.mubr.bf16.gmra.mxu0 %v5980
  %v6040 = vpop.f32.mrf.mxu0
  %v6041 = vadd.f32 0.0, %v6040
  %v6042 = vpop.f32.mrf.mxu0
  %v6043 = vadd.f32 0.0, %v6042
  %v6044 = vpop.f32.mrf.mxu0
  %v6045 = vadd.f32 0.0, %v6044
  %v6046 = vpop.f32.mrf.mxu0
  %v6047 = vadd.f32 0.0, %v6046
  %6048 = vmatprep.mubr.bf16.mxu0 0
  %6049 = vmatmul.mubr.bf16.gmra.mxu0 %v5981
  %v6050 = vpop.f32.mrf.mxu0
  %v6051 = vadd.f32 0.0, %v6050
  %v6052 = vpop.f32.mrf.mxu0
  %v6053 = vadd.f32 0.0, %v6052
  %v6054 = vpop.f32.mrf.mxu0
  %v6055 = vadd.f32 0.0, %v6054
  %v6056 = vpop.f32.mrf.mxu0
  %v6057 = vadd.f32 0.0, %v6056
  %6058 = vdwg.mxu0
  %6059 = vmatprep.subr.bf16.mxu0 %v5921
  %6060 = vmatpush1.bf16.msra.mxu0 %v5920
  %6061 = vmatprep.subr.bf16.mxu0 %v5917
  %6062 = vmatpush1.bf16.msra.mxu0 %v5916
  %6063 = vmatprep.subr.bf16.mxu0 %v5913
  %6064 = vmatpush1.bf16.msra.mxu0 %v5912
  %6065 = vmatprep.subr.bf16.mxu0 %v5909
  %6066 = vmatpush1.bf16.msra.mxu0 %v5908
  %6067 = vmatprep.subr.bf16.mxu0 %v5905
  %6068 = vmatpush1.bf16.msra.mxu0 %v5904
  %6069 = vmatprep.subr.bf16.mxu0 %v5901
  %6070 = vmatpush1.bf16.msra.mxu0 %v5900
  %6071 = vmatprep.subr.bf16.mxu0 %v5897
  %6072 = vmatpush1.bf16.msra.mxu0 %v5896
  %6073 = vmatprep.subr.bf16.mxu0 %v5893
  %6074 = vmatpush1.bf16.msra.mxu0 %v5892
  %6075 = vmatprep.subr.bf16.mxu0 0
  %6076 = vmatpush2.bf16.msra.mxu0 0
  %6077 = vmatprep.subr.bf16.mxu0 0
  %6078 = vmatpush2.bf16.msra.mxu0 0
  %6079 = vmatprep.subr.bf16.mxu0 0
  %6080 = vmatpush2.bf16.msra.mxu0 0
  %6081 = vmatprep.subr.bf16.mxu0 0
  %6082 = vmatpush2.bf16.msra.mxu0 0
  %6083 = vmatprep.subr.bf16.mxu0 0
  %6084 = vmatpush2.bf16.msra.mxu0 0
  %6085 = vmatprep.subr.bf16.mxu0 0
  %6086 = vmatpush2.bf16.msra.mxu0 0
  %6087 = vmatprep.subr.bf16.mxu0 0
  %6088 = vmatpush2.bf16.msra.mxu0 0
  %6089 = vmatprep.subr.bf16.mxu0 0
  %6090 = vmatpush2.bf16.msra.mxu0 0
  %6091 = vmatprep.mubr.bf16.mxu0 0
  %6092 = vmatmul.mubr.bf16.gmra.mxu0 %v5978
  %v6093 = vpop.f32.mrf.mxu0
  %v6094 = vadd.f32 0.0, %v6093
  %v6095 = vpop.f32.mrf.mxu0
  %v6096 = vadd.f32 0.0, %v6095
  %v6097 = vpop.f32.mrf.mxu0
  %v6098 = vadd.f32 0.0, %v6097
  %v6099 = vpop.f32.mrf.mxu0
  %v6100 = vadd.f32 0.0, %v6099
  %6101 = vmatprep.mubr.bf16.mxu0 0
  %6102 = vmatmul.mubr.bf16.gmra.mxu0 %v5979
  %v6103 = vpop.f32.mrf.mxu0
  %v6104 = vadd.f32 0.0, %v6103
  %v6105 = vpop.f32.mrf.mxu0
  %v6106 = vadd.f32 0.0, %v6105
  %v6107 = vpop.f32.mrf.mxu0
  %v6108 = vadd.f32 0.0, %v6107
  %v6109 = vpop.f32.mrf.mxu0
  %v6110 = vadd.f32 0.0, %v6109
  %6111 = vmatprep.mubr.bf16.mxu0 0
  %6112 = vmatmul.mubr.bf16.gmra.mxu0 %v5980
  %v6113 = vpop.f32.mrf.mxu0
  %v6114 = vadd.f32 0.0, %v6113
  %v6115 = vpop.f32.mrf.mxu0
  %v6116 = vadd.f32 0.0, %v6115
  %v6117 = vpop.f32.mrf.mxu0
  %v6118 = vadd.f32 0.0, %v6117
  %v6119 = vpop.f32.mrf.mxu0
  %v6120 = vadd.f32 0.0, %v6119
  %6121 = vmatprep.mubr.bf16.mxu0 0
  %6122 = vmatmul.mubr.bf16.gmra.mxu0 %v5981
  %v6123 = vpop.f32.mrf.mxu0
  %v6124 = vadd.f32 0.0, %v6123
  %v6125 = vpop.f32.mrf.mxu0
  %v6126 = vadd.f32 0.0, %v6125
  %v6127 = vpop.f32.mrf.mxu0
  %v6128 = vadd.f32 0.0, %v6127
  %v6129 = vpop.f32.mrf.mxu0
  %v6130 = vadd.f32 0.0, %v6129
  %6131 = vdwg.mxu0
  %v6132 = vadd.f32 %v3936, %v6021
  %v6133 = vadd.f32 %v3937, %v6023
  %v6134 = vadd.f32 %v3938, %v6094
  %v6135 = vadd.f32 %v3939, %v6096
  %v6136 = vadd.f32 %v3940, %v6025
  %v6137 = vadd.f32 %v3941, %v6027
  %v6138 = vadd.f32 %v3942, %v6098
  %v6139 = vadd.f32 %v3943, %v6100
  %v6140 = vadd.f32 %v3944, %v6031
  %v6141 = vadd.f32 %v3945, %v6033
  %v6142 = vadd.f32 %v3946, %v6104
  %v6143 = vadd.f32 %v3947, %v6106
  %v6144 = vadd.f32 %v3948, %v6035
  %v6145 = vadd.f32 %v3949, %v6037
  %v6146 = vadd.f32 %v3950, %v6108
  %v6147 = vadd.f32 %v3951, %v6110
  %v6148 = vadd.f32 %v3952, %v6041
  %v6149 = vadd.f32 %v3953, %v6043
  %v6150 = vadd.f32 %v3954, %v6114
  %v6151 = vadd.f32 %v3955, %v6116
  %v6152 = vadd.f32 %v3956, %v6045
  %v6153 = vadd.f32 %v3957, %v6047
  %v6154 = vadd.f32 %v3958, %v6118
  %v6155 = vadd.f32 %v3959, %v6120
  %v6156 = vadd.f32 %v3960, %v6051
  %v6157 = vadd.f32 %v3961, %v6053
  %v6158 = vadd.f32 %v3962, %v6124
  %v6159 = vadd.f32 %v3963, %v6126
  %v6160 = vadd.f32 %v3964, %v6055
  %v6161 = vadd.f32 %v3965, %v6057
  %v6162 = vadd.f32 %v3966, %v6128
  %v6163 = vadd.f32 %v3967, %v6130
  %6164 = vset.pattern.permute.xlu0 2
  %6165 = vperm.xlu0 %6164, %v87
  %v6166 = vpop.permute.xlu0 %6165
  %6168 = vset.pattern.permute.xlu0 2
  %6169 = vperm.xlu0 %6168, %v88
  %v6170 = vpop.permute.xlu0 %6169
  %6172 = vset.pattern.permute.xlu0 2
  %6173 = vperm.xlu0 %6172, %v89
  %v6174 = vpop.permute.xlu0 %6173
  %6176 = vset.pattern.permute.xlu0 2
  %6177 = vperm.xlu0 %6176, %v90
  %v6178 = vpop.permute.xlu0 %6177
  %6180 = vset.pattern.permute.xlu0 2
  %6181 = vperm.xlu0 %6180, %v91
  %v6182 = vpop.permute.xlu0 %6181
  %6184 = vset.pattern.permute.xlu0 2
  %6185 = vperm.xlu0 %6184, %v92
  %v6186 = vpop.permute.xlu0 %6185
  %6188 = vset.pattern.permute.xlu0 2
  %6189 = vperm.xlu0 %6188, %v93
  %v6190 = vpop.permute.xlu0 %6189
  %6192 = vset.pattern.permute.xlu0 2
  %6193 = vperm.xlu0 %6192, %v94
  %v6194 = vpop.permute.xlu0 %6193
  %v6196 = vadd.f32 %v6132, %v6166
  %v6197 = vadd.f32 %v6133, %v6166
  %v6198 = vadd.f32 %v6134, %v6166
  %v6199 = vadd.f32 %v6135, %v6166
  %v6200 = vadd.f32 %v6136, %v6170
  %v6201 = vadd.f32 %v6137, %v6170
  %v6202 = vadd.f32 %v6138, %v6170
  %v6203 = vadd.f32 %v6139, %v6170
  %v6204 = vadd.f32 %v6140, %v6174
  %v6205 = vadd.f32 %v6141, %v6174
  %v6206 = vadd.f32 %v6142, %v6174
  %v6207 = vadd.f32 %v6143, %v6174
  %v6208 = vadd.f32 %v6144, %v6178
  %v6209 = vadd.f32 %v6145, %v6178
  %v6210 = vadd.f32 %v6146, %v6178
  %v6211 = vadd.f32 %v6147, %v6178
  %v6212 = vadd.f32 %v6148, %v6182
  %v6213 = vadd.f32 %v6149, %v6182
  %v6214 = vadd.f32 %v6150, %v6182
  %v6215 = vadd.f32 %v6151, %v6182
  %v6216 = vadd.f32 %v6152, %v6186
  %v6217 = vadd.f32 %v6153, %v6186
  %v6218 = vadd.f32 %v6154, %v6186
  %v6219 = vadd.f32 %v6155, %v6186
  %v6220 = vadd.f32 %v6156, %v6190
  %v6221 = vadd.f32 %v6157, %v6190
  %v6222 = vadd.f32 %v6158, %v6190
  %v6223 = vadd.f32 %v6159, %v6190
  %v6224 = vadd.f32 %v6160, %v6194
  %v6225 = vadd.f32 %v6161, %v6194
  %v6226 = vadd.f32 %v6162, %v6194
  %v6227 = vadd.f32 %v6163, %v6194
  %v6228 = vpack.c.bf16 %v6200, %v6196
  %v6229 = vpack.c.bf16 %v6201, %v6197
  %v6230 = vpack.c.bf16 %v6202, %v6198
  %v6231 = vpack.c.bf16 %v6203, %v6199
  %v6232 = vpack.c.bf16 %v6208, %v6204
  %v6233 = vpack.c.bf16 %v6209, %v6205
  %v6234 = vpack.c.bf16 %v6210, %v6206
  %v6235 = vpack.c.bf16 %v6211, %v6207
  %v6236 = vpack.c.bf16 %v6216, %v6212
  %v6237 = vpack.c.bf16 %v6217, %v6213
  %v6238 = vpack.c.bf16 %v6218, %v6214
  %v6239 = vpack.c.bf16 %v6219, %v6215
  %v6240 = vpack.c.bf16 %v6224, %v6220
  %v6241 = vpack.c.bf16 %v6225, %v6221
  %v6242 = vpack.c.bf16 %v6226, %v6222
  %v6243 = vpack.c.bf16 %v6227, %v6223
  %6245 = vset.pattern.permute.xlu0 0
  %6246 = vperm.xlu0 %6245, %v111
  %v6247 = vpop.permute.xlu0 %6246
  %6250 = vset.pattern.permute.xlu0 0
  %6251 = vperm.xlu0 %6250, %v112
  %v6252 = vpop.permute.xlu0 %6251
  %6255 = vset.pattern.permute.xlu0 0
  %6256 = vperm.xlu0 %6255, %v113
  %v6257 = vpop.permute.xlu0 %6256
  %6260 = vset.pattern.permute.xlu0 0
  %6261 = vperm.xlu0 %6260, %v114
  %v6262 = vpop.permute.xlu0 %6261
  %6265 = vset.pattern.permute.xlu0 0
  %6266 = vperm.xlu0 %6265, %v115
  %v6267 = vpop.permute.xlu0 %6266
  %6270 = vset.pattern.permute.xlu0 0
  %6271 = vperm.xlu0 %6270, %v116
  %v6272 = vpop.permute.xlu0 %6271
  %6275 = vset.pattern.permute.xlu0 0
  %6276 = vperm.xlu0 %6275, %v117
  %v6277 = vpop.permute.xlu0 %6276
  %6280 = vset.pattern.permute.xlu0 0
  %6281 = vperm.xlu0 %6280, %v118
  %v6282 = vpop.permute.xlu0 %6281
  %6285 = vset.pattern.permute.xlu0 0
  %6286 = vperm.xlu0 %6285, %v119
  %v6287 = vpop.permute.xlu0 %6286
  %6290 = vset.pattern.permute.xlu0 0
  %6291 = vperm.xlu0 %6290, %v120
  %v6292 = vpop.permute.xlu0 %6291
  %6295 = vset.pattern.permute.xlu0 0
  %6296 = vperm.xlu0 %6295, %v121
  %v6297 = vpop.permute.xlu0 %6296
  %6300 = vset.pattern.permute.xlu0 0
  %6301 = vperm.xlu0 %6300, %v122
  %v6302 = vpop.permute.xlu0 %6301
  %v6312 = vunpack.c.l.b16 %v79
  %v6313 = vunpack.c.l.b16 %v80
  %v6314 = vunpack.c.l.b16 %v81
  %v6315 = vunpack.c.l.b16 %v82
  %v6316 = vunpack.c.l.b16 %v83
  %v6317 = vunpack.c.l.b16 %v84
  %v6318 = vunpack.c.l.b16 %v85
  %v6319 = vunpack.c.l.b16 %v86
  %v6320 = vpack.c.b16 %v6313, %v6312
  %v6321 = vpack.c.b16 %v6315, %v6314
  %v6322 = vpack.c.b16 %v6317, %v6316
  %v6323 = vpack.c.b16 %v6319, %v6318
  %6328 = vxpose.xlu0.c.b16.start [1/8] %v6320, 128
  %6329 = vxpose.xlu0.c.b16.cont [2/8] %v6321, 128
  %6330 = vxpose.xlu0.c.b16.cont [3/8] %v6322, 128
  %6331 = vxpose.xlu0.c.b16.cont [4/8] %v6323, 128
  %6332 = vxpose.xlu0.c.b16.cont [5/8] 0, 128
  %6333 = vxpose.xlu0.c.b16.cont [6/8] 0, 128
  %6334 = vxpose.xlu0.c.b16.cont [7/8] 0, 128
  %6335 = vxpose.xlu0.c.b16.end [8/8] 0, 128
  %v6336 = vpop.trf.xlu0
  %v6337 = vpop.trf.xlu0
  %v6338 = vpop.trf.xlu0
  %v6339 = vpop.trf.xlu0
  %v6340 = vpop.trf.xlu0
  %v6341 = vpop.trf.xlu0
  %v6342 = vpop.trf.xlu0
  %v6343 = vpop.trf.xlu0
  %v6345 = vsel %vm907, %v6336, 0
  %v6348 = vsel %vm907, %v6337, 0
  %v6351 = vsel %vm907, %v6338, 0
  %v6354 = vsel %vm907, %v6339, 0
  %v6357 = vsel %vm907, %v6340, 0
  %v6360 = vsel %vm907, %v6341, 0
  %6362 = vmatprep.subr.bf16.mxu0 0
  %6363 = vmatpush1.bf16.msra.mxu0 0
  %6364 = vmatprep.subr.bf16.mxu0 0
  %6365 = vmatpush1.bf16.msra.mxu0 0
  %6366 = vmatprep.subr.bf16.mxu0 0
  %6367 = vmatpush1.bf16.msra.mxu0 0
  %6368 = vmatprep.subr.bf16.mxu0 0
  %6369 = vmatpush1.bf16.msra.mxu0 0
  %6370 = vmatprep.subr.bf16.mxu0 %v6241
  %6371 = vmatpush1.bf16.msra.mxu0 %v6240
  %6372 = vmatprep.subr.bf16.mxu0 %v6237
  %6373 = vmatpush1.bf16.msra.mxu0 %v6236
  %6374 = vmatprep.subr.bf16.mxu0 %v6233
  %6375 = vmatpush1.bf16.msra.mxu0 %v6232
  %6376 = vmatprep.subr.bf16.mxu0 %v6229
  %6377 = vmatpush1.bf16.msra.mxu0 %v6228
  %6378 = vmatprep.subr.bf16.mxu0 0
  %6379 = vmatpush2.bf16.msra.mxu0 0
  %6380 = vmatprep.subr.bf16.mxu0 0
  %6381 = vmatpush2.bf16.msra.mxu0 0
  %6382 = vmatprep.subr.bf16.mxu0 0
  %6383 = vmatpush2.bf16.msra.mxu0 0
  %6384 = vmatprep.subr.bf16.mxu0 0
  %6385 = vmatpush2.bf16.msra.mxu0 0
  %6386 = vmatprep.subr.bf16.mxu0 0
  %6387 = vmatpush2.bf16.msra.mxu0 0
  %6388 = vmatprep.subr.bf16.mxu0 0
  %6389 = vmatpush2.bf16.msra.mxu0 0
  %6390 = vmatprep.subr.bf16.mxu0 0
  %6391 = vmatpush2.bf16.msra.mxu0 0
  %6392 = vmatprep.subr.bf16.mxu0 0
  %6393 = vmatpush2.bf16.msra.mxu0 0
  %6394 = vmatprep.mubr.bf16.mxu0 0
  %6395 = vmatmul.mubr.bf16.gmra.mxu0 %v6345
  %v6396 = vpop.f32.mrf.mxu0
  %v6397 = vadd.f32 %v6247, %v6396
  %v6398 = vpop.f32.mrf.mxu0
  %v6399 = vadd.f32 %v6247, %v6398
  %v6400 = vpop.f32.mrf.mxu0
  %v6401 = vadd.f32 %v6252, %v6400
  %v6402 = vpop.f32.mrf.mxu0
  %v6403 = vadd.f32 %v6252, %v6402
  %6404 = vmatprep.mubr.bf16.mxu0 0
  %6405 = vmatmul.mubr.bf16.gmra.mxu0 %v6348
  %v6406 = vpop.f32.mrf.mxu0
  %v6407 = vadd.f32 %v6257, %v6406
  %v6408 = vpop.f32.mrf.mxu0
  %v6409 = vadd.f32 %v6257, %v6408
  %v6410 = vpop.f32.mrf.mxu0
  %v6411 = vadd.f32 %v6262, %v6410
  %v6412 = vpop.f32.mrf.mxu0
  %v6413 = vadd.f32 %v6262, %v6412
  %6414 = vmatprep.mubr.bf16.mxu0 0
  %6415 = vmatmul.mubr.bf16.gmra.mxu0 %v6351
  %v6416 = vpop.f32.mrf.mxu0
  %v6417 = vadd.f32 %v6267, %v6416
  %v6418 = vpop.f32.mrf.mxu0
  %v6419 = vadd.f32 %v6267, %v6418
  %v6420 = vpop.f32.mrf.mxu0
  %v6421 = vadd.f32 %v6272, %v6420
  %v6422 = vpop.f32.mrf.mxu0
  %v6423 = vadd.f32 %v6272, %v6422
  %6424 = vmatprep.mubr.bf16.mxu0 0
  %6425 = vmatmul.mubr.bf16.gmra.mxu0 %v6354
  %v6426 = vpop.f32.mrf.mxu0
  %v6427 = vadd.f32 %v6277, %v6426
  %v6428 = vpop.f32.mrf.mxu0
  %v6429 = vadd.f32 %v6277, %v6428
  %v6430 = vpop.f32.mrf.mxu0
  %v6431 = vadd.f32 %v6282, %v6430
  %v6432 = vpop.f32.mrf.mxu0
  %v6433 = vadd.f32 %v6282, %v6432
  %6434 = vmatprep.mubr.bf16.mxu0 0
  %6435 = vmatmul.mubr.bf16.gmra.mxu0 %v6357
  %v6436 = vpop.f32.mrf.mxu0
  %v6437 = vadd.f32 %v6287, %v6436
  %v6438 = vpop.f32.mrf.mxu0
  %v6439 = vadd.f32 %v6287, %v6438
  %v6440 = vpop.f32.mrf.mxu0
  %v6441 = vadd.f32 %v6292, %v6440
  %v6442 = vpop.f32.mrf.mxu0
  %v6443 = vadd.f32 %v6292, %v6442
  %6444 = vmatprep.mubr.bf16.mxu0 0
  %6445 = vmatmul.mubr.bf16.gmra.mxu0 %v6360
  %v6446 = vpop.f32.mrf.mxu0
  %v6447 = vadd.f32 %v6297, %v6446
  %v6448 = vpop.f32.mrf.mxu0
  %v6449 = vadd.f32 %v6297, %v6448
  %v6450 = vpop.f32.mrf.mxu0
  %v6451 = vadd.f32 %v6302, %v6450
  %v6452 = vpop.f32.mrf.mxu0
  %v6453 = vadd.f32 %v6302, %v6452
  %6454 = vdwg.mxu0
  %6455 = vmatprep.subr.bf16.mxu0 0
  %6456 = vmatpush1.bf16.msra.mxu0 0
  %6457 = vmatprep.subr.bf16.mxu0 0
  %6458 = vmatpush1.bf16.msra.mxu0 0
  %6459 = vmatprep.subr.bf16.mxu0 0
  %6460 = vmatpush1.bf16.msra.mxu0 0
  %6461 = vmatprep.subr.bf16.mxu0 0
  %6462 = vmatpush1.bf16.msra.mxu0 0
  %6463 = vmatprep.subr.bf16.mxu0 %v6243
  %6464 = vmatpush1.bf16.msra.mxu0 %v6242
  %6465 = vmatprep.subr.bf16.mxu0 %v6239
  %6466 = vmatpush1.bf16.msra.mxu0 %v6238
  %6467 = vmatprep.subr.bf16.mxu0 %v6235
  %6468 = vmatpush1.bf16.msra.mxu0 %v6234
  %6469 = vmatprep.subr.bf16.mxu0 %v6231
  %6470 = vmatpush1.bf16.msra.mxu0 %v6230
  %6471 = vmatprep.subr.bf16.mxu0 0
  %6472 = vmatpush2.bf16.msra.mxu0 0
  %6473 = vmatprep.subr.bf16.mxu0 0
  %6474 = vmatpush2.bf16.msra.mxu0 0
  %6475 = vmatprep.subr.bf16.mxu0 0
  %6476 = vmatpush2.bf16.msra.mxu0 0
  %6477 = vmatprep.subr.bf16.mxu0 0
  %6478 = vmatpush2.bf16.msra.mxu0 0
  %6479 = vmatprep.subr.bf16.mxu0 0
  %6480 = vmatpush2.bf16.msra.mxu0 0
  %6481 = vmatprep.subr.bf16.mxu0 0
  %6482 = vmatpush2.bf16.msra.mxu0 0
  %6483 = vmatprep.subr.bf16.mxu0 0
  %6484 = vmatpush2.bf16.msra.mxu0 0
  %6485 = vmatprep.subr.bf16.mxu0 0
  %6486 = vmatpush2.bf16.msra.mxu0 0
  %6487 = vmatprep.mubr.bf16.mxu0 0
  %6488 = vmatmul.mubr.bf16.gmra.mxu0 %v6345
  %v6489 = vpop.f32.mrf.mxu0
  %v6490 = vadd.f32 %v6247, %v6489
  %v6491 = vpop.f32.mrf.mxu0
  %v6492 = vadd.f32 %v6247, %v6491
  %v6493 = vpop.f32.mrf.mxu0
  %v6494 = vadd.f32 %v6252, %v6493
  %v6495 = vpop.f32.mrf.mxu0
  %v6496 = vadd.f32 %v6252, %v6495
  %6497 = vmatprep.mubr.bf16.mxu0 0
  %6498 = vmatmul.mubr.bf16.gmra.mxu0 %v6348
  %v6499 = vpop.f32.mrf.mxu0
  %v6500 = vadd.f32 %v6257, %v6499
  %v6501 = vpop.f32.mrf.mxu0
  %v6502 = vadd.f32 %v6257, %v6501
  %v6503 = vpop.f32.mrf.mxu0
  %v6504 = vadd.f32 %v6262, %v6503
  %v6505 = vpop.f32.mrf.mxu0
  %v6506 = vadd.f32 %v6262, %v6505
  %6507 = vmatprep.mubr.bf16.mxu0 0
  %6508 = vmatmul.mubr.bf16.gmra.mxu0 %v6351
  %v6509 = vpop.f32.mrf.mxu0
  %v6510 = vadd.f32 %v6267, %v6509
  %v6511 = vpop.f32.mrf.mxu0
  %v6512 = vadd.f32 %v6267, %v6511
  %v6513 = vpop.f32.mrf.mxu0
  %v6514 = vadd.f32 %v6272, %v6513
  %v6515 = vpop.f32.mrf.mxu0
  %v6516 = vadd.f32 %v6272, %v6515
  %6517 = vmatprep.mubr.bf16.mxu0 0
  %6518 = vmatmul.mubr.bf16.gmra.mxu0 %v6354
  %v6519 = vpop.f32.mrf.mxu0
  %v6520 = vadd.f32 %v6277, %v6519
  %v6521 = vpop.f32.mrf.mxu0
  %v6522 = vadd.f32 %v6277, %v6521
  %v6523 = vpop.f32.mrf.mxu0
  %v6524 = vadd.f32 %v6282, %v6523
  %v6525 = vpop.f32.mrf.mxu0
  %v6526 = vadd.f32 %v6282, %v6525
  %6527 = vmatprep.mubr.bf16.mxu0 0
  %6528 = vmatmul.mubr.bf16.gmra.mxu0 %v6357
  %v6529 = vpop.f32.mrf.mxu0
  %v6530 = vadd.f32 %v6287, %v6529
  %v6531 = vpop.f32.mrf.mxu0
  %v6532 = vadd.f32 %v6287, %v6531
  %v6533 = vpop.f32.mrf.mxu0
  %v6534 = vadd.f32 %v6292, %v6533
  %v6535 = vpop.f32.mrf.mxu0
  %v6536 = vadd.f32 %v6292, %v6535
  %6537 = vmatprep.mubr.bf16.mxu0 0
  %6538 = vmatmul.mubr.bf16.gmra.mxu0 %v6360
  %v6539 = vpop.f32.mrf.mxu0
  %v6540 = vadd.f32 %v6297, %v6539
  %v6541 = vpop.f32.mrf.mxu0
  %v6542 = vadd.f32 %v6297, %v6541
  %v6543 = vpop.f32.mrf.mxu0
  %v6544 = vadd.f32 %v6302, %v6543
  %v6545 = vpop.f32.mrf.mxu0
  %v6546 = vadd.f32 %v6302, %v6545
  %6547 = vdwg.mxu0
  %6548 = vst [vmem:[%s11] sm:$0xff] %v6397
  %6549 = vst [vmem:[%s11 + $0x8] sm:$0xff] %v6399
  %6550 = vst [vmem:[%s11 + $0x10] sm:$0xff] %v6401
  %6551 = vst [vmem:[%s11 + $0x18] sm:$0xff] %v6403
  %6552 = vst [vmem:[%s11 + $0x20] sm:$0xff] %v6407
  %6553 = vst [vmem:[%s11 + $0x28] sm:$0xff] %v6409
  %6554 = vst [vmem:[%s11 + $0x30] sm:$0xff] %v6411
  %6555 = vst [vmem:[%s11 + $0x38] sm:$0xff] %v6413
  %6556 = vst [vmem:[%s11 + $0x40] sm:$0xff] %v6417
  %6557 = vst [vmem:[%s11 + $0x48] sm:$0xff] %v6419
  %6558 = vst [vmem:[%s11 + $0x50] sm:$0xff] %v6421
  %6559 = vst [vmem:[%s11 + $0x58] sm:$0xff] %v6423
  %6560 = vst [vmem:[%s11 + $0x60] sm:$0xff] %v6427
  %6561 = vst [vmem:[%s11 + $0x68] sm:$0xff] %v6429
  %6562 = vst [vmem:[%s11 + $0x70] sm:$0xff] %v6431
  %6563 = vst [vmem:[%s11 + $0x78] sm:$0xff] %v6433
  %6564 = vst [vmem:[%s11 + $0x80] sm:$0xff] %v6437
  %6565 = vst [vmem:[%s11 + $0x88] sm:$0xff] %v6439
  %6566 = vst [vmem:[%s11 + $0x90] sm:$0xff] %v6441
  %6567 = vst [vmem:[%s11 + $0x98] sm:$0xff] %v6443
  %6568 = vst [vmem:[%s11 + $0xa0] sm:$0xff] %v6447
  %6569 = vst [vmem:[%s11 + $0xa8] sm:$0xff] %v6449
  %6570 = vst [vmem:[%s11 + $0xb0] sm:$0xff] %v6451
  %6571 = vst [vmem:[%s11 + $0xb8] sm:$0xff] %v6453
  %s6572 = scalar_lea.vmem %s11, 208
  %6573 = vst [vmem:[%s6572] sm:$0xff] %v6490
  %6574 = vst [vmem:[%s6572 + $0x8] sm:$0xff] %v6492
  %6575 = vst [vmem:[%s6572 + $0x10] sm:$0xff] %v6494
  %6576 = vst [vmem:[%s6572 + $0x18] sm:$0xff] %v6496
  %6577 = vst [vmem:[%s6572 + $0x20] sm:$0xff] %v6500
  %6578 = vst [vmem:[%s6572 + $0x28] sm:$0xff] %v6502
  %6579 = vst [vmem:[%s6572 + $0x30] sm:$0xff] %v6504
  %6580 = vst [vmem:[%s6572 + $0x38] sm:$0xff] %v6506
  %6581 = vst [vmem:[%s6572 + $0x40] sm:$0xff] %v6510
  %6582 = vst [vmem:[%s6572 + $0x48] sm:$0xff] %v6512
  %6583 = vst [vmem:[%s6572 + $0x50] sm:$0xff] %v6514
  %6584 = vst [vmem:[%s6572 + $0x58] sm:$0xff] %v6516
  %6585 = vst [vmem:[%s6572 + $0x60] sm:$0xff] %v6520
  %6586 = vst [vmem:[%s6572 + $0x68] sm:$0xff] %v6522
  %6587 = vst [vmem:[%s6572 + $0x70] sm:$0xff] %v6524
  %6588 = vst [vmem:[%s6572 + $0x78] sm:$0xff] %v6526
  %6589 = vst [vmem:[%s6572 + $0x80] sm:$0xff] %v6530
  %6590 = vst [vmem:[%s6572 + $0x88] sm:$0xff] %v6532
  %6591 = vst [vmem:[%s6572 + $0x90] sm:$0xff] %v6534
  %6592 = vst [vmem:[%s6572 + $0x98] sm:$0xff] %v6536
  %6593 = vst [vmem:[%s6572 + $0xa0] sm:$0xff] %v6540
  %6594 = vst [vmem:[%s6572 + $0xa8] sm:$0xff] %v6542
  %6595 = vst [vmem:[%s6572 + $0xb0] sm:$0xff] %v6544
  %6596 = vst [vmem:[%s6572 + $0xb8] sm:$0xff] %v6546
  %v6597 = vld [vmem:[%s1] sm:$0xff]
  %v6598 = vld [vmem:[%s1 + $0x8] sm:$0xff]
  %v6599 = vld [vmem:[%s1 + $0x10] sm:$0xff]
  %v6600 = vld [vmem:[%s1 + $0x18] sm:$0xff]
  %6601 = vst [vmem:[%s11 + $0xc0] sm:$0xff] %v6597
  %6602 = vst [vmem:[%s11 + $0xc8] sm:$0xff] %v6598
  %6603 = vst [vmem:[%s11 + $0x190] sm:$0xff] %v6599
  %6604 = vst [vmem:[%s11 + $0x198] sm:$0xff] %v6600
  // Predicated region
  $region46: #{ecm_forward.1} parent=0 // pred_check
    _
  $region47: #{ecm_forward.1} parent=0 // pred_check_branch
    %6606 = sbr.rel (0) target = $region49
  $region48: #{ecm_forward.1} parent=0 // pred_region
    _
  $region49: #{ecm_forward.1} parent=0 // pred_fallthru
    _
  // Predicated region
  $region50: #{ecm_forward.1} parent=0 // pred_check
    _
  $region51: #{ecm_forward.1} parent=0 // pred_check_branch
    %6608 = sbr.rel (0) target = $region53
  $region52: #{ecm_forward.1} parent=0 // pred_region
    _
  $region53: #{ecm_forward.1} parent=0 // pred_fallthru
    _

</llo_original>
